<compile_context>
chip_gen: v6e
topology: v6e:2x2x1
jax: 0.10.0
libtpu: 0.0.40
codegen_flags: <defaults>
</compile_context>

<pallas_src>
import jax
import jax.numpy as jnp
from jax.experimental import pallas as pl
from jax.experimental.pallas import tpu as pltpu

C_FEAT = 2048                 # resnet50 fc.in_features (module hardcodes BAMBlock(2048, 16))
REDUCTION = 16
C_MID = C_FEAT // REDUCTION   # 128
TK = 512                      # K (D_in) tile; bf16 => 2 x 2 MiB double-buffered


def fcn_kernel(x_ref, wf_ref, w1t_ref, w2t_ref, sa_ref, o_ref, feats_ref):
    k = pl.program_id(0)

    # ---- streamed backbone stand-in GEMM: accumulate (B, TK) @ (TK, 2048) ----
    # TODO(synk): the pretrained resnet50 backbone is not reproduced; it is replaced
    # by a deterministic linear projection of the flattened image to 2048 features.
    @pl.when(k == 0)
    def _init():
        feats_ref[...] = jnp.zeros_like(feats_ref)

    feats_ref[...] += jnp.dot(x_ref[...], wf_ref[...],
                              preferred_element_type=jnp.float32)

    # ---- BAM head: only on the final K step (output tile is grid-resident) ----
    @pl.when(k == pl.num_programs(0) - 1)
    def _epilogue():
        feats = feats_ref[...]                                   # (B, C_FEAT), f32

        # features.unsqueeze(2).unsqueeze(3) -> (B, C, 1, 1); AdaptiveAvgPool2d((1,1))
        # is the identity on a 1x1 spatial map, so `feats` == pooled_features.

        # ChannelAttention: AdaptiveMaxPool2d(1) == AdaptiveAvgPool2d(1) on a 1x1
        # map, so both SE branches see the same input (max_out == avg_out).
        h = jnp.maximum(
            jnp.dot(feats, w1t_ref[...], preferred_element_type=jnp.float32), 0.0)  # (B, C_MID)
        se = jnp.dot(h, w2t_ref[...], preferred_element_type=jnp.float32)            # (B, C_FEAT)
        ca = jax.nn.sigmoid(se + se)          # sigmoid(max_out + avg_out)
        out = feats * ca                      # x * ca(x)

        # SpatialAttention on a (B, C, 1, 1) map: max/mean over the channel dim,
        # then Conv2d(2, 1, k=7, pad=3) -- only the center tap (.., 3, 3) touches
        # real data (rest hits zero padding) => 2-tap dot + bias.
        mx = jnp.max(out, axis=1, keepdims=True)     # (B, 1)
        av = jnp.mean(out, axis=1, keepdims=True)    # (B, 1)
        s = mx * sa_ref[0] + av * sa_ref[1] + sa_ref[2]
        sa = jax.nn.sigmoid(s)

        # out * sa, then .view(B, -1) is exactly the (B, C) layout we hold.
        o_ref[...] = (out * sa).astype(o_ref.dtype)


def fcn_forward(x, params, *, tk=TK):
    if x.ndim == 3:                 # mirrors `if x.dim() == 3: x = x.unsqueeze(0)`
        x = x[None]
    B = x.shape[0]
    wf_bf16, w1t, w2t, sa_params = params
    d_in = wf_bf16.shape[0]

    # Pad batch to a sublane multiple of 8 and K to a multiple of the tile.
    # (In production, pad wf once at parameter-prep time instead of per call.)
    b_pad = max(8, ((B + 7) // 8) * 8)
    kt = pl.cdiv(d_in, tk)
    d_pad = kt * tk

    x_flat = x.reshape(B, -1).astype(jnp.bfloat16)
    x_p = jnp.zeros((b_pad, d_pad), jnp.bfloat16).at[:B, :d_in].set(x_flat)
    wf_p = jnp.zeros((d_pad, C_FEAT), jnp.bfloat16).at[:d_in, :].set(wf_bf16)

    out_padded = pl.pallas_call(
        fcn_kernel,
        out_shape=jax.ShapeDtypeStruct((b_pad, C_FEAT), jnp.float32),
        grid_spec=pltpu.PrefetchScalarGridSpec(
            num_scalar_prefetch=0,
            grid=(kt,),
            in_specs=[
                pl.BlockSpec((b_pad, tk), lambda k: (0, k)),       # x tile, streamed
                pl.BlockSpec((tk, C_FEAT), lambda k: (k, 0)),      # wf tile, streamed
                pl.BlockSpec((C_FEAT, C_MID), lambda k: (0, 0)),   # SE conv1^T, resident
                pl.BlockSpec((C_MID, C_FEAT), lambda k: (0, 0)),   # SE conv2^T, resident
                pl.BlockSpec(memory_space=pltpu.MemorySpace.SMEM), # spatial-attn scalars
            ],
            out_specs=pl.BlockSpec((b_pad, C_FEAT), lambda k: (0, 0)),
            scratch_shapes=[pltpu.VMEM((b_pad, C_FEAT), jnp.float32)],
        ),
        compiler_params=pltpu.CompilerParams(
            dimension_semantics=("arbitrary",)),
    )(x_p, wf_p, w1t, w2t, sa_params)
    return out_padded[:B]


def init_params(key, d_in):
    k1, k2, k3, k4, k5 = jax.random.split(key, 5)
    # stand-in backbone projection (Din -> 2048), stored bf16 (streamed weight).
    wf = jax.random.normal(k1, (d_in, C_FEAT), jnp.float32) / jnp.sqrt(jnp.float32(d_in))
    wf_bf16 = wf.astype(jnp.bfloat16)
    # ChannelAttention.se: Conv2d(C, C//16, 1, bias=False).weight is (C//16, C, 1, 1);
    # stored transposed so the kernel computes feats @ w1t. Kept f32 (small, resident).
    w1 = jax.random.normal(k2, (C_MID, C_FEAT), jnp.float32) / jnp.sqrt(jnp.float32(C_FEAT))
    w2 = jax.random.normal(k3, (C_FEAT, C_MID), jnp.float32) / jnp.sqrt(jnp.float32(C_MID))
    w1t = jnp.asarray(w1.T)          # (C, C//16)
    w2t = jnp.asarray(w2.T)          # (C//16, C)
    # SpatialAttention.conv: weight (1, 2, 7, 7) + bias (1,); only the center tap matters.
    conv_w = jax.random.normal(k4, (1, 2, 7, 7), jnp.float32) / jnp.sqrt(jnp.float32(2 * 49))
    conv_b = jax.random.normal(k5, (1,), jnp.float32) * 0.1
    sa_params = jnp.array([conv_w[0, 0, 3, 3], conv_w[0, 1, 3, 3], conv_b[0]], jnp.float32)
    return wf_bf16, w1t, w2t, sa_params


def fcn_ref(x, params):
    """Plain-JAX reference (same math, same bf16 weight cast) for correctness."""
    if x.ndim == 3:
        x = x[None]
    B = x.shape[0]
    wf_bf16, w1t, w2t, sa_params = params
    feats = jnp.dot(x.reshape(B, -1).astype(jnp.bfloat16), wf_bf16,
                    preferred_element_type=jnp.float32)
    h = jnp.maximum(jnp.dot(feats, w1t, preferred_element_type=jnp.float32), 0.0)
    se = jnp.dot(h, w2t, preferred_element_type=jnp.float32)
    ca = jax.nn.sigmoid(2.0 * se)
    out = feats * ca
    mx = jnp.max(out, axis=1, keepdims=True)
    av = jnp.mean(out, axis=1, keepdims=True)
    sa = jax.nn.sigmoid(mx * sa_params[0] + av * sa_params[1] + sa_params[2])
    return out * sa


if __name__ == "__main__":
    key = jax.random.PRNGKey(0)
    kx, kp = jax.random.split(key)

    B, CH, H, W = 2, 3, 16, 16                 # small image input (NCHW, like PyTorch)
    x = jax.random.normal(kx, (B, CH, H, W), jnp.float32)
    params = init_params(kp, CH * H * W)

    out = fcn_forward(x, params)
    out = jax.block_until_ready(out)

    ref = fcn_ref(x, params)
    assert out.shape == (B, C_FEAT), out.shape
    assert jnp.allclose(out, ref, rtol=5e-3, atol=5e-3), "mismatch vs reference"

    print("KERNEL_OK")
</pallas_src>

<mosaic_0001>
module attributes {stable_mosaic.version = 11 : i64} {
  func.func @fcn_kernel(%arg0: i32, %arg1: memref<8x512xbf16, #tpu.memory_space<vmem>>, %arg2: memref<512x2048xbf16, #tpu.memory_space<vmem>>, %arg3: memref<2048x128xf32, #tpu.memory_space<vmem>>, %arg4: memref<128x2048xf32, #tpu.memory_space<vmem>>, %arg5: memref<3xf32, #tpu.memory_space<smem>>, %arg6: memref<8x2048xf32, #tpu.memory_space<vmem>>, %arg7: memref<8x2048xf32, #tpu.memory_space<vmem>>) attributes {dimension_semantics = [#tpu.dimension_semantics<arbitrary>], iteration_bounds = array<i64: 2>, scalar_prefetch = 0 : i64, scratch_operands = 1 : i64, tpu.core_type = #tpu.core_type<tc>, window_params = [{transform_indices = @transform_0, window_bounds = array<i64: 8, 512>}, {transform_indices = @transform_1, window_bounds = array<i64: 512, 2048>}, {pipeline_mode = #tpu.pipeline_mode<synchronous>, transform_indices = @transform_2, window_bounds = array<i64: 2048, 128>}, {pipeline_mode = #tpu.pipeline_mode<synchronous>, transform_indices = @transform_3, window_bounds = array<i64: 128, 2048>}, {transform_indices = @transform_4, window_bounds = array<i64: 3>}, {pipeline_mode = #tpu.pipeline_mode<synchronous>, transform_indices = @transform_5, window_bounds = array<i64: 8, 2048>}]} {
    %c0_i32 = arith.constant 0 : i32
    %0 = arith.cmpi eq, %arg0, %c0_i32 : i32
    %1 = arith.extui %0 : i1 to i32
    %c0_i32_0 = arith.constant 0 : i32
    %2 = arith.cmpi ne, %1, %c0_i32_0 : i32
    scf.if %2 {
      %cst_9 = arith.constant 0.000000e+00 : f32
      %12 = vector.broadcast %cst_9 : f32 to vector<8x2048xf32>
      %c0_10 = arith.constant 0 : index
      %c0_11 = arith.constant 0 : index
      %13 = vector.load %arg7[%c0_10, %c0_11] : memref<8x2048xf32, #tpu.memory_space<vmem>>, vector<8x2048xf32>
      tpu.vector_store %arg7[%c0_10, %c0_11], %12 {strides = array<i32>} : memref<8x2048xf32, #tpu.memory_space<vmem>>, vector<8x2048xf32>,
    } else {
    }
    %c0 = arith.constant 0 : index
    %c0_1 = arith.constant 0 : index
    %3 = vector.load %arg7[%c0, %c0_1] : memref<8x2048xf32, #tpu.memory_space<vmem>>, vector<8x2048xf32>
    %c0_2 = arith.constant 0 : index
    %c0_3 = arith.constant 0 : index
    %4 = vector.load %arg1[%c0_2, %c0_3] : memref<8x512xbf16, #tpu.memory_space<vmem>>, vector<8x512xbf16>
    %c0_4 = arith.constant 0 : index
    %c0_5 = arith.constant 0 : index
    %5 = vector.load %arg2[%c0_4, %c0_5] : memref<512x2048xbf16, #tpu.memory_space<vmem>>, vector<512x2048xbf16>
    %cst = arith.constant dense<0.000000e+00> : vector<8x2048xf32>
    %6 = tpu.matmul %4, %5, %cst {dimension_numbers = #tpu.dot_dimension_numbers<[1], [0], [0], [1], [0, 0, 1, 1], [], []>} : vector<8x512xbf16>, vector<512x2048xbf16>, vector<8x2048xf32> -> vector<8x2048xf32>
    %7 = arith.addf %3, %6 : vector<8x2048xf32>
    %c0_6 = arith.constant 0 : index
    %c0_7 = arith.constant 0 : index
    %8 = vector.load %arg7[%c0_6, %c0_7] : memref<8x2048xf32, #tpu.memory_space<vmem>>, vector<8x2048xf32>
    tpu.vector_store %arg7[%c0_6, %c0_7], %7 {strides = array<i32>} : memref<8x2048xf32, #tpu.memory_space<vmem>>, vector<8x2048xf32>,
    %c1_i32 = arith.constant 1 : i32
    %9 = arith.cmpi eq, %arg0, %c1_i32 : i32
    %10 = arith.extui %9 : i1 to i32
    %c0_i32_8 = arith.constant 0 : i32
    %11 = arith.cmpi ne, %10, %c0_i32_8 : i32
    scf.if %11 {
      %c0_9 = arith.constant 0 : index
      %c0_10 = arith.constant 0 : index
      %12 = vector.load %arg7[%c0_9, %c0_10] : memref<8x2048xf32, #tpu.memory_space<vmem>>, vector<8x2048xf32>
      %c0_11 = arith.constant 0 : index
      %c0_12 = arith.constant 0 : index
      %13 = vector.load %arg3[%c0_11, %c0_12] : memref<2048x128xf32, #tpu.memory_space<vmem>>, vector<2048x128xf32>
      %cst_13 = arith.constant dense<0.000000e+00> : vector<8x128xf32>
      %14 = tpu.matmul %12, %13, %cst_13 {dimension_numbers = #tpu.dot_dimension_numbers<[1], [0], [0], [1], [0, 0, 1, 1], [], []>} : vector<8x2048xf32>, vector<2048x128xf32>, vector<8x128xf32> -> vector<8x128xf32>
      %cst_14 = arith.constant 0.000000e+00 : f32
      %15 = vector.broadcast %cst_14 : f32 to vector<8x128xf32>
      %16 = arith.maximumf %14, %15 : vector<8x128xf32>
      %c0_15 = arith.constant 0 : index
      %c0_16 = arith.constant 0 : index
      %17 = vector.load %arg4[%c0_15, %c0_16] : memref<128x2048xf32, #tpu.memory_space<vmem>>, vector<128x2048xf32>
      %cst_17 = arith.constant dense<0.000000e+00> : vector<8x2048xf32>
      %18 = tpu.matmul %16, %17, %cst_17 {dimension_numbers = #tpu.dot_dimension_numbers<[1], [0], [0], [1], [0, 0, 1, 1], [], []>} : vector<8x128xf32>, vector<128x2048xf32>, vector<8x2048xf32> -> vector<8x2048xf32>
      %19 = arith.addf %18, %18 : vector<8x2048xf32>
      %20 = arith.negf %19 : vector<8x2048xf32>
      %21 = math.exp %20 : vector<8x2048xf32>
      %cst_18 = arith.constant 1.000000e+00 : f32
      %22 = vector.broadcast %cst_18 : f32 to vector<8x2048xf32>
      %23 = arith.addf %22, %21 : vector<8x2048xf32>
      %24 = arith.divf %22, %23 : vector<8x2048xf32>
      %25 = arith.mulf %12, %24 : vector<8x2048xf32>
      %cst_19 = arith.constant dense<0xFF800000> : vector<8xf32>
      %26 = vector.multi_reduction <maximumf>, %25, %cst_19 [1] : vector<8x2048xf32> to vector<8xf32>
      %27 = vector.shape_cast %26 : vector<8xf32> to vector<8x1xf32>
      %cst_20 = arith.constant dense<0.000000e+00> : vector<8xf32>
      %28 = vector.multi_reduction <add>, %25, %cst_20 [1] : vector<8x2048xf32> to vector<8xf32>
      %29 = vector.shape_cast %28 : vector<8xf32> to vector<8x1xf32>
      %cst_21 = arith.constant 2.048000e+03 : f32
      %30 = vector.broadcast %cst_21 : f32 to vector<8x1xf32>
      %31 = arith.divf %29, %30 : vector<8x1xf32>
      %c0_22 = arith.constant 0 : index
      %32 = memref.load %arg5[%c0_22] : memref<3xf32, #tpu.memory_space<smem>>
      %33 = vector.broadcast %32 : f32 to vector<8x1xf32>
      %34 = arith.mulf %27, %33 : vector<8x1xf32>
      %c1 = arith.constant 1 : index
      %35 = memref.load %arg5[%c1] : memref<3xf32, #tpu.memory_space<smem>>
      %36 = vector.broadcast %35 : f32 to vector<8x1xf32>
      %37 = arith.mulf %31, %36 : vector<8x1xf32>
      %38 = arith.addf %34, %37 : vector<8x1xf32>
      %c2 = arith.constant 2 : index
      %39 = memref.load %arg5[%c2] : memref<3xf32, #tpu.memory_space<smem>>
      %40 = vector.broadcast %39 : f32 to vector<8x1xf32>
      %41 = arith.addf %38, %40 : vector<8x1xf32>
      %42 = arith.negf %41 : vector<8x1xf32>
      %43 = math.exp %42 : vector<8x1xf32>
      %cst_23 = arith.constant 1.000000e+00 : f32
      %44 = vector.broadcast %cst_23 : f32 to vector<8x1xf32>
      %45 = arith.addf %44, %43 : vector<8x1xf32>
      %46 = arith.divf %44, %45 : vector<8x1xf32>
      %47 = vector.broadcast %46 : vector<8x1xf32> to vector<8x2048xf32>
      %48 = arith.mulf %25, %47 : vector<8x2048xf32>
      %c0_24 = arith.constant 0 : index
      %c0_25 = arith.constant 0 : index
      %49 = vector.load %arg6[%c0_24, %c0_25] : memref<8x2048xf32, #tpu.memory_space<vmem>>, vector<8x2048xf32>
      tpu.vector_store %arg6[%c0_24, %c0_25], %48 {strides = array<i32>} : memref<8x2048xf32, #tpu.memory_space<vmem>>, vector<8x2048xf32>,
    } else {
    }
    return
  }
  func.func @transform_0(%arg0: i32) -> (i32, i32) {
    %c0_i32 = arith.constant 0 : i32
    %c0_i32_0 = arith.constant 0 : i32
    return %c0_i32, %arg0 : i32, i32
  }
  func.func @transform_1(%arg0: i32) -> (i32, i32) {
    %c0_i32 = arith.constant 0 : i32
    %c0_i32_0 = arith.constant 0 : i32
    return %arg0, %c0_i32 : i32, i32
  }
  func.func @transform_2(%arg0: i32) -> (i32, i32) {
    %c0_i32 = arith.constant 0 : i32
    %c0_i32_0 = arith.constant 0 : i32
    %c0_i32_1 = arith.constant 0 : i32
    return %c0_i32, %c0_i32_0 : i32, i32
  }
  func.func @transform_3(%arg0: i32) -> (i32, i32) {
    %c0_i32 = arith.constant 0 : i32
    %c0_i32_0 = arith.constant 0 : i32
    %c0_i32_1 = arith.constant 0 : i32
    return %c0_i32, %c0_i32_0 : i32, i32
  }
  func.func @transform_4(%arg0: i32) -> i32 {
    %c0_i32 = arith.constant 0 : i32
    %c0_i32_0 = arith.constant 0 : i32
    return %c0_i32 : i32
  }
  func.func @transform_5(%arg0: i32) -> (i32, i32) {
    %c0_i32 = arith.constant 0 : i32
    %c0_i32_0 = arith.constant 0 : i32
    %c0_i32_1 = arith.constant 0 : i32
    return %c0_i32, %c0_i32_0 : i32, i32
  }
}

</mosaic_0001>

<llo_original>
// kernel: tpu_custom_call.1
$region0: #{tpu_custom_call.1}
  #allocation0 [shape = 'u32[]', space=smem, size = 0x4, offset = 0x4, fixed_abs, tag = 'smem constant byte address 0x4 - core index']
  #allocation1 [shape = 'u32[144,128]{1,0:T(1,128)}', space=vmem, size = 0x12000, scoped, tag = 'internal scratch']
  #allocation2 [shape = 'f32[8,2048]{1,0:T(8,128)}', space=vmem, size = 0x10000, scoped, tag = 'scratch operand']
  %s0 = inlined_call_operand.hbm [shape: bf16[8,1024], index: 0, kind: input, shape index: {}]
  %s1 = inlined_call_operand.hbm [shape: bf16[1024,2048], index: 1, kind: input, shape index: {}]
  %s2 = inlined_call_operand.hbm [shape: f32[2048,128], index: 2, kind: input, shape index: {}]
  %s3 = inlined_call_operand.hbm [shape: f32[128,2048], index: 3, kind: input, shape index: {}]
  %s4 = inlined_call_operand.hbm [shape: f32[3], index: 4, kind: input, shape index: {}]
  %s5 = inlined_call_operand.hbm [shape: f32[8,2048], index: 5, kind: output, shape index: {}]
  %s6 = sld [smem:[#allocation0]]
  $region81: #{tpu_custom_call.1} parent=0
    _
  %s8 = ssub.s32 1, %s6
  %s9 = scalar_select 0, %s8, %s6
  $region1: #{tpu_custom_call.1} parent=0
    #allocation3 [shape = 'u8[16384]{0}', space=vmem, size = 0x4000, scoped, tag = 'input window, operand 0']
    #allocation4 [shape = 's32[2]{0}', space=sflag, size = 0x8, scoped, tag = 'scoped memory for tpu_custom_call.1']
    #allocation5 [shape = 's32[2]{0}', space=sflag, size = 0x8, scoped, tag = 'scoped memory for tpu_custom_call.1']
    #allocation6 [shape = 's32[2]{0}', space=sflag, size = 0x8, scoped, tag = 'scoped memory for tpu_custom_call.1']
    #allocation7 [shape = 'u8[4194304]{0}', space=vmem, size = 0x400000, scoped, tag = 'input window, operand 1']
    #allocation8 [shape = 's32[2]{0}', space=sflag, size = 0x8, scoped, tag = 'scoped memory for tpu_custom_call.1']
    #allocation9 [shape = 'u8[1048576]{0}', space=vmem, size = 0x100000, scoped, tag = 'input window, operand 2, single buffered']
    #allocation10 [shape = 'u8[1048576]{0}', space=vmem, size = 0x100000, scoped, tag = 'input window, operand 3, single buffered']
    #allocation11 [shape = 's32[1]{0}', space=sflag, size = 0x4, scoped, tag = 'scoped memory for tpu_custom_call.1']
    #allocation12 [shape = 'u8[512]{0}', space=smem, size = 0x200, scoped, tag = 'input window, operand 4, single buffered']
    #allocation13 [shape = 'u8[65536]{0}', space=vmem, size = 0x10000, scoped, tag = 'output window, operand 0, single buffered']
    %10 = vsyncpa [#allocation4], 0
    %s11 = scalar_lea.sflag [#allocation4], 1
    %12 = vsyncpa %s11, 0
    %13 = vsyncpa [#allocation8], 0
    %s14 = scalar_lea.sflag [#allocation8], 1
    %15 = vsyncpa %s14, 0
    %16 = vsyncpa [#allocation11], 0
    %17 = vsyncpa [#allocation6], 0
    %18 = vsyncpa [#allocation5], 0
    loop: start=0, step=1, limit=4
    $region2: #{tpu_custom_call.1} parent=1 // loop_pre_header
      _
    $region3: #{tpu_custom_call.1} parent=1 // loop_header
      %s20 = sphi 0, %s24
      %p21 = scmp.ge.s32.totalorder %s20, 4
      %s30 = sphi 0, %s32
      %s33 = sphi 0, %s30
      %s34 = sphi 0, %s33
      %s50 = sphi 0, %s34
      %s56 = sphi 0, %s58
      %s59 = sphi 0, %s56
      %s60 = sphi 0, %s59
      %s76 = sphi 0, %s60
      %s80 = sphi 0, %s80
      %s82 = sphi 0, %s80
      %s83 = sphi 0, %s82
      %s97 = sphi 0, %s83
      %s101 = sphi 0, %s101
      %s103 = sphi 0, %s101
      %s104 = sphi 0, %s103
      %s118 = sphi 0, %s104
      %s122 = sphi 0, %s122
      %s124 = sphi 0, %s122
      %s125 = sphi 0, %s124
      %s139 = sphi 0, %s125
      %s143 = sphi 0, %s143
      %s145 = sphi 0, %s143
      %s146 = sphi 0, %s145
      %s160 = sphi 0, %s146
    $region4: #{tpu_custom_call.1} parent=1 // loop_header_branch
      %23 = sbr.rel (%p21) target = $region8
    $region5: #{tpu_custom_call.1} parent=1 // loop_body
      %s25 = ssub.s32 %s20, 1
      %s26 = ssub.s32 %s20, 2
      %s27 = sadd.s32 %s20, 1
      %s28 = ssub.s32 %s20, %s27
      %p29 = scmp.eq.s32.totalorder %s28, 0
      %s31 = sadd.s32 %s30, 1
      %s32 = scalar_select %p29, %s30, %s31
      %p35 = pneg %p29
      %p36 = scmp.eq.s32.totalorder %s20, 1
      %p37 = por %p35, %p36
      %p38 = scmp.ne.s32.totalorder %s30, %s33
      %p39 = scmp.eq.s32.totalorder %s20, 0
      %p40 = por %p38, %p39
      %p41 = scmp.ne.s32.totalorder %s30, %s33
      %p42 = scmp.eq.s32.totalorder %s25, 1
      %p43 = por %p41, %p42
      %p44 = scmp.ne.s32.totalorder %s33, %s34
      %p45 = scmp.eq.s32.totalorder %s25, 0
      %p46 = por %p44, %p45
      %p47 = scmp.ne.s32.totalorder %s33, %s34
      %p48 = scmp.eq.s32.totalorder %s26, 1
      %p49 = por %p47, %p48
      %p51 = scmp.ne.s32.totalorder %s34, %s50
      %p52 = scmp.eq.s32.totalorder %s26, 0
      %p53 = por %p51, %p52
      %s54 = ssub.s32 %s20, %s27
      %p55 = scmp.eq.s32.totalorder %s54, 0
      %s57 = sadd.s32 %s56, 1
      %s58 = scalar_select %p55, %s56, %s57
      %p61 = pneg %p55
      %p62 = scmp.eq.s32.totalorder %s20, 1
      %p63 = por %p61, %p62
      %p64 = scmp.ne.s32.totalorder %s56, %s59
      %p65 = scmp.eq.s32.totalorder %s20, 0
      %p66 = por %p64, %p65
      %p67 = scmp.ne.s32.totalorder %s56, %s59
      %p68 = scmp.eq.s32.totalorder %s25, 1
      %p69 = por %p67, %p68
      %p70 = scmp.ne.s32.totalorder %s59, %s60
      %p71 = scmp.eq.s32.totalorder %s25, 0
      %p72 = por %p70, %p71
      %p73 = scmp.ne.s32.totalorder %s59, %s60
      %p74 = scmp.eq.s32.totalorder %s26, 1
      %p75 = por %p73, %p74
      %p77 = scmp.ne.s32.totalorder %s60, %s76
      %p78 = scmp.eq.s32.totalorder %s26, 0
      %p79 = por %p77, %p78
      %s81 = sadd.s32 %s80, 1
      %p84 = scmp.eq.s32.totalorder %s20, 1
      %p85 = scmp.ne.s32.totalorder %s80, %s82
      %p86 = scmp.eq.s32.totalorder %s20, 0
      %p87 = por %p85, %p86
      %p88 = scmp.ne.s32.totalorder %s80, %s82
      %p89 = scmp.eq.s32.totalorder %s25, 1
      %p90 = por %p88, %p89
      %p91 = scmp.ne.s32.totalorder %s82, %s83
      %p92 = scmp.eq.s32.totalorder %s25, 0
      %p93 = por %p91, %p92
      %p94 = scmp.ne.s32.totalorder %s82, %s83
      %p95 = scmp.eq.s32.totalorder %s26, 1
      %p96 = por %p94, %p95
      %p98 = scmp.ne.s32.totalorder %s83, %s97
      %p99 = scmp.eq.s32.totalorder %s26, 0
      %p100 = por %p98, %p99
      %s102 = sadd.s32 %s101, 1
      %p105 = scmp.eq.s32.totalorder %s20, 1
      %p106 = scmp.ne.s32.totalorder %s101, %s103
      %p107 = scmp.eq.s32.totalorder %s20, 0
      %p108 = por %p106, %p107
      %p109 = scmp.ne.s32.totalorder %s101, %s103
      %p110 = scmp.eq.s32.totalorder %s25, 1
      %p111 = por %p109, %p110
      %p112 = scmp.ne.s32.totalorder %s103, %s104
      %p113 = scmp.eq.s32.totalorder %s25, 0
      %p114 = por %p112, %p113
      %p115 = scmp.ne.s32.totalorder %s103, %s104
      %p116 = scmp.eq.s32.totalorder %s26, 1
      %p117 = por %p115, %p116
      %p119 = scmp.ne.s32.totalorder %s104, %s118
      %p120 = scmp.eq.s32.totalorder %s26, 0
      %p121 = por %p119, %p120
      %s123 = sadd.s32 %s122, 1
      %p126 = scmp.eq.s32.totalorder %s20, 1
      %p127 = scmp.ne.s32.totalorder %s122, %s124
      %p128 = scmp.eq.s32.totalorder %s20, 0
      %p129 = por %p127, %p128
      %p130 = scmp.ne.s32.totalorder %s122, %s124
      %p131 = scmp.eq.s32.totalorder %s25, 1
      %p132 = por %p130, %p131
      %p133 = scmp.ne.s32.totalorder %s124, %s125
      %p134 = scmp.eq.s32.totalorder %s25, 0
      %p135 = por %p133, %p134
      %p136 = scmp.ne.s32.totalorder %s124, %s125
      %p137 = scmp.eq.s32.totalorder %s26, 1
      %p138 = por %p136, %p137
      %p140 = scmp.ne.s32.totalorder %s125, %s139
      %p141 = scmp.eq.s32.totalorder %s26, 0
      %p142 = por %p140, %p141
      %s144 = sadd.s32 %s143, 1
      %p147 = scmp.eq.s32.totalorder %s20, 1
      %p148 = scmp.ne.s32.totalorder %s143, %s145
      %p149 = scmp.eq.s32.totalorder %s20, 0
      %p150 = por %p148, %p149
      %p151 = scmp.ne.s32.totalorder %s143, %s145
      %p152 = scmp.eq.s32.totalorder %s25, 1
      %p153 = por %p151, %p152
      %p154 = scmp.ne.s32.totalorder %s145, %s146
      %p155 = scmp.eq.s32.totalorder %s25, 0
      %p156 = por %p154, %p155
      %p157 = scmp.ne.s32.totalorder %s145, %s146
      %p158 = scmp.eq.s32.totalorder %s26, 1
      %p159 = por %p157, %p158
      %p161 = scmp.ne.s32.totalorder %s146, %s160
      %p162 = scmp.eq.s32.totalorder %s26, 0
      %p163 = por %p161, %p162
      %p164 = scmp.le.s32.totalorder 1, %s20
      %p165 = scmp.lt.s32.totalorder %s20, 3
      %p166 = pnand %p164, %p165
      %p167 = pneg %p166
      // Predicated region
      $region9: #{tpu_custom_call.1} parent=5 // pred_check
        _
      $region10: #{tpu_custom_call.1} parent=5 // pred_check_branch
        %169 = sbr.rel (%p166) target = $region12
      $region11: #{tpu_custom_call.1} parent=5 // pred_region
        %s170 = ssub.s32 %s20, 1
        // Predicated region
        $region13: #{tpu_custom_call.1} parent=11 // pred_check
          %p171 = pneg %p93
        $region14: #{tpu_custom_call.1} parent=11 // pred_check_branch
          %173 = sbr.rel (%p171) target = $region16
        $region15: #{tpu_custom_call.1} parent=11 // pred_region
          %s175 = ssub.s32 32768, 32768
          %176 = vsyncadd [#allocation8], %s175
          %s177 = sshll.u32 [#allocation9], 4
          %s178 = int_to_ptr.vmem [resolvable:$true] %s177
          %183 = dma.hbm_to_vmem [thread:$0]  %s2, 32768, %s178, [#allocation8], 128, 128, 8
        $region16: #{tpu_custom_call.1} parent=11 // pred_fallthru
          _
        // Predicated region
        $region17: #{tpu_custom_call.1} parent=11 // pred_check
          %p184 = pneg %p114
        $region18: #{tpu_custom_call.1} parent=11 // pred_check_branch
          %186 = sbr.rel (%p184) target = $region20
        $region19: #{tpu_custom_call.1} parent=11 // pred_region
          %s188 = ssub.s32 32768, 32768
          %189 = vsyncadd [#allocation11], %s188
          %s190 = sshll.u32 [#allocation10], 4
          %s191 = int_to_ptr.vmem [resolvable:$true] %s190
          %196 = dma.hbm_to_vmem [thread:$0]  %s3, 32768, %s191, [#allocation11], 2048, 2048, 128
        $region20: #{tpu_custom_call.1} parent=11 // pred_fallthru
          _
        // Predicated region
        $region21: #{tpu_custom_call.1} parent=11 // pred_check
          %p197 = pneg %p135
        $region22: #{tpu_custom_call.1} parent=11 // pred_check_branch
          %199 = sbr.rel (%p197) target = $region24
        $region23: #{tpu_custom_call.1} parent=11 // pred_region
          %s201 = ssub.s32 16, 16
          %202 = vsyncadd [#allocation6], %s201
          %205 = dma.hbm_to_smem %s4, 16, [#allocation12], [#allocation6]
        $region24: #{tpu_custom_call.1} parent=11 // pred_fallthru
          _
      $region12: #{tpu_custom_call.1} parent=5 // pred_fallthru
        _
      %p206 = scmp.lt.s32.totalorder %s20, 2
      // Predicated region
      $region25: #{tpu_custom_call.1} parent=5 // pred_check
        %p207 = pneg %p206
      $region26: #{tpu_custom_call.1} parent=5 // pred_check_branch
        %209 = sbr.rel (%p207) target = $region28
      $region27: #{tpu_custom_call.1} parent=5 // pred_region
        // Predicated region
        $region29: #{tpu_custom_call.1} parent=27 // pred_check
          %p210 = pneg %p40
        $region30: #{tpu_custom_call.1} parent=27 // pred_check_branch
          %212 = sbr.rel (%p210) target = $region32
        $region31: #{tpu_custom_call.1} parent=27 // pred_region
          %s213 = sand.u32 %s30, 1
          %s214 = scalar_lea.sflag [#allocation4], %s213
          %s215 = sand.u32 %s30, 1
          %s216 = smul.addr %s215, 16
          %s217 = scalar_lea.vmem [#allocation3], %s216
          %s218 = smul.u32 4, %s20
          %s220 = ssub.s32 256, 256
          %221 = vsyncadd %s214, %s220
          %s222 = smul.addr %s218, 64
          %s223 = scalar_lea.hbm %s0, %s222
          %s225 = sshll.u32 %s217, 4
          %s226 = int_to_ptr.vmem [resolvable:$true] %s225
          %228 = dma.hbm_to_vmem [thread:$0]  %s223, 256, %s226, %s214
        $region32: #{tpu_custom_call.1} parent=27 // pred_fallthru
          _
        // Predicated region
        $region33: #{tpu_custom_call.1} parent=27 // pred_check
          %p229 = pneg %p66
        $region34: #{tpu_custom_call.1} parent=27 // pred_check_branch
          %231 = sbr.rel (%p229) target = $region36
        $region35: #{tpu_custom_call.1} parent=27 // pred_region
          %s232 = sand.u32 %s20, 1
          %s233 = scalar_lea.sflag [#allocation8], %s232
          %s234 = sand.u32 %s56, 1
          %s235 = smul.addr %s234, 4096
          %s236 = scalar_lea.vmem [#allocation7], %s235
          %s237 = smul.u32 64, %s20
          %s239 = ssub.s32 65536, 65536
          %240 = vsyncadd %s233, %s239
          %s241 = smul.addr %s237, 16
          %s242 = smul.addr %s241, 64
          %s243 = scalar_lea.hbm %s1, %s242
          %s244 = sshll.u32 %s236, 4
          %s245 = int_to_ptr.vmem [resolvable:$true] %s244
          %250 = dma.hbm_to_vmem [thread:$0]  %s243, 65536, %s245, %s233, 1024, 1024, 64
        $region36: #{tpu_custom_call.1} parent=27 // pred_fallthru
          _
      $region28: #{tpu_custom_call.1} parent=5 // pred_fallthru
        _
      %p251 = scmp.le.s32.totalorder 1, %s20
      %p252 = scmp.lt.s32.totalorder %s20, 3
      %p253 = pnand %p251, %p252
      %p254 = pneg %p253
      // Predicated region
      $region37: #{tpu_custom_call.1} parent=5 // pred_check
        _
      $region38: #{tpu_custom_call.1} parent=5 // pred_check_branch
        %256 = sbr.rel (%p253) target = $region40
      $region39: #{tpu_custom_call.1} parent=5 // pred_region
        %s257 = ssub.s32 %s20, 1
        %s258 = sand.u32 %s33, 1
        %s259 = scalar_lea.sflag [#allocation4], %s258
        %s260 = sand.u32 %s33, 1
        %s261 = smul.addr %s260, 16
        %s262 = scalar_lea.vmem [#allocation3], %s261
        // Predicated region
        $region41: #{tpu_custom_call.1} parent=39 // pred_check
          %p263 = pneg %p46
        $region42: #{tpu_custom_call.1} parent=39 // pred_check_branch
          %265 = sbr.rel (%p263) target = $region44
        $region43: #{tpu_custom_call.1} parent=39 // pred_region
          %266 = dma.done %s259, 256
        $region44: #{tpu_custom_call.1} parent=39 // pred_fallthru
          _
        %s267 = sand.u32 %s25, 1
        %s268 = scalar_lea.sflag [#allocation8], %s267
        %s269 = sand.u32 %s59, 1
        %s270 = smul.addr %s269, 4096
        %s271 = scalar_lea.vmem [#allocation7], %s270
        // Predicated region
        $region45: #{tpu_custom_call.1} parent=39 // pred_check
          %p272 = pneg %p72
        $region46: #{tpu_custom_call.1} parent=39 // pred_check_branch
          %274 = sbr.rel (%p272) target = $region48
        $region47: #{tpu_custom_call.1} parent=39 // pred_region
          %275 = dma.done %s268, 65536
        $region48: #{tpu_custom_call.1} parent=39 // pred_fallthru
          _
        // Predicated region
        $region49: #{tpu_custom_call.1} parent=39 // pred_check
          %p276 = pneg %p93
        $region50: #{tpu_custom_call.1} parent=39 // pred_check_branch
          %278 = sbr.rel (%p276) target = $region52
        $region51: #{tpu_custom_call.1} parent=39 // pred_region
          %279 = dma.done [#allocation8], 32768
        $region52: #{tpu_custom_call.1} parent=39 // pred_fallthru
          _
        // Predicated region
        $region53: #{tpu_custom_call.1} parent=39 // pred_check
          %p280 = pneg %p114
        $region54: #{tpu_custom_call.1} parent=39 // pred_check_branch
          %282 = sbr.rel (%p280) target = $region56
        $region55: #{tpu_custom_call.1} parent=39 // pred_region
          %283 = dma.done [#allocation11], 32768
        $region56: #{tpu_custom_call.1} parent=39 // pred_fallthru
          _
        // Predicated region
        $region57: #{tpu_custom_call.1} parent=39 // pred_check
          %p284 = pneg %p135
        $region58: #{tpu_custom_call.1} parent=39 // pred_check_branch
          %286 = sbr.rel (%p284) target = $region60
        $region59: #{tpu_custom_call.1} parent=39 // pred_region
          %287 = dma.done [#allocation6], 16
        $region60: #{tpu_custom_call.1} parent=39 // pred_fallthru
          _
        %288 = sfence
        %s289 = sand.u32 %s33, 1
        %s290 = scalar_lea.sflag [#allocation4], %s289
        %s291 = sand.u32 %s33, 1
        %s292 = smul.addr %s291, 16
        %s293 = scalar_lea.vmem [#allocation3], %s292
        %p294 = pneg %p46
        %p295 = pneg %p43
        %s296 = sand.u32 %s25, 1
        %s297 = scalar_lea.sflag [#allocation8], %s296
        %s298 = sand.u32 %s59, 1
        %s299 = smul.addr %s298, 4096
        %s300 = scalar_lea.vmem [#allocation7], %s299
        %p301 = pneg %p72
        %p302 = pneg %p69
        %p303 = pneg %p93
        %p304 = pneg %p90
        %p305 = pneg %p114
        %p306 = pneg %p111
        %p307 = pneg %p135
        %p308 = pneg %p132
        %p309 = pneg %p156
        %p310 = pneg %p153
        %s311 = smul.u32 4, %s25
        %s312 = smul.u32 64, %s25
        %p313 = scmp.eq.s32.totalorder %s25, 0
        // Predicated region
        $region61: #{tpu_custom_call.1} parent=39 // pred_check
          %p314 = pneg %p313
        $region62: #{tpu_custom_call.1} parent=39 // pred_check_branch
          %316 = sbr.rel (%p314) target = $region64
        $region63: #{tpu_custom_call.1} parent=39 // pred_region
          %317 = vst [vmem:[#allocation2] sm:$0xff] 0.0
          %318 = vst [vmem:[#allocation2 + $0x8] sm:$0xff] 0.0
          %319 = vst [vmem:[#allocation2 + $0x10] sm:$0xff] 0.0
          %320 = vst [vmem:[#allocation2 + $0x18] sm:$0xff] 0.0
          %321 = vst [vmem:[#allocation2 + $0x20] sm:$0xff] 0.0
          %322 = vst [vmem:[#allocation2 + $0x28] sm:$0xff] 0.0
          %323 = vst [vmem:[#allocation2 + $0x30] sm:$0xff] 0.0
          %324 = vst [vmem:[#allocation2 + $0x38] sm:$0xff] 0.0
          %325 = vst [vmem:[#allocation2 + $0x40] sm:$0xff] 0.0
          %326 = vst [vmem:[#allocation2 + $0x48] sm:$0xff] 0.0
          %327 = vst [vmem:[#allocation2 + $0x50] sm:$0xff] 0.0
          %328 = vst [vmem:[#allocation2 + $0x58] sm:$0xff] 0.0
          %329 = vst [vmem:[#allocation2 + $0x60] sm:$0xff] 0.0
          %330 = vst [vmem:[#allocation2 + $0x68] sm:$0xff] 0.0
          %331 = vst [vmem:[#allocation2 + $0x70] sm:$0xff] 0.0
          %332 = vst [vmem:[#allocation2 + $0x78] sm:$0xff] 0.0
        $region64: #{tpu_custom_call.1} parent=39 // pred_fallthru
          _
        %v333 = vld [vmem:[#allocation2] sm:$0xff]
        %v334 = vld [vmem:[#allocation2 + $0x8] sm:$0xff]
        %v335 = vld [vmem:[#allocation2 + $0x10] sm:$0xff]
        %v336 = vld [vmem:[#allocation2 + $0x18] sm:$0xff]
        %v337 = vld [vmem:[#allocation2 + $0x20] sm:$0xff]
        %v338 = vld [vmem:[#allocation2 + $0x28] sm:$0xff]
        %v339 = vld [vmem:[#allocation2 + $0x30] sm:$0xff]
        %v340 = vld [vmem:[#allocation2 + $0x38] sm:$0xff]
        %v341 = vld [vmem:[#allocation2 + $0x40] sm:$0xff]
        %v342 = vld [vmem:[#allocation2 + $0x48] sm:$0xff]
        %v343 = vld [vmem:[#allocation2 + $0x50] sm:$0xff]
        %v344 = vld [vmem:[#allocation2 + $0x58] sm:$0xff]
        %v345 = vld [vmem:[#allocation2 + $0x60] sm:$0xff]
        %v346 = vld [vmem:[#allocation2 + $0x68] sm:$0xff]
        %v347 = vld [vmem:[#allocation2 + $0x70] sm:$0xff]
        %v348 = vld [vmem:[#allocation2 + $0x78] sm:$0xff]
        %v349 = vld [vmem:[%s262] sm:$0xff]
        %v350 = vld [vmem:[%s262 + $0x8] sm:$0xff]
        %v351 = vld [vmem:[%s271] sm:$0xff]
        %v352 = vld [vmem:[%s271 + $0x8] sm:$0xff]
        %v353 = vld [vmem:[%s271 + $0x10] sm:$0xff]
        %v354 = vld [vmem:[%s271 + $0x18] sm:$0xff]
        %v355 = vld [vmem:[%s271 + $0x20] sm:$0xff]
        %v356 = vld [vmem:[%s271 + $0x28] sm:$0xff]
        %v357 = vld [vmem:[%s271 + $0x30] sm:$0xff]
        %v358 = vld [vmem:[%s271 + $0x38] sm:$0xff]
        %v359 = vld [vmem:[%s271 + $0x40] sm:$0xff]
        %v360 = vld [vmem:[%s271 + $0x48] sm:$0xff]
        %v361 = vld [vmem:[%s271 + $0x50] sm:$0xff]
        %v362 = vld [vmem:[%s271 + $0x58] sm:$0xff]
        %v363 = vld [vmem:[%s271 + $0x60] sm:$0xff]
        %v364 = vld [vmem:[%s271 + $0x68] sm:$0xff]
        %v365 = vld [vmem:[%s271 + $0x70] sm:$0xff]
        %v366 = vld [vmem:[%s271 + $0x78] sm:$0xff]
        %v367 = vld [vmem:[%s271 + $0x80] sm:$0xff]
        %v368 = vld [vmem:[%s271 + $0x88] sm:$0xff]
        %v369 = vld [vmem:[%s271 + $0x90] sm:$0xff]
        %v370 = vld [vmem:[%s271 + $0x98] sm:$0xff]
        %v371 = vld [vmem:[%s271 + $0xa0] sm:$0xff]
        %v372 = vld [vmem:[%s271 + $0xa8] sm:$0xff]
        %v373 = vld [vmem:[%s271 + $0xb0] sm:$0xff]
        %v374 = vld [vmem:[%s271 + $0xb8] sm:$0xff]
        %v375 = vld [vmem:[%s271 + $0xc0] sm:$0xff]
        %v376 = vld [vmem:[%s271 + $0xc8] sm:$0xff]
        %v377 = vld [vmem:[%s271 + $0xd0] sm:$0xff]
        %v378 = vld [vmem:[%s271 + $0xd8] sm:$0xff]
        %v379 = vld [vmem:[%s271 + $0xe0] sm:$0xff]
        %v380 = vld [vmem:[%s271 + $0xe8] sm:$0xff]
        %v381 = vld [vmem:[%s271 + $0xf0] sm:$0xff]
        %v382 = vld [vmem:[%s271 + $0xf8] sm:$0xff]
        %v383 = vld [vmem:[%s271 + $0x100] sm:$0xff]
        %v384 = vld [vmem:[%s271 + $0x108] sm:$0xff]
        %v385 = vld [vmem:[%s271 + $0x110] sm:$0xff]
        %v386 = vld [vmem:[%s271 + $0x118] sm:$0xff]
        %v387 = vld [vmem:[%s271 + $0x120] sm:$0xff]
        %v388 = vld [vmem:[%s271 + $0x128] sm:$0xff]
        %v389 = vld [vmem:[%s271 + $0x130] sm:$0xff]
        %v390 = vld [vmem:[%s271 + $0x138] sm:$0xff]
        %v391 = vld [vmem:[%s271 + $0x140] sm:$0xff]
        %v392 = vld [vmem:[%s271 + $0x148] sm:$0xff]
        %v393 = vld [vmem:[%s271 + $0x150] sm:$0xff]
        %v394 = vld [vmem:[%s271 + $0x158] sm:$0xff]
        %v395 = vld [vmem:[%s271 + $0x160] sm:$0xff]
        %v396 = vld [vmem:[%s271 + $0x168] sm:$0xff]
        %v397 = vld [vmem:[%s271 + $0x170] sm:$0xff]
        %v398 = vld [vmem:[%s271 + $0x178] sm:$0xff]
        %v399 = vld [vmem:[%s271 + $0x180] sm:$0xff]
        %v400 = vld [vmem:[%s271 + $0x188] sm:$0xff]
        %v401 = vld [vmem:[%s271 + $0x190] sm:$0xff]
        %v402 = vld [vmem:[%s271 + $0x198] sm:$0xff]
        %v403 = vld [vmem:[%s271 + $0x1a0] sm:$0xff]
        %v404 = vld [vmem:[%s271 + $0x1a8] sm:$0xff]
        %v405 = vld [vmem:[%s271 + $0x1b0] sm:$0xff]
        %v406 = vld [vmem:[%s271 + $0x1b8] sm:$0xff]
        %v407 = vld [vmem:[%s271 + $0x1c0] sm:$0xff]
        %v408 = vld [vmem:[%s271 + $0x1c8] sm:$0xff]
        %v409 = vld [vmem:[%s271 + $0x1d0] sm:$0xff]
        %v410 = vld [vmem:[%s271 + $0x1d8] sm:$0xff]
        %v411 = vld [vmem:[%s271 + $0x1e0] sm:$0xff]
        %v412 = vld [vmem:[%s271 + $0x1e8] sm:$0xff]
        %v413 = vld [vmem:[%s271 + $0x1f0] sm:$0xff]
        %v414 = vld [vmem:[%s271 + $0x1f8] sm:$0xff]
        %v415 = vld [vmem:[%s271 + $0x200] sm:$0xff]
        %v416 = vld [vmem:[%s271 + $0x208] sm:$0xff]
        %v417 = vld [vmem:[%s271 + $0x210] sm:$0xff]
        %v418 = vld [vmem:[%s271 + $0x218] sm:$0xff]
        %v419 = vld [vmem:[%s271 + $0x220] sm:$0xff]
        %v420 = vld [vmem:[%s271 + $0x228] sm:$0xff]
        %v421 = vld [vmem:[%s271 + $0x230] sm:$0xff]
        %v422 = vld [vmem:[%s271 + $0x238] sm:$0xff]
        %v423 = vld [vmem:[%s271 + $0x240] sm:$0xff]
        %v424 = vld [vmem:[%s271 + $0x248] sm:$0xff]
        %v425 = vld [vmem:[%s271 + $0x250] sm:$0xff]
        %v426 = vld [vmem:[%s271 + $0x258] sm:$0xff]
        %v427 = vld [vmem:[%s271 + $0x260] sm:$0xff]
        %v428 = vld [vmem:[%s271 + $0x268] sm:$0xff]
        %v429 = vld [vmem:[%s271 + $0x270] sm:$0xff]
        %v430 = vld [vmem:[%s271 + $0x278] sm:$0xff]
        %v431 = vld [vmem:[%s271 + $0x280] sm:$0xff]
        %v432 = vld [vmem:[%s271 + $0x288] sm:$0xff]
        %v433 = vld [vmem:[%s271 + $0x290] sm:$0xff]
        %v434 = vld [vmem:[%s271 + $0x298] sm:$0xff]
        %v435 = vld [vmem:[%s271 + $0x2a0] sm:$0xff]
        %v436 = vld [vmem:[%s271 + $0x2a8] sm:$0xff]
        %v437 = vld [vmem:[%s271 + $0x2b0] sm:$0xff]
        %v438 = vld [vmem:[%s271 + $0x2b8] sm:$0xff]
        %v439 = vld [vmem:[%s271 + $0x2c0] sm:$0xff]
        %v440 = vld [vmem:[%s271 + $0x2c8] sm:$0xff]
        %v441 = vld [vmem:[%s271 + $0x2d0] sm:$0xff]
        %v442 = vld [vmem:[%s271 + $0x2d8] sm:$0xff]
        %v443 = vld [vmem:[%s271 + $0x2e0] sm:$0xff]
        %v444 = vld [vmem:[%s271 + $0x2e8] sm:$0xff]
        %v445 = vld [vmem:[%s271 + $0x2f0] sm:$0xff]
        %v446 = vld [vmem:[%s271 + $0x2f8] sm:$0xff]
        %v447 = vld [vmem:[%s271 + $0x300] sm:$0xff]
        %v448 = vld [vmem:[%s271 + $0x308] sm:$0xff]
        %v449 = vld [vmem:[%s271 + $0x310] sm:$0xff]
        %v450 = vld [vmem:[%s271 + $0x318] sm:$0xff]
        %v451 = vld [vmem:[%s271 + $0x320] sm:$0xff]
        %v452 = vld [vmem:[%s271 + $0x328] sm:$0xff]
        %v453 = vld [vmem:[%s271 + $0x330] sm:$0xff]
        %v454 = vld [vmem:[%s271 + $0x338] sm:$0xff]
        %v455 = vld [vmem:[%s271 + $0x340] sm:$0xff]
        %v456 = vld [vmem:[%s271 + $0x348] sm:$0xff]
        %v457 = vld [vmem:[%s271 + $0x350] sm:$0xff]
        %v458 = vld [vmem:[%s271 + $0x358] sm:$0xff]
        %v459 = vld [vmem:[%s271 + $0x360] sm:$0xff]
        %v460 = vld [vmem:[%s271 + $0x368] sm:$0xff]
        %v461 = vld [vmem:[%s271 + $0x370] sm:$0xff]
        %v462 = vld [vmem:[%s271 + $0x378] sm:$0xff]
        %v463 = vld [vmem:[%s271 + $0x380] sm:$0xff]
        %v464 = vld [vmem:[%s271 + $0x388] sm:$0xff]
        %v465 = vld [vmem:[%s271 + $0x390] sm:$0xff]
        %v466 = vld [vmem:[%s271 + $0x398] sm:$0xff]
        %v467 = vld [vmem:[%s271 + $0x3a0] sm:$0xff]
        %v468 = vld [vmem:[%s271 + $0x3a8] sm:$0xff]
        %v469 = vld [vmem:[%s271 + $0x3b0] sm:$0xff]
        %v470 = vld [vmem:[%s271 + $0x3b8] sm:$0xff]
        %v471 = vld [vmem:[%s271 + $0x3c0] sm:$0xff]
        %v472 = vld [vmem:[%s271 + $0x3c8] sm:$0xff]
        %v473 = vld [vmem:[%s271 + $0x3d0] sm:$0xff]
        %v474 = vld [vmem:[%s271 + $0x3d8] sm:$0xff]
        %v475 = vld [vmem:[%s271 + $0x3e0] sm:$0xff]
        %v476 = vld [vmem:[%s271 + $0x3e8] sm:$0xff]
        %v477 = vld [vmem:[%s271 + $0x3f0] sm:$0xff]
        %v478 = vld [vmem:[%s271 + $0x3f8] sm:$0xff]
        %v479 = vld [vmem:[%s271 + $0x400] sm:$0xff]
        %v480 = vld [vmem:[%s271 + $0x408] sm:$0xff]
        %v481 = vld [vmem:[%s271 + $0x410] sm:$0xff]
        %v482 = vld [vmem:[%s271 + $0x418] sm:$0xff]
        %v483 = vld [vmem:[%s271 + $0x420] sm:$0xff]
        %v484 = vld [vmem:[%s271 + $0x428] sm:$0xff]
        %v485 = vld [vmem:[%s271 + $0x430] sm:$0xff]
        %v486 = vld [vmem:[%s271 + $0x438] sm:$0xff]
        %v487 = vld [vmem:[%s271 + $0x440] sm:$0xff]
        %v488 = vld [vmem:[%s271 + $0x448] sm:$0xff]
        %v489 = vld [vmem:[%s271 + $0x450] sm:$0xff]
        %v490 = vld [vmem:[%s271 + $0x458] sm:$0xff]
        %v491 = vld [vmem:[%s271 + $0x460] sm:$0xff]
        %v492 = vld [vmem:[%s271 + $0x468] sm:$0xff]
        %v493 = vld [vmem:[%s271 + $0x470] sm:$0xff]
        %v494 = vld [vmem:[%s271 + $0x478] sm:$0xff]
        %v495 = vld [vmem:[%s271 + $0x480] sm:$0xff]
        %v496 = vld [vmem:[%s271 + $0x488] sm:$0xff]
        %v497 = vld [vmem:[%s271 + $0x490] sm:$0xff]
        %v498 = vld [vmem:[%s271 + $0x498] sm:$0xff]
        %v499 = vld [vmem:[%s271 + $0x4a0] sm:$0xff]
        %v500 = vld [vmem:[%s271 + $0x4a8] sm:$0xff]
        %v501 = vld [vmem:[%s271 + $0x4b0] sm:$0xff]
        %v502 = vld [vmem:[%s271 + $0x4b8] sm:$0xff]
        %v503 = vld [vmem:[%s271 + $0x4c0] sm:$0xff]
        %v504 = vld [vmem:[%s271 + $0x4c8] sm:$0xff]
        %v505 = vld [vmem:[%s271 + $0x4d0] sm:$0xff]
        %v506 = vld [vmem:[%s271 + $0x4d8] sm:$0xff]
        %v507 = vld [vmem:[%s271 + $0x4e0] sm:$0xff]
        %v508 = vld [vmem:[%s271 + $0x4e8] sm:$0xff]
        %v509 = vld [vmem:[%s271 + $0x4f0] sm:$0xff]
        %v510 = vld [vmem:[%s271 + $0x4f8] sm:$0xff]
        %v511 = vld [vmem:[%s271 + $0x500] sm:$0xff]
        %v512 = vld [vmem:[%s271 + $0x508] sm:$0xff]
        %v513 = vld [vmem:[%s271 + $0x510] sm:$0xff]
        %v514 = vld [vmem:[%s271 + $0x518] sm:$0xff]
        %v515 = vld [vmem:[%s271 + $0x520] sm:$0xff]
        %v516 = vld [vmem:[%s271 + $0x528] sm:$0xff]
        %v517 = vld [vmem:[%s271 + $0x530] sm:$0xff]
        %v518 = vld [vmem:[%s271 + $0x538] sm:$0xff]
        %v519 = vld [vmem:[%s271 + $0x540] sm:$0xff]
        %v520 = vld [vmem:[%s271 + $0x548] sm:$0xff]
        %v521 = vld [vmem:[%s271 + $0x550] sm:$0xff]
        %v522 = vld [vmem:[%s271 + $0x558] sm:$0xff]
        %v523 = vld [vmem:[%s271 + $0x560] sm:$0xff]
        %v524 = vld [vmem:[%s271 + $0x568] sm:$0xff]
        %v525 = vld [vmem:[%s271 + $0x570] sm:$0xff]
        %v526 = vld [vmem:[%s271 + $0x578] sm:$0xff]
        %v527 = vld [vmem:[%s271 + $0x580] sm:$0xff]
        %v528 = vld [vmem:[%s271 + $0x588] sm:$0xff]
        %v529 = vld [vmem:[%s271 + $0x590] sm:$0xff]
        %v530 = vld [vmem:[%s271 + $0x598] sm:$0xff]
        %v531 = vld [vmem:[%s271 + $0x5a0] sm:$0xff]
        %v532 = vld [vmem:[%s271 + $0x5a8] sm:$0xff]
        %v533 = vld [vmem:[%s271 + $0x5b0] sm:$0xff]
        %v534 = vld [vmem:[%s271 + $0x5b8] sm:$0xff]
        %v535 = vld [vmem:[%s271 + $0x5c0] sm:$0xff]
        %v536 = vld [vmem:[%s271 + $0x5c8] sm:$0xff]
        %v537 = vld [vmem:[%s271 + $0x5d0] sm:$0xff]
        %v538 = vld [vmem:[%s271 + $0x5d8] sm:$0xff]
        %v539 = vld [vmem:[%s271 + $0x5e0] sm:$0xff]
        %v540 = vld [vmem:[%s271 + $0x5e8] sm:$0xff]
        %v541 = vld [vmem:[%s271 + $0x5f0] sm:$0xff]
        %v542 = vld [vmem:[%s271 + $0x5f8] sm:$0xff]
        %v543 = vld [vmem:[%s271 + $0x600] sm:$0xff]
        %v544 = vld [vmem:[%s271 + $0x608] sm:$0xff]
        %v545 = vld [vmem:[%s271 + $0x610] sm:$0xff]
        %v546 = vld [vmem:[%s271 + $0x618] sm:$0xff]
        %v547 = vld [vmem:[%s271 + $0x620] sm:$0xff]
        %v548 = vld [vmem:[%s271 + $0x628] sm:$0xff]
        %v549 = vld [vmem:[%s271 + $0x630] sm:$0xff]
        %v550 = vld [vmem:[%s271 + $0x638] sm:$0xff]
        %v551 = vld [vmem:[%s271 + $0x640] sm:$0xff]
        %v552 = vld [vmem:[%s271 + $0x648] sm:$0xff]
        %v553 = vld [vmem:[%s271 + $0x650] sm:$0xff]
        %v554 = vld [vmem:[%s271 + $0x658] sm:$0xff]
        %v555 = vld [vmem:[%s271 + $0x660] sm:$0xff]
        %v556 = vld [vmem:[%s271 + $0x668] sm:$0xff]
        %v557 = vld [vmem:[%s271 + $0x670] sm:$0xff]
        %v558 = vld [vmem:[%s271 + $0x678] sm:$0xff]
        %v559 = vld [vmem:[%s271 + $0x680] sm:$0xff]
        %v560 = vld [vmem:[%s271 + $0x688] sm:$0xff]
        %v561 = vld [vmem:[%s271 + $0x690] sm:$0xff]
        %v562 = vld [vmem:[%s271 + $0x698] sm:$0xff]
        %v563 = vld [vmem:[%s271 + $0x6a0] sm:$0xff]
        %v564 = vld [vmem:[%s271 + $0x6a8] sm:$0xff]
        %v565 = vld [vmem:[%s271 + $0x6b0] sm:$0xff]
        %v566 = vld [vmem:[%s271 + $0x6b8] sm:$0xff]
        %v567 = vld [vmem:[%s271 + $0x6c0] sm:$0xff]
        %v568 = vld [vmem:[%s271 + $0x6c8] sm:$0xff]
        %v569 = vld [vmem:[%s271 + $0x6d0] sm:$0xff]
        %v570 = vld [vmem:[%s271 + $0x6d8] sm:$0xff]
        %v571 = vld [vmem:[%s271 + $0x6e0] sm:$0xff]
        %v572 = vld [vmem:[%s271 + $0x6e8] sm:$0xff]
        %v573 = vld [vmem:[%s271 + $0x6f0] sm:$0xff]
        %v574 = vld [vmem:[%s271 + $0x6f8] sm:$0xff]
        %v575 = vld [vmem:[%s271 + $0x700] sm:$0xff]
        %v576 = vld [vmem:[%s271 + $0x708] sm:$0xff]
        %v577 = vld [vmem:[%s271 + $0x710] sm:$0xff]
        %v578 = vld [vmem:[%s271 + $0x718] sm:$0xff]
        %v579 = vld [vmem:[%s271 + $0x720] sm:$0xff]
        %v580 = vld [vmem:[%s271 + $0x728] sm:$0xff]
        %v581 = vld [vmem:[%s271 + $0x730] sm:$0xff]
        %v582 = vld [vmem:[%s271 + $0x738] sm:$0xff]
        %v583 = vld [vmem:[%s271 + $0x740] sm:$0xff]
        %v584 = vld [vmem:[%s271 + $0x748] sm:$0xff]
        %v585 = vld [vmem:[%s271 + $0x750] sm:$0xff]
        %v586 = vld [vmem:[%s271 + $0x758] sm:$0xff]
        %v587 = vld [vmem:[%s271 + $0x760] sm:$0xff]
        %v588 = vld [vmem:[%s271 + $0x768] sm:$0xff]
        %v589 = vld [vmem:[%s271 + $0x770] sm:$0xff]
        %v590 = vld [vmem:[%s271 + $0x778] sm:$0xff]
        %v591 = vld [vmem:[%s271 + $0x780] sm:$0xff]
        %v592 = vld [vmem:[%s271 + $0x788] sm:$0xff]
        %v593 = vld [vmem:[%s271 + $0x790] sm:$0xff]
        %v594 = vld [vmem:[%s271 + $0x798] sm:$0xff]
        %v595 = vld [vmem:[%s271 + $0x7a0] sm:$0xff]
        %v596 = vld [vmem:[%s271 + $0x7a8] sm:$0xff]
        %v597 = vld [vmem:[%s271 + $0x7b0] sm:$0xff]
        %v598 = vld [vmem:[%s271 + $0x7b8] sm:$0xff]
        %v599 = vld [vmem:[%s271 + $0x7c0] sm:$0xff]
        %v600 = vld [vmem:[%s271 + $0x7c8] sm:$0xff]
        %v601 = vld [vmem:[%s271 + $0x7d0] sm:$0xff]
        %v602 = vld [vmem:[%s271 + $0x7d8] sm:$0xff]
        %v603 = vld [vmem:[%s271 + $0x7e0] sm:$0xff]
        %v604 = vld [vmem:[%s271 + $0x7e8] sm:$0xff]
        %v605 = vld [vmem:[%s271 + $0x7f0] sm:$0xff]
        %v606 = vld [vmem:[%s271 + $0x7f8] sm:$0xff]
        %v607 = vld [vmem:[%s271 + $0x800] sm:$0xff]
        %v608 = vld [vmem:[%s271 + $0x808] sm:$0xff]
        %v609 = vld [vmem:[%s271 + $0x810] sm:$0xff]
        %v610 = vld [vmem:[%s271 + $0x818] sm:$0xff]
        %v611 = vld [vmem:[%s271 + $0x820] sm:$0xff]
        %v612 = vld [vmem:[%s271 + $0x828] sm:$0xff]
        %v613 = vld [vmem:[%s271 + $0x830] sm:$0xff]
        %v614 = vld [vmem:[%s271 + $0x838] sm:$0xff]
        %v615 = vld [vmem:[%s271 + $0x840] sm:$0xff]
        %v616 = vld [vmem:[%s271 + $0x848] sm:$0xff]
        %v617 = vld [vmem:[%s271 + $0x850] sm:$0xff]
        %v618 = vld [vmem:[%s271 + $0x858] sm:$0xff]
        %v619 = vld [vmem:[%s271 + $0x860] sm:$0xff]
        %v620 = vld [vmem:[%s271 + $0x868] sm:$0xff]
        %v621 = vld [vmem:[%s271 + $0x870] sm:$0xff]
        %v622 = vld [vmem:[%s271 + $0x878] sm:$0xff]
        %v623 = vld [vmem:[%s271 + $0x880] sm:$0xff]
        %v624 = vld [vmem:[%s271 + $0x888] sm:$0xff]
        %v625 = vld [vmem:[%s271 + $0x890] sm:$0xff]
        %v626 = vld [vmem:[%s271 + $0x898] sm:$0xff]
        %v627 = vld [vmem:[%s271 + $0x8a0] sm:$0xff]
        %v628 = vld [vmem:[%s271 + $0x8a8] sm:$0xff]
        %v629 = vld [vmem:[%s271 + $0x8b0] sm:$0xff]
        %v630 = vld [vmem:[%s271 + $0x8b8] sm:$0xff]
        %v631 = vld [vmem:[%s271 + $0x8c0] sm:$0xff]
        %v632 = vld [vmem:[%s271 + $0x8c8] sm:$0xff]
        %v633 = vld [vmem:[%s271 + $0x8d0] sm:$0xff]
        %v634 = vld [vmem:[%s271 + $0x8d8] sm:$0xff]
        %v635 = vld [vmem:[%s271 + $0x8e0] sm:$0xff]
        %v636 = vld [vmem:[%s271 + $0x8e8] sm:$0xff]
        %v637 = vld [vmem:[%s271 + $0x8f0] sm:$0xff]
        %v638 = vld [vmem:[%s271 + $0x8f8] sm:$0xff]
        %v639 = vld [vmem:[%s271 + $0x900] sm:$0xff]
        %v640 = vld [vmem:[%s271 + $0x908] sm:$0xff]
        %v641 = vld [vmem:[%s271 + $0x910] sm:$0xff]
        %v642 = vld [vmem:[%s271 + $0x918] sm:$0xff]
        %v643 = vld [vmem:[%s271 + $0x920] sm:$0xff]
        %v644 = vld [vmem:[%s271 + $0x928] sm:$0xff]
        %v645 = vld [vmem:[%s271 + $0x930] sm:$0xff]
        %v646 = vld [vmem:[%s271 + $0x938] sm:$0xff]
        %v647 = vld [vmem:[%s271 + $0x940] sm:$0xff]
        %v648 = vld [vmem:[%s271 + $0x948] sm:$0xff]
        %v649 = vld [vmem:[%s271 + $0x950] sm:$0xff]
        %v650 = vld [vmem:[%s271 + $0x958] sm:$0xff]
        %v651 = vld [vmem:[%s271 + $0x960] sm:$0xff]
        %v652 = vld [vmem:[%s271 + $0x968] sm:$0xff]
        %v653 = vld [vmem:[%s271 + $0x970] sm:$0xff]
        %v654 = vld [vmem:[%s271 + $0x978] sm:$0xff]
        %v655 = vld [vmem:[%s271 + $0x980] sm:$0xff]
        %v656 = vld [vmem:[%s271 + $0x988] sm:$0xff]
        %v657 = vld [vmem:[%s271 + $0x990] sm:$0xff]
        %v658 = vld [vmem:[%s271 + $0x998] sm:$0xff]
        %v659 = vld [vmem:[%s271 + $0x9a0] sm:$0xff]
        %v660 = vld [vmem:[%s271 + $0x9a8] sm:$0xff]
        %v661 = vld [vmem:[%s271 + $0x9b0] sm:$0xff]
        %v662 = vld [vmem:[%s271 + $0x9b8] sm:$0xff]
        %v663 = vld [vmem:[%s271 + $0x9c0] sm:$0xff]
        %v664 = vld [vmem:[%s271 + $0x9c8] sm:$0xff]
        %v665 = vld [vmem:[%s271 + $0x9d0] sm:$0xff]
        %v666 = vld [vmem:[%s271 + $0x9d8] sm:$0xff]
        %v667 = vld [vmem:[%s271 + $0x9e0] sm:$0xff]
        %v668 = vld [vmem:[%s271 + $0x9e8] sm:$0xff]
        %v669 = vld [vmem:[%s271 + $0x9f0] sm:$0xff]
        %v670 = vld [vmem:[%s271 + $0x9f8] sm:$0xff]
        %v671 = vld [vmem:[%s271 + $0xa00] sm:$0xff]
        %v672 = vld [vmem:[%s271 + $0xa08] sm:$0xff]
        %v673 = vld [vmem:[%s271 + $0xa10] sm:$0xff]
        %v674 = vld [vmem:[%s271 + $0xa18] sm:$0xff]
        %v675 = vld [vmem:[%s271 + $0xa20] sm:$0xff]
        %v676 = vld [vmem:[%s271 + $0xa28] sm:$0xff]
        %v677 = vld [vmem:[%s271 + $0xa30] sm:$0xff]
        %v678 = vld [vmem:[%s271 + $0xa38] sm:$0xff]
        %v679 = vld [vmem:[%s271 + $0xa40] sm:$0xff]
        %v680 = vld [vmem:[%s271 + $0xa48] sm:$0xff]
        %v681 = vld [vmem:[%s271 + $0xa50] sm:$0xff]
        %v682 = vld [vmem:[%s271 + $0xa58] sm:$0xff]
        %v683 = vld [vmem:[%s271 + $0xa60] sm:$0xff]
        %v684 = vld [vmem:[%s271 + $0xa68] sm:$0xff]
        %v685 = vld [vmem:[%s271 + $0xa70] sm:$0xff]
        %v686 = vld [vmem:[%s271 + $0xa78] sm:$0xff]
        %v687 = vld [vmem:[%s271 + $0xa80] sm:$0xff]
        %v688 = vld [vmem:[%s271 + $0xa88] sm:$0xff]
        %v689 = vld [vmem:[%s271 + $0xa90] sm:$0xff]
        %v690 = vld [vmem:[%s271 + $0xa98] sm:$0xff]
        %v691 = vld [vmem:[%s271 + $0xaa0] sm:$0xff]
        %v692 = vld [vmem:[%s271 + $0xaa8] sm:$0xff]
        %v693 = vld [vmem:[%s271 + $0xab0] sm:$0xff]
        %v694 = vld [vmem:[%s271 + $0xab8] sm:$0xff]
        %v695 = vld [vmem:[%s271 + $0xac0] sm:$0xff]
        %v696 = vld [vmem:[%s271 + $0xac8] sm:$0xff]
        %v697 = vld [vmem:[%s271 + $0xad0] sm:$0xff]
        %v698 = vld [vmem:[%s271 + $0xad8] sm:$0xff]
        %v699 = vld [vmem:[%s271 + $0xae0] sm:$0xff]
        %v700 = vld [vmem:[%s271 + $0xae8] sm:$0xff]
        %v701 = vld [vmem:[%s271 + $0xaf0] sm:$0xff]
        %v702 = vld [vmem:[%s271 + $0xaf8] sm:$0xff]
        %v703 = vld [vmem:[%s271 + $0xb00] sm:$0xff]
        %v704 = vld [vmem:[%s271 + $0xb08] sm:$0xff]
        %v705 = vld [vmem:[%s271 + $0xb10] sm:$0xff]
        %v706 = vld [vmem:[%s271 + $0xb18] sm:$0xff]
        %v707 = vld [vmem:[%s271 + $0xb20] sm:$0xff]
        %v708 = vld [vmem:[%s271 + $0xb28] sm:$0xff]
        %v709 = vld [vmem:[%s271 + $0xb30] sm:$0xff]
        %v710 = vld [vmem:[%s271 + $0xb38] sm:$0xff]
        %v711 = vld [vmem:[%s271 + $0xb40] sm:$0xff]
        %v712 = vld [vmem:[%s271 + $0xb48] sm:$0xff]
        %v713 = vld [vmem:[%s271 + $0xb50] sm:$0xff]
        %v714 = vld [vmem:[%s271 + $0xb58] sm:$0xff]
        %v715 = vld [vmem:[%s271 + $0xb60] sm:$0xff]
        %v716 = vld [vmem:[%s271 + $0xb68] sm:$0xff]
        %v717 = vld [vmem:[%s271 + $0xb70] sm:$0xff]
        %v718 = vld [vmem:[%s271 + $0xb78] sm:$0xff]
        %v719 = vld [vmem:[%s271 + $0xb80] sm:$0xff]
        %v720 = vld [vmem:[%s271 + $0xb88] sm:$0xff]
        %v721 = vld [vmem:[%s271 + $0xb90] sm:$0xff]
        %v722 = vld [vmem:[%s271 + $0xb98] sm:$0xff]
        %v723 = vld [vmem:[%s271 + $0xba0] sm:$0xff]
        %v724 = vld [vmem:[%s271 + $0xba8] sm:$0xff]
        %v725 = vld [vmem:[%s271 + $0xbb0] sm:$0xff]
        %v726 = vld [vmem:[%s271 + $0xbb8] sm:$0xff]
        %v727 = vld [vmem:[%s271 + $0xbc0] sm:$0xff]
        %v728 = vld [vmem:[%s271 + $0xbc8] sm:$0xff]
        %v729 = vld [vmem:[%s271 + $0xbd0] sm:$0xff]
        %v730 = vld [vmem:[%s271 + $0xbd8] sm:$0xff]
        %v731 = vld [vmem:[%s271 + $0xbe0] sm:$0xff]
        %v732 = vld [vmem:[%s271 + $0xbe8] sm:$0xff]
        %v733 = vld [vmem:[%s271 + $0xbf0] sm:$0xff]
        %v734 = vld [vmem:[%s271 + $0xbf8] sm:$0xff]
        %v735 = vld [vmem:[%s271 + $0xc00] sm:$0xff]
        %v736 = vld [vmem:[%s271 + $0xc08] sm:$0xff]
        %v737 = vld [vmem:[%s271 + $0xc10] sm:$0xff]
        %v738 = vld [vmem:[%s271 + $0xc18] sm:$0xff]
        %v739 = vld [vmem:[%s271 + $0xc20] sm:$0xff]
        %v740 = vld [vmem:[%s271 + $0xc28] sm:$0xff]
        %v741 = vld [vmem:[%s271 + $0xc30] sm:$0xff]
        %v742 = vld [vmem:[%s271 + $0xc38] sm:$0xff]
        %v743 = vld [vmem:[%s271 + $0xc40] sm:$0xff]
        %v744 = vld [vmem:[%s271 + $0xc48] sm:$0xff]
        %v745 = vld [vmem:[%s271 + $0xc50] sm:$0xff]
        %v746 = vld [vmem:[%s271 + $0xc58] sm:$0xff]
        %v747 = vld [vmem:[%s271 + $0xc60] sm:$0xff]
        %v748 = vld [vmem:[%s271 + $0xc68] sm:$0xff]
        %v749 = vld [vmem:[%s271 + $0xc70] sm:$0xff]
        %v750 = vld [vmem:[%s271 + $0xc78] sm:$0xff]
        %v751 = vld [vmem:[%s271 + $0xc80] sm:$0xff]
        %v752 = vld [vmem:[%s271 + $0xc88] sm:$0xff]
        %v753 = vld [vmem:[%s271 + $0xc90] sm:$0xff]
        %v754 = vld [vmem:[%s271 + $0xc98] sm:$0xff]
        %v755 = vld [vmem:[%s271 + $0xca0] sm:$0xff]
        %v756 = vld [vmem:[%s271 + $0xca8] sm:$0xff]
        %v757 = vld [vmem:[%s271 + $0xcb0] sm:$0xff]
        %v758 = vld [vmem:[%s271 + $0xcb8] sm:$0xff]
        %v759 = vld [vmem:[%s271 + $0xcc0] sm:$0xff]
        %v760 = vld [vmem:[%s271 + $0xcc8] sm:$0xff]
        %v761 = vld [vmem:[%s271 + $0xcd0] sm:$0xff]
        %v762 = vld [vmem:[%s271 + $0xcd8] sm:$0xff]
        %v763 = vld [vmem:[%s271 + $0xce0] sm:$0xff]
        %v764 = vld [vmem:[%s271 + $0xce8] sm:$0xff]
        %v765 = vld [vmem:[%s271 + $0xcf0] sm:$0xff]
        %v766 = vld [vmem:[%s271 + $0xcf8] sm:$0xff]
        %v767 = vld [vmem:[%s271 + $0xd00] sm:$0xff]
        %v768 = vld [vmem:[%s271 + $0xd08] sm:$0xff]
        %v769 = vld [vmem:[%s271 + $0xd10] sm:$0xff]
        %v770 = vld [vmem:[%s271 + $0xd18] sm:$0xff]
        %v771 = vld [vmem:[%s271 + $0xd20] sm:$0xff]
        %v772 = vld [vmem:[%s271 + $0xd28] sm:$0xff]
        %v773 = vld [vmem:[%s271 + $0xd30] sm:$0xff]
        %v774 = vld [vmem:[%s271 + $0xd38] sm:$0xff]
        %v775 = vld [vmem:[%s271 + $0xd40] sm:$0xff]
        %v776 = vld [vmem:[%s271 + $0xd48] sm:$0xff]
        %v777 = vld [vmem:[%s271 + $0xd50] sm:$0xff]
        %v778 = vld [vmem:[%s271 + $0xd58] sm:$0xff]
        %v779 = vld [vmem:[%s271 + $0xd60] sm:$0xff]
        %v780 = vld [vmem:[%s271 + $0xd68] sm:$0xff]
        %v781 = vld [vmem:[%s271 + $0xd70] sm:$0xff]
        %v782 = vld [vmem:[%s271 + $0xd78] sm:$0xff]
        %v783 = vld [vmem:[%s271 + $0xd80] sm:$0xff]
        %v784 = vld [vmem:[%s271 + $0xd88] sm:$0xff]
        %v785 = vld [vmem:[%s271 + $0xd90] sm:$0xff]
        %v786 = vld [vmem:[%s271 + $0xd98] sm:$0xff]
        %v787 = vld [vmem:[%s271 + $0xda0] sm:$0xff]
        %v788 = vld [vmem:[%s271 + $0xda8] sm:$0xff]
        %v789 = vld [vmem:[%s271 + $0xdb0] sm:$0xff]
        %v790 = vld [vmem:[%s271 + $0xdb8] sm:$0xff]
        %v791 = vld [vmem:[%s271 + $0xdc0] sm:$0xff]
        %v792 = vld [vmem:[%s271 + $0xdc8] sm:$0xff]
        %v793 = vld [vmem:[%s271 + $0xdd0] sm:$0xff]
        %v794 = vld [vmem:[%s271 + $0xdd8] sm:$0xff]
        %v795 = vld [vmem:[%s271 + $0xde0] sm:$0xff]
        %v796 = vld [vmem:[%s271 + $0xde8] sm:$0xff]
        %v797 = vld [vmem:[%s271 + $0xdf0] sm:$0xff]
        %v798 = vld [vmem:[%s271 + $0xdf8] sm:$0xff]
        %v799 = vld [vmem:[%s271 + $0xe00] sm:$0xff]
        %v800 = vld [vmem:[%s271 + $0xe08] sm:$0xff]
        %v801 = vld [vmem:[%s271 + $0xe10] sm:$0xff]
        %v802 = vld [vmem:[%s271 + $0xe18] sm:$0xff]
        %v803 = vld [vmem:[%s271 + $0xe20] sm:$0xff]
        %v804 = vld [vmem:[%s271 + $0xe28] sm:$0xff]
        %v805 = vld [vmem:[%s271 + $0xe30] sm:$0xff]
        %v806 = vld [vmem:[%s271 + $0xe38] sm:$0xff]
        %v807 = vld [vmem:[%s271 + $0xe40] sm:$0xff]
        %v808 = vld [vmem:[%s271 + $0xe48] sm:$0xff]
        %v809 = vld [vmem:[%s271 + $0xe50] sm:$0xff]
        %v810 = vld [vmem:[%s271 + $0xe58] sm:$0xff]
        %v811 = vld [vmem:[%s271 + $0xe60] sm:$0xff]
        %v812 = vld [vmem:[%s271 + $0xe68] sm:$0xff]
        %v813 = vld [vmem:[%s271 + $0xe70] sm:$0xff]
        %v814 = vld [vmem:[%s271 + $0xe78] sm:$0xff]
        %v815 = vld [vmem:[%s271 + $0xe80] sm:$0xff]
        %v816 = vld [vmem:[%s271 + $0xe88] sm:$0xff]
        %v817 = vld [vmem:[%s271 + $0xe90] sm:$0xff]
        %v818 = vld [vmem:[%s271 + $0xe98] sm:$0xff]
        %v819 = vld [vmem:[%s271 + $0xea0] sm:$0xff]
        %v820 = vld [vmem:[%s271 + $0xea8] sm:$0xff]
        %v821 = vld [vmem:[%s271 + $0xeb0] sm:$0xff]
        %v822 = vld [vmem:[%s271 + $0xeb8] sm:$0xff]
        %v823 = vld [vmem:[%s271 + $0xec0] sm:$0xff]
        %v824 = vld [vmem:[%s271 + $0xec8] sm:$0xff]
        %v825 = vld [vmem:[%s271 + $0xed0] sm:$0xff]
        %v826 = vld [vmem:[%s271 + $0xed8] sm:$0xff]
        %v827 = vld [vmem:[%s271 + $0xee0] sm:$0xff]
        %v828 = vld [vmem:[%s271 + $0xee8] sm:$0xff]
        %v829 = vld [vmem:[%s271 + $0xef0] sm:$0xff]
        %v830 = vld [vmem:[%s271 + $0xef8] sm:$0xff]
        %v831 = vld [vmem:[%s271 + $0xf00] sm:$0xff]
        %v832 = vld [vmem:[%s271 + $0xf08] sm:$0xff]
        %v833 = vld [vmem:[%s271 + $0xf10] sm:$0xff]
        %v834 = vld [vmem:[%s271 + $0xf18] sm:$0xff]
        %v835 = vld [vmem:[%s271 + $0xf20] sm:$0xff]
        %v836 = vld [vmem:[%s271 + $0xf28] sm:$0xff]
        %v837 = vld [vmem:[%s271 + $0xf30] sm:$0xff]
        %v838 = vld [vmem:[%s271 + $0xf38] sm:$0xff]
        %v839 = vld [vmem:[%s271 + $0xf40] sm:$0xff]
        %v840 = vld [vmem:[%s271 + $0xf48] sm:$0xff]
        %v841 = vld [vmem:[%s271 + $0xf50] sm:$0xff]
        %v842 = vld [vmem:[%s271 + $0xf58] sm:$0xff]
        %v843 = vld [vmem:[%s271 + $0xf60] sm:$0xff]
        %v844 = vld [vmem:[%s271 + $0xf68] sm:$0xff]
        %v845 = vld [vmem:[%s271 + $0xf70] sm:$0xff]
        %v846 = vld [vmem:[%s271 + $0xf78] sm:$0xff]
        %v847 = vld [vmem:[%s271 + $0xf80] sm:$0xff]
        %v848 = vld [vmem:[%s271 + $0xf88] sm:$0xff]
        %v849 = vld [vmem:[%s271 + $0xf90] sm:$0xff]
        %v850 = vld [vmem:[%s271 + $0xf98] sm:$0xff]
        %v851 = vld [vmem:[%s271 + $0xfa0] sm:$0xff]
        %v852 = vld [vmem:[%s271 + $0xfa8] sm:$0xff]
        %v853 = vld [vmem:[%s271 + $0xfb0] sm:$0xff]
        %v854 = vld [vmem:[%s271 + $0xfb8] sm:$0xff]
        %v855 = vld [vmem:[%s271 + $0xfc0] sm:$0xff]
        %v856 = vld [vmem:[%s271 + $0xfc8] sm:$0xff]
        %v857 = vld [vmem:[%s271 + $0xfd0] sm:$0xff]
        %v858 = vld [vmem:[%s271 + $0xfd8] sm:$0xff]
        %v859 = vld [vmem:[%s271 + $0xfe0] sm:$0xff]
        %v860 = vld [vmem:[%s271 + $0xfe8] sm:$0xff]
        %v861 = vld [vmem:[%s271 + $0xff0] sm:$0xff]
        %v862 = vld [vmem:[%s271 + $0xff8] sm:$0xff]
        %v865 = vunpack.c.l.b16 %v349
        %v866 = vunpack.c.h.b16 %v349
        %v867 = vunpack.c.l.b16 %v350
        %v868 = vunpack.c.h.b16 %v350
        %v869 = vpack.c.b16 %v865, %v865
        %v870 = vpack.c.b16 %v866, %v866
        %v871 = vpack.c.b16 %v867, %v867
        %v872 = vpack.c.b16 %v868, %v868
        %v1389 = vunpack.c.l.b16 %v351
        %v1390 = vunpack.c.h.b16 %v351
        %v1391 = vunpack.c.l.b16 %v352
        %v1392 = vunpack.c.h.b16 %v352
        %v1393 = vunpack.c.l.b16 %v353
        %v1394 = vunpack.c.h.b16 %v353
        %v1395 = vunpack.c.l.b16 %v354
        %v1396 = vunpack.c.h.b16 %v354
        %v1397 = vunpack.c.l.b16 %v355
        %v1398 = vunpack.c.h.b16 %v355
        %v1399 = vunpack.c.l.b16 %v356
        %v1400 = vunpack.c.h.b16 %v356
        %v1401 = vunpack.c.l.b16 %v357
        %v1402 = vunpack.c.h.b16 %v357
        %v1403 = vunpack.c.l.b16 %v358
        %v1404 = vunpack.c.h.b16 %v358
        %v1405 = vunpack.c.l.b16 %v359
        %v1406 = vunpack.c.h.b16 %v359
        %v1407 = vunpack.c.l.b16 %v360
        %v1408 = vunpack.c.h.b16 %v360
        %v1409 = vunpack.c.l.b16 %v361
        %v1410 = vunpack.c.h.b16 %v361
        %v1411 = vunpack.c.l.b16 %v362
        %v1412 = vunpack.c.h.b16 %v362
        %v1413 = vunpack.c.l.b16 %v363
        %v1414 = vunpack.c.h.b16 %v363
        %v1415 = vunpack.c.l.b16 %v364
        %v1416 = vunpack.c.h.b16 %v364
        %v1417 = vunpack.c.l.b16 %v365
        %v1418 = vunpack.c.h.b16 %v365
        %v1419 = vunpack.c.l.b16 %v366
        %v1420 = vunpack.c.h.b16 %v366
        %v1421 = vunpack.c.l.b16 %v367
        %v1422 = vunpack.c.h.b16 %v367
        %v1423 = vunpack.c.l.b16 %v368
        %v1424 = vunpack.c.h.b16 %v368
        %v1425 = vunpack.c.l.b16 %v369
        %v1426 = vunpack.c.h.b16 %v369
        %v1427 = vunpack.c.l.b16 %v370
        %v1428 = vunpack.c.h.b16 %v370
        %v1429 = vunpack.c.l.b16 %v371
        %v1430 = vunpack.c.h.b16 %v371
        %v1431 = vunpack.c.l.b16 %v372
        %v1432 = vunpack.c.h.b16 %v372
        %v1433 = vunpack.c.l.b16 %v373
        %v1434 = vunpack.c.h.b16 %v373
        %v1435 = vunpack.c.l.b16 %v374
        %v1436 = vunpack.c.h.b16 %v374
        %v1437 = vunpack.c.l.b16 %v375
        %v1438 = vunpack.c.h.b16 %v375
        %v1439 = vunpack.c.l.b16 %v376
        %v1440 = vunpack.c.h.b16 %v376
        %v1441 = vunpack.c.l.b16 %v377
        %v1442 = vunpack.c.h.b16 %v377
        %v1443 = vunpack.c.l.b16 %v378
        %v1444 = vunpack.c.h.b16 %v378
        %v1445 = vunpack.c.l.b16 %v379
        %v1446 = vunpack.c.h.b16 %v379
        %v1447 = vunpack.c.l.b16 %v380
        %v1448 = vunpack.c.h.b16 %v380
        %v1449 = vunpack.c.l.b16 %v381
        %v1450 = vunpack.c.h.b16 %v381
        %v1451 = vunpack.c.l.b16 %v382
        %v1452 = vunpack.c.h.b16 %v382
        %v1453 = vunpack.c.l.b16 %v383
        %v1454 = vunpack.c.h.b16 %v383
        %v1455 = vunpack.c.l.b16 %v384
        %v1456 = vunpack.c.h.b16 %v384
        %v1457 = vunpack.c.l.b16 %v385
        %v1458 = vunpack.c.h.b16 %v385
        %v1459 = vunpack.c.l.b16 %v386
        %v1460 = vunpack.c.h.b16 %v386
        %v1461 = vunpack.c.l.b16 %v387
        %v1462 = vunpack.c.h.b16 %v387
        %v1463 = vunpack.c.l.b16 %v388
        %v1464 = vunpack.c.h.b16 %v388
        %v1465 = vunpack.c.l.b16 %v389
        %v1466 = vunpack.c.h.b16 %v389
        %v1467 = vunpack.c.l.b16 %v390
        %v1468 = vunpack.c.h.b16 %v390
        %v1469 = vunpack.c.l.b16 %v391
        %v1470 = vunpack.c.h.b16 %v391
        %v1471 = vunpack.c.l.b16 %v392
        %v1472 = vunpack.c.h.b16 %v392
        %v1473 = vunpack.c.l.b16 %v393
        %v1474 = vunpack.c.h.b16 %v393
        %v1475 = vunpack.c.l.b16 %v394
        %v1476 = vunpack.c.h.b16 %v394
        %v1477 = vunpack.c.l.b16 %v395
        %v1478 = vunpack.c.h.b16 %v395
        %v1479 = vunpack.c.l.b16 %v396
        %v1480 = vunpack.c.h.b16 %v396
        %v1481 = vunpack.c.l.b16 %v397
        %v1482 = vunpack.c.h.b16 %v397
        %v1483 = vunpack.c.l.b16 %v398
        %v1484 = vunpack.c.h.b16 %v398
        %v1485 = vunpack.c.l.b16 %v399
        %v1486 = vunpack.c.h.b16 %v399
        %v1487 = vunpack.c.l.b16 %v400
        %v1488 = vunpack.c.h.b16 %v400
        %v1489 = vunpack.c.l.b16 %v401
        %v1490 = vunpack.c.h.b16 %v401
        %v1491 = vunpack.c.l.b16 %v402
        %v1492 = vunpack.c.h.b16 %v402
        %v1493 = vunpack.c.l.b16 %v403
        %v1494 = vunpack.c.h.b16 %v403
        %v1495 = vunpack.c.l.b16 %v404
        %v1496 = vunpack.c.h.b16 %v404
        %v1497 = vunpack.c.l.b16 %v405
        %v1498 = vunpack.c.h.b16 %v405
        %v1499 = vunpack.c.l.b16 %v406
        %v1500 = vunpack.c.h.b16 %v406
        %v1501 = vunpack.c.l.b16 %v407
        %v1502 = vunpack.c.h.b16 %v407
        %v1503 = vunpack.c.l.b16 %v408
        %v1504 = vunpack.c.h.b16 %v408
        %v1505 = vunpack.c.l.b16 %v409
        %v1506 = vunpack.c.h.b16 %v409
        %v1507 = vunpack.c.l.b16 %v410
        %v1508 = vunpack.c.h.b16 %v410
        %v1509 = vunpack.c.l.b16 %v411
        %v1510 = vunpack.c.h.b16 %v411
        %v1511 = vunpack.c.l.b16 %v412
        %v1512 = vunpack.c.h.b16 %v412
        %v1513 = vunpack.c.l.b16 %v413
        %v1514 = vunpack.c.h.b16 %v413
        %v1515 = vunpack.c.l.b16 %v414
        %v1516 = vunpack.c.h.b16 %v414
        %v1517 = vunpack.c.l.b16 %v415
        %v1518 = vunpack.c.h.b16 %v415
        %v1519 = vunpack.c.l.b16 %v416
        %v1520 = vunpack.c.h.b16 %v416
        %v1521 = vunpack.c.l.b16 %v417
        %v1522 = vunpack.c.h.b16 %v417
        %v1523 = vunpack.c.l.b16 %v418
        %v1524 = vunpack.c.h.b16 %v418
        %v1525 = vunpack.c.l.b16 %v419
        %v1526 = vunpack.c.h.b16 %v419
        %v1527 = vunpack.c.l.b16 %v420
        %v1528 = vunpack.c.h.b16 %v420
        %v1529 = vunpack.c.l.b16 %v421
        %v1530 = vunpack.c.h.b16 %v421
        %v1531 = vunpack.c.l.b16 %v422
        %v1532 = vunpack.c.h.b16 %v422
        %v1533 = vunpack.c.l.b16 %v423
        %v1534 = vunpack.c.h.b16 %v423
        %v1535 = vunpack.c.l.b16 %v424
        %v1536 = vunpack.c.h.b16 %v424
        %v1537 = vunpack.c.l.b16 %v425
        %v1538 = vunpack.c.h.b16 %v425
        %v1539 = vunpack.c.l.b16 %v426
        %v1540 = vunpack.c.h.b16 %v426
        %v1541 = vunpack.c.l.b16 %v427
        %v1542 = vunpack.c.h.b16 %v427
        %v1543 = vunpack.c.l.b16 %v428
        %v1544 = vunpack.c.h.b16 %v428
        %v1545 = vunpack.c.l.b16 %v429
        %v1546 = vunpack.c.h.b16 %v429
        %v1547 = vunpack.c.l.b16 %v430
        %v1548 = vunpack.c.h.b16 %v430
        %v1549 = vunpack.c.l.b16 %v431
        %v1550 = vunpack.c.h.b16 %v431
        %v1551 = vunpack.c.l.b16 %v432
        %v1552 = vunpack.c.h.b16 %v432
        %v1553 = vunpack.c.l.b16 %v433
        %v1554 = vunpack.c.h.b16 %v433
        %v1555 = vunpack.c.l.b16 %v434
        %v1556 = vunpack.c.h.b16 %v434
        %v1557 = vunpack.c.l.b16 %v435
        %v1558 = vunpack.c.h.b16 %v435
        %v1559 = vunpack.c.l.b16 %v436
        %v1560 = vunpack.c.h.b16 %v436
        %v1561 = vunpack.c.l.b16 %v437
        %v1562 = vunpack.c.h.b16 %v437
        %v1563 = vunpack.c.l.b16 %v438
        %v1564 = vunpack.c.h.b16 %v438
        %v1565 = vunpack.c.l.b16 %v439
        %v1566 = vunpack.c.h.b16 %v439
        %v1567 = vunpack.c.l.b16 %v440
        %v1568 = vunpack.c.h.b16 %v440
        %v1569 = vunpack.c.l.b16 %v441
        %v1570 = vunpack.c.h.b16 %v441
        %v1571 = vunpack.c.l.b16 %v442
        %v1572 = vunpack.c.h.b16 %v442
        %v1573 = vunpack.c.l.b16 %v443
        %v1574 = vunpack.c.h.b16 %v443
        %v1575 = vunpack.c.l.b16 %v444
        %v1576 = vunpack.c.h.b16 %v444
        %v1577 = vunpack.c.l.b16 %v445
        %v1578 = vunpack.c.h.b16 %v445
        %v1579 = vunpack.c.l.b16 %v446
        %v1580 = vunpack.c.h.b16 %v446
        %v1581 = vunpack.c.l.b16 %v447
        %v1582 = vunpack.c.h.b16 %v447
        %v1583 = vunpack.c.l.b16 %v448
        %v1584 = vunpack.c.h.b16 %v448
        %v1585 = vunpack.c.l.b16 %v449
        %v1586 = vunpack.c.h.b16 %v449
        %v1587 = vunpack.c.l.b16 %v450
        %v1588 = vunpack.c.h.b16 %v450
        %v1589 = vunpack.c.l.b16 %v451
        %v1590 = vunpack.c.h.b16 %v451
        %v1591 = vunpack.c.l.b16 %v452
        %v1592 = vunpack.c.h.b16 %v452
        %v1593 = vunpack.c.l.b16 %v453
        %v1594 = vunpack.c.h.b16 %v453
        %v1595 = vunpack.c.l.b16 %v454
        %v1596 = vunpack.c.h.b16 %v454
        %v1597 = vunpack.c.l.b16 %v455
        %v1598 = vunpack.c.h.b16 %v455
        %v1599 = vunpack.c.l.b16 %v456
        %v1600 = vunpack.c.h.b16 %v456
        %v1601 = vunpack.c.l.b16 %v457
        %v1602 = vunpack.c.h.b16 %v457
        %v1603 = vunpack.c.l.b16 %v458
        %v1604 = vunpack.c.h.b16 %v458
        %v1605 = vunpack.c.l.b16 %v459
        %v1606 = vunpack.c.h.b16 %v459
        %v1607 = vunpack.c.l.b16 %v460
        %v1608 = vunpack.c.h.b16 %v460
        %v1609 = vunpack.c.l.b16 %v461
        %v1610 = vunpack.c.h.b16 %v461
        %v1611 = vunpack.c.l.b16 %v462
        %v1612 = vunpack.c.h.b16 %v462
        %v1613 = vunpack.c.l.b16 %v463
        %v1614 = vunpack.c.h.b16 %v463
        %v1615 = vunpack.c.l.b16 %v464
        %v1616 = vunpack.c.h.b16 %v464
        %v1617 = vunpack.c.l.b16 %v465
        %v1618 = vunpack.c.h.b16 %v465
        %v1619 = vunpack.c.l.b16 %v466
        %v1620 = vunpack.c.h.b16 %v466
        %v1621 = vunpack.c.l.b16 %v467
        %v1622 = vunpack.c.h.b16 %v467
        %v1623 = vunpack.c.l.b16 %v468
        %v1624 = vunpack.c.h.b16 %v468
        %v1625 = vunpack.c.l.b16 %v469
        %v1626 = vunpack.c.h.b16 %v469
        %v1627 = vunpack.c.l.b16 %v470
        %v1628 = vunpack.c.h.b16 %v470
        %v1629 = vunpack.c.l.b16 %v471
        %v1630 = vunpack.c.h.b16 %v471
        %v1631 = vunpack.c.l.b16 %v472
        %v1632 = vunpack.c.h.b16 %v472
        %v1633 = vunpack.c.l.b16 %v473
        %v1634 = vunpack.c.h.b16 %v473
        %v1635 = vunpack.c.l.b16 %v474
        %v1636 = vunpack.c.h.b16 %v474
        %v1637 = vunpack.c.l.b16 %v475
        %v1638 = vunpack.c.h.b16 %v475
        %v1639 = vunpack.c.l.b16 %v476
        %v1640 = vunpack.c.h.b16 %v476
        %v1641 = vunpack.c.l.b16 %v477
        %v1642 = vunpack.c.h.b16 %v477
        %v1643 = vunpack.c.l.b16 %v478
        %v1644 = vunpack.c.h.b16 %v478
        %v1645 = vunpack.c.l.b16 %v479
        %v1646 = vunpack.c.h.b16 %v479
        %v1647 = vunpack.c.l.b16 %v480
        %v1648 = vunpack.c.h.b16 %v480
        %v1649 = vunpack.c.l.b16 %v481
        %v1650 = vunpack.c.h.b16 %v481
        %v1651 = vunpack.c.l.b16 %v482
        %v1652 = vunpack.c.h.b16 %v482
        %v1653 = vunpack.c.l.b16 %v483
        %v1654 = vunpack.c.h.b16 %v483
        %v1655 = vunpack.c.l.b16 %v484
        %v1656 = vunpack.c.h.b16 %v484
        %v1657 = vunpack.c.l.b16 %v485
        %v1658 = vunpack.c.h.b16 %v485
        %v1659 = vunpack.c.l.b16 %v486
        %v1660 = vunpack.c.h.b16 %v486
        %v1661 = vunpack.c.l.b16 %v487
        %v1662 = vunpack.c.h.b16 %v487
        %v1663 = vunpack.c.l.b16 %v488
        %v1664 = vunpack.c.h.b16 %v488
        %v1665 = vunpack.c.l.b16 %v489
        %v1666 = vunpack.c.h.b16 %v489
        %v1667 = vunpack.c.l.b16 %v490
        %v1668 = vunpack.c.h.b16 %v490
        %v1669 = vunpack.c.l.b16 %v491
        %v1670 = vunpack.c.h.b16 %v491
        %v1671 = vunpack.c.l.b16 %v492
        %v1672 = vunpack.c.h.b16 %v492
        %v1673 = vunpack.c.l.b16 %v493
        %v1674 = vunpack.c.h.b16 %v493
        %v1675 = vunpack.c.l.b16 %v494
        %v1676 = vunpack.c.h.b16 %v494
        %v1677 = vunpack.c.l.b16 %v495
        %v1678 = vunpack.c.h.b16 %v495
        %v1679 = vunpack.c.l.b16 %v496
        %v1680 = vunpack.c.h.b16 %v496
        %v1681 = vunpack.c.l.b16 %v497
        %v1682 = vunpack.c.h.b16 %v497
        %v1683 = vunpack.c.l.b16 %v498
        %v1684 = vunpack.c.h.b16 %v498
        %v1685 = vunpack.c.l.b16 %v499
        %v1686 = vunpack.c.h.b16 %v499
        %v1687 = vunpack.c.l.b16 %v500
        %v1688 = vunpack.c.h.b16 %v500
        %v1689 = vunpack.c.l.b16 %v501
        %v1690 = vunpack.c.h.b16 %v501
        %v1691 = vunpack.c.l.b16 %v502
        %v1692 = vunpack.c.h.b16 %v502
        %v1693 = vunpack.c.l.b16 %v503
        %v1694 = vunpack.c.h.b16 %v503
        %v1695 = vunpack.c.l.b16 %v504
        %v1696 = vunpack.c.h.b16 %v504
        %v1697 = vunpack.c.l.b16 %v505
        %v1698 = vunpack.c.h.b16 %v505
        %v1699 = vunpack.c.l.b16 %v506
        %v1700 = vunpack.c.h.b16 %v506
        %v1701 = vunpack.c.l.b16 %v507
        %v1702 = vunpack.c.h.b16 %v507
        %v1703 = vunpack.c.l.b16 %v508
        %v1704 = vunpack.c.h.b16 %v508
        %v1705 = vunpack.c.l.b16 %v509
        %v1706 = vunpack.c.h.b16 %v509
        %v1707 = vunpack.c.l.b16 %v510
        %v1708 = vunpack.c.h.b16 %v510
        %v1709 = vunpack.c.l.b16 %v511
        %v1710 = vunpack.c.h.b16 %v511
        %v1711 = vunpack.c.l.b16 %v512
        %v1712 = vunpack.c.h.b16 %v512
        %v1713 = vunpack.c.l.b16 %v513
        %v1714 = vunpack.c.h.b16 %v513
        %v1715 = vunpack.c.l.b16 %v514
        %v1716 = vunpack.c.h.b16 %v514
        %v1717 = vunpack.c.l.b16 %v515
        %v1718 = vunpack.c.h.b16 %v515
        %v1719 = vunpack.c.l.b16 %v516
        %v1720 = vunpack.c.h.b16 %v516
        %v1721 = vunpack.c.l.b16 %v517
        %v1722 = vunpack.c.h.b16 %v517
        %v1723 = vunpack.c.l.b16 %v518
        %v1724 = vunpack.c.h.b16 %v518
        %v1725 = vunpack.c.l.b16 %v519
        %v1726 = vunpack.c.h.b16 %v519
        %v1727 = vunpack.c.l.b16 %v520
        %v1728 = vunpack.c.h.b16 %v520
        %v1729 = vunpack.c.l.b16 %v521
        %v1730 = vunpack.c.h.b16 %v521
        %v1731 = vunpack.c.l.b16 %v522
        %v1732 = vunpack.c.h.b16 %v522
        %v1733 = vunpack.c.l.b16 %v523
        %v1734 = vunpack.c.h.b16 %v523
        %v1735 = vunpack.c.l.b16 %v524
        %v1736 = vunpack.c.h.b16 %v524
        %v1737 = vunpack.c.l.b16 %v525
        %v1738 = vunpack.c.h.b16 %v525
        %v1739 = vunpack.c.l.b16 %v526
        %v1740 = vunpack.c.h.b16 %v526
        %v1741 = vunpack.c.l.b16 %v527
        %v1742 = vunpack.c.h.b16 %v527
        %v1743 = vunpack.c.l.b16 %v528
        %v1744 = vunpack.c.h.b16 %v528
        %v1745 = vunpack.c.l.b16 %v529
        %v1746 = vunpack.c.h.b16 %v529
        %v1747 = vunpack.c.l.b16 %v530
        %v1748 = vunpack.c.h.b16 %v530
        %v1749 = vunpack.c.l.b16 %v531
        %v1750 = vunpack.c.h.b16 %v531
        %v1751 = vunpack.c.l.b16 %v532
        %v1752 = vunpack.c.h.b16 %v532
        %v1753 = vunpack.c.l.b16 %v533
        %v1754 = vunpack.c.h.b16 %v533
        %v1755 = vunpack.c.l.b16 %v534
        %v1756 = vunpack.c.h.b16 %v534
        %v1757 = vunpack.c.l.b16 %v535
        %v1758 = vunpack.c.h.b16 %v535
        %v1759 = vunpack.c.l.b16 %v536
        %v1760 = vunpack.c.h.b16 %v536
        %v1761 = vunpack.c.l.b16 %v537
        %v1762 = vunpack.c.h.b16 %v537
        %v1763 = vunpack.c.l.b16 %v538
        %v1764 = vunpack.c.h.b16 %v538
        %v1765 = vunpack.c.l.b16 %v539
        %v1766 = vunpack.c.h.b16 %v539
        %v1767 = vunpack.c.l.b16 %v540
        %v1768 = vunpack.c.h.b16 %v540
        %v1769 = vunpack.c.l.b16 %v541
        %v1770 = vunpack.c.h.b16 %v541
        %v1771 = vunpack.c.l.b16 %v542
        %v1772 = vunpack.c.h.b16 %v542
        %v1773 = vunpack.c.l.b16 %v543
        %v1774 = vunpack.c.h.b16 %v543
        %v1775 = vunpack.c.l.b16 %v544
        %v1776 = vunpack.c.h.b16 %v544
        %v1777 = vunpack.c.l.b16 %v545
        %v1778 = vunpack.c.h.b16 %v545
        %v1779 = vunpack.c.l.b16 %v546
        %v1780 = vunpack.c.h.b16 %v546
        %v1781 = vunpack.c.l.b16 %v547
        %v1782 = vunpack.c.h.b16 %v547
        %v1783 = vunpack.c.l.b16 %v548
        %v1784 = vunpack.c.h.b16 %v548
        %v1785 = vunpack.c.l.b16 %v549
        %v1786 = vunpack.c.h.b16 %v549
        %v1787 = vunpack.c.l.b16 %v550
        %v1788 = vunpack.c.h.b16 %v550
        %v1789 = vunpack.c.l.b16 %v551
        %v1790 = vunpack.c.h.b16 %v551
        %v1791 = vunpack.c.l.b16 %v552
        %v1792 = vunpack.c.h.b16 %v552
        %v1793 = vunpack.c.l.b16 %v553
        %v1794 = vunpack.c.h.b16 %v553
        %v1795 = vunpack.c.l.b16 %v554
        %v1796 = vunpack.c.h.b16 %v554
        %v1797 = vunpack.c.l.b16 %v555
        %v1798 = vunpack.c.h.b16 %v555
        %v1799 = vunpack.c.l.b16 %v556
        %v1800 = vunpack.c.h.b16 %v556
        %v1801 = vunpack.c.l.b16 %v557
        %v1802 = vunpack.c.h.b16 %v557
        %v1803 = vunpack.c.l.b16 %v558
        %v1804 = vunpack.c.h.b16 %v558
        %v1805 = vunpack.c.l.b16 %v559
        %v1806 = vunpack.c.h.b16 %v559
        %v1807 = vunpack.c.l.b16 %v560
        %v1808 = vunpack.c.h.b16 %v560
        %v1809 = vunpack.c.l.b16 %v561
        %v1810 = vunpack.c.h.b16 %v561
        %v1811 = vunpack.c.l.b16 %v562
        %v1812 = vunpack.c.h.b16 %v562
        %v1813 = vunpack.c.l.b16 %v563
        %v1814 = vunpack.c.h.b16 %v563
        %v1815 = vunpack.c.l.b16 %v564
        %v1816 = vunpack.c.h.b16 %v564
        %v1817 = vunpack.c.l.b16 %v565
        %v1818 = vunpack.c.h.b16 %v565
        %v1819 = vunpack.c.l.b16 %v566
        %v1820 = vunpack.c.h.b16 %v566
        %v1821 = vunpack.c.l.b16 %v567
        %v1822 = vunpack.c.h.b16 %v567
        %v1823 = vunpack.c.l.b16 %v568
        %v1824 = vunpack.c.h.b16 %v568
        %v1825 = vunpack.c.l.b16 %v569
        %v1826 = vunpack.c.h.b16 %v569
        %v1827 = vunpack.c.l.b16 %v570
        %v1828 = vunpack.c.h.b16 %v570
        %v1829 = vunpack.c.l.b16 %v571
        %v1830 = vunpack.c.h.b16 %v571
        %v1831 = vunpack.c.l.b16 %v572
        %v1832 = vunpack.c.h.b16 %v572
        %v1833 = vunpack.c.l.b16 %v573
        %v1834 = vunpack.c.h.b16 %v573
        %v1835 = vunpack.c.l.b16 %v574
        %v1836 = vunpack.c.h.b16 %v574
        %v1837 = vunpack.c.l.b16 %v575
        %v1838 = vunpack.c.h.b16 %v575
        %v1839 = vunpack.c.l.b16 %v576
        %v1840 = vunpack.c.h.b16 %v576
        %v1841 = vunpack.c.l.b16 %v577
        %v1842 = vunpack.c.h.b16 %v577
        %v1843 = vunpack.c.l.b16 %v578
        %v1844 = vunpack.c.h.b16 %v578
        %v1845 = vunpack.c.l.b16 %v579
        %v1846 = vunpack.c.h.b16 %v579
        %v1847 = vunpack.c.l.b16 %v580
        %v1848 = vunpack.c.h.b16 %v580
        %v1849 = vunpack.c.l.b16 %v581
        %v1850 = vunpack.c.h.b16 %v581
        %v1851 = vunpack.c.l.b16 %v582
        %v1852 = vunpack.c.h.b16 %v582
        %v1853 = vunpack.c.l.b16 %v583
        %v1854 = vunpack.c.h.b16 %v583
        %v1855 = vunpack.c.l.b16 %v584
        %v1856 = vunpack.c.h.b16 %v584
        %v1857 = vunpack.c.l.b16 %v585
        %v1858 = vunpack.c.h.b16 %v585
        %v1859 = vunpack.c.l.b16 %v586
        %v1860 = vunpack.c.h.b16 %v586
        %v1861 = vunpack.c.l.b16 %v587
        %v1862 = vunpack.c.h.b16 %v587
        %v1863 = vunpack.c.l.b16 %v588
        %v1864 = vunpack.c.h.b16 %v588
        %v1865 = vunpack.c.l.b16 %v589
        %v1866 = vunpack.c.h.b16 %v589
        %v1867 = vunpack.c.l.b16 %v590
        %v1868 = vunpack.c.h.b16 %v590
        %v1869 = vunpack.c.l.b16 %v591
        %v1870 = vunpack.c.h.b16 %v591
        %v1871 = vunpack.c.l.b16 %v592
        %v1872 = vunpack.c.h.b16 %v592
        %v1873 = vunpack.c.l.b16 %v593
        %v1874 = vunpack.c.h.b16 %v593
        %v1875 = vunpack.c.l.b16 %v594
        %v1876 = vunpack.c.h.b16 %v594
        %v1877 = vunpack.c.l.b16 %v595
        %v1878 = vunpack.c.h.b16 %v595
        %v1879 = vunpack.c.l.b16 %v596
        %v1880 = vunpack.c.h.b16 %v596
        %v1881 = vunpack.c.l.b16 %v597
        %v1882 = vunpack.c.h.b16 %v597
        %v1883 = vunpack.c.l.b16 %v598
        %v1884 = vunpack.c.h.b16 %v598
        %v1885 = vunpack.c.l.b16 %v599
        %v1886 = vunpack.c.h.b16 %v599
        %v1887 = vunpack.c.l.b16 %v600
        %v1888 = vunpack.c.h.b16 %v600
        %v1889 = vunpack.c.l.b16 %v601
        %v1890 = vunpack.c.h.b16 %v601
        %v1891 = vunpack.c.l.b16 %v602
        %v1892 = vunpack.c.h.b16 %v602
        %v1893 = vunpack.c.l.b16 %v603
        %v1894 = vunpack.c.h.b16 %v603
        %v1895 = vunpack.c.l.b16 %v604
        %v1896 = vunpack.c.h.b16 %v604
        %v1897 = vunpack.c.l.b16 %v605
        %v1898 = vunpack.c.h.b16 %v605
        %v1899 = vunpack.c.l.b16 %v606
        %v1900 = vunpack.c.h.b16 %v606
        %v1901 = vunpack.c.l.b16 %v607
        %v1902 = vunpack.c.h.b16 %v607
        %v1903 = vunpack.c.l.b16 %v608
        %v1904 = vunpack.c.h.b16 %v608
        %v1905 = vunpack.c.l.b16 %v609
        %v1906 = vunpack.c.h.b16 %v609
        %v1907 = vunpack.c.l.b16 %v610
        %v1908 = vunpack.c.h.b16 %v610
        %v1909 = vunpack.c.l.b16 %v611
        %v1910 = vunpack.c.h.b16 %v611
        %v1911 = vunpack.c.l.b16 %v612
        %v1912 = vunpack.c.h.b16 %v612
        %v1913 = vunpack.c.l.b16 %v613
        %v1914 = vunpack.c.h.b16 %v613
        %v1915 = vunpack.c.l.b16 %v614
        %v1916 = vunpack.c.h.b16 %v614
        %v1917 = vunpack.c.l.b16 %v615
        %v1918 = vunpack.c.h.b16 %v615
        %v1919 = vunpack.c.l.b16 %v616
        %v1920 = vunpack.c.h.b16 %v616
        %v1921 = vunpack.c.l.b16 %v617
        %v1922 = vunpack.c.h.b16 %v617
        %v1923 = vunpack.c.l.b16 %v618
        %v1924 = vunpack.c.h.b16 %v618
        %v1925 = vunpack.c.l.b16 %v619
        %v1926 = vunpack.c.h.b16 %v619
        %v1927 = vunpack.c.l.b16 %v620
        %v1928 = vunpack.c.h.b16 %v620
        %v1929 = vunpack.c.l.b16 %v621
        %v1930 = vunpack.c.h.b16 %v621
        %v1931 = vunpack.c.l.b16 %v622
        %v1932 = vunpack.c.h.b16 %v622
        %v1933 = vunpack.c.l.b16 %v623
        %v1934 = vunpack.c.h.b16 %v623
        %v1935 = vunpack.c.l.b16 %v624
        %v1936 = vunpack.c.h.b16 %v624
        %v1937 = vunpack.c.l.b16 %v625
        %v1938 = vunpack.c.h.b16 %v625
        %v1939 = vunpack.c.l.b16 %v626
        %v1940 = vunpack.c.h.b16 %v626
        %v1941 = vunpack.c.l.b16 %v627
        %v1942 = vunpack.c.h.b16 %v627
        %v1943 = vunpack.c.l.b16 %v628
        %v1944 = vunpack.c.h.b16 %v628
        %v1945 = vunpack.c.l.b16 %v629
        %v1946 = vunpack.c.h.b16 %v629
        %v1947 = vunpack.c.l.b16 %v630
        %v1948 = vunpack.c.h.b16 %v630
        %v1949 = vunpack.c.l.b16 %v631
        %v1950 = vunpack.c.h.b16 %v631
        %v1951 = vunpack.c.l.b16 %v632
        %v1952 = vunpack.c.h.b16 %v632
        %v1953 = vunpack.c.l.b16 %v633
        %v1954 = vunpack.c.h.b16 %v633
        %v1955 = vunpack.c.l.b16 %v634
        %v1956 = vunpack.c.h.b16 %v634
        %v1957 = vunpack.c.l.b16 %v635
        %v1958 = vunpack.c.h.b16 %v635
        %v1959 = vunpack.c.l.b16 %v636
        %v1960 = vunpack.c.h.b16 %v636
        %v1961 = vunpack.c.l.b16 %v637
        %v1962 = vunpack.c.h.b16 %v637
        %v1963 = vunpack.c.l.b16 %v638
        %v1964 = vunpack.c.h.b16 %v638
        %v1965 = vunpack.c.l.b16 %v639
        %v1966 = vunpack.c.h.b16 %v639
        %v1967 = vunpack.c.l.b16 %v640
        %v1968 = vunpack.c.h.b16 %v640
        %v1969 = vunpack.c.l.b16 %v641
        %v1970 = vunpack.c.h.b16 %v641
        %v1971 = vunpack.c.l.b16 %v642
        %v1972 = vunpack.c.h.b16 %v642
        %v1973 = vunpack.c.l.b16 %v643
        %v1974 = vunpack.c.h.b16 %v643
        %v1975 = vunpack.c.l.b16 %v644
        %v1976 = vunpack.c.h.b16 %v644
        %v1977 = vunpack.c.l.b16 %v645
        %v1978 = vunpack.c.h.b16 %v645
        %v1979 = vunpack.c.l.b16 %v646
        %v1980 = vunpack.c.h.b16 %v646
        %v1981 = vunpack.c.l.b16 %v647
        %v1982 = vunpack.c.h.b16 %v647
        %v1983 = vunpack.c.l.b16 %v648
        %v1984 = vunpack.c.h.b16 %v648
        %v1985 = vunpack.c.l.b16 %v649
        %v1986 = vunpack.c.h.b16 %v649
        %v1987 = vunpack.c.l.b16 %v650
        %v1988 = vunpack.c.h.b16 %v650
        %v1989 = vunpack.c.l.b16 %v651
        %v1990 = vunpack.c.h.b16 %v651
        %v1991 = vunpack.c.l.b16 %v652
        %v1992 = vunpack.c.h.b16 %v652
        %v1993 = vunpack.c.l.b16 %v653
        %v1994 = vunpack.c.h.b16 %v653
        %v1995 = vunpack.c.l.b16 %v654
        %v1996 = vunpack.c.h.b16 %v654
        %v1997 = vunpack.c.l.b16 %v655
        %v1998 = vunpack.c.h.b16 %v655
        %v1999 = vunpack.c.l.b16 %v656
        %v2000 = vunpack.c.h.b16 %v656
        %v2001 = vunpack.c.l.b16 %v657
        %v2002 = vunpack.c.h.b16 %v657
        %v2003 = vunpack.c.l.b16 %v658
        %v2004 = vunpack.c.h.b16 %v658
        %v2005 = vunpack.c.l.b16 %v659
        %v2006 = vunpack.c.h.b16 %v659
        %v2007 = vunpack.c.l.b16 %v660
        %v2008 = vunpack.c.h.b16 %v660
        %v2009 = vunpack.c.l.b16 %v661
        %v2010 = vunpack.c.h.b16 %v661
        %v2011 = vunpack.c.l.b16 %v662
        %v2012 = vunpack.c.h.b16 %v662
        %v2013 = vunpack.c.l.b16 %v663
        %v2014 = vunpack.c.h.b16 %v663
        %v2015 = vunpack.c.l.b16 %v664
        %v2016 = vunpack.c.h.b16 %v664
        %v2017 = vunpack.c.l.b16 %v665
        %v2018 = vunpack.c.h.b16 %v665
        %v2019 = vunpack.c.l.b16 %v666
        %v2020 = vunpack.c.h.b16 %v666
        %v2021 = vunpack.c.l.b16 %v667
        %v2022 = vunpack.c.h.b16 %v667
        %v2023 = vunpack.c.l.b16 %v668
        %v2024 = vunpack.c.h.b16 %v668
        %v2025 = vunpack.c.l.b16 %v669
        %v2026 = vunpack.c.h.b16 %v669
        %v2027 = vunpack.c.l.b16 %v670
        %v2028 = vunpack.c.h.b16 %v670
        %v2029 = vunpack.c.l.b16 %v671
        %v2030 = vunpack.c.h.b16 %v671
        %v2031 = vunpack.c.l.b16 %v672
        %v2032 = vunpack.c.h.b16 %v672
        %v2033 = vunpack.c.l.b16 %v673
        %v2034 = vunpack.c.h.b16 %v673
        %v2035 = vunpack.c.l.b16 %v674
        %v2036 = vunpack.c.h.b16 %v674
        %v2037 = vunpack.c.l.b16 %v675
        %v2038 = vunpack.c.h.b16 %v675
        %v2039 = vunpack.c.l.b16 %v676
        %v2040 = vunpack.c.h.b16 %v676
        %v2041 = vunpack.c.l.b16 %v677
        %v2042 = vunpack.c.h.b16 %v677
        %v2043 = vunpack.c.l.b16 %v678
        %v2044 = vunpack.c.h.b16 %v678
        %v2045 = vunpack.c.l.b16 %v679
        %v2046 = vunpack.c.h.b16 %v679
        %v2047 = vunpack.c.l.b16 %v680
        %v2048 = vunpack.c.h.b16 %v680
        %v2049 = vunpack.c.l.b16 %v681
        %v2050 = vunpack.c.h.b16 %v681
        %v2051 = vunpack.c.l.b16 %v682
        %v2052 = vunpack.c.h.b16 %v682
        %v2053 = vunpack.c.l.b16 %v683
        %v2054 = vunpack.c.h.b16 %v683
        %v2055 = vunpack.c.l.b16 %v684
        %v2056 = vunpack.c.h.b16 %v684
        %v2057 = vunpack.c.l.b16 %v685
        %v2058 = vunpack.c.h.b16 %v685
        %v2059 = vunpack.c.l.b16 %v686
        %v2060 = vunpack.c.h.b16 %v686
        %v2061 = vunpack.c.l.b16 %v687
        %v2062 = vunpack.c.h.b16 %v687
        %v2063 = vunpack.c.l.b16 %v688
        %v2064 = vunpack.c.h.b16 %v688
        %v2065 = vunpack.c.l.b16 %v689
        %v2066 = vunpack.c.h.b16 %v689
        %v2067 = vunpack.c.l.b16 %v690
        %v2068 = vunpack.c.h.b16 %v690
        %v2069 = vunpack.c.l.b16 %v691
        %v2070 = vunpack.c.h.b16 %v691
        %v2071 = vunpack.c.l.b16 %v692
        %v2072 = vunpack.c.h.b16 %v692
        %v2073 = vunpack.c.l.b16 %v693
        %v2074 = vunpack.c.h.b16 %v693
        %v2075 = vunpack.c.l.b16 %v694
        %v2076 = vunpack.c.h.b16 %v694
        %v2077 = vunpack.c.l.b16 %v695
        %v2078 = vunpack.c.h.b16 %v695
        %v2079 = vunpack.c.l.b16 %v696
        %v2080 = vunpack.c.h.b16 %v696
        %v2081 = vunpack.c.l.b16 %v697
        %v2082 = vunpack.c.h.b16 %v697
        %v2083 = vunpack.c.l.b16 %v698
        %v2084 = vunpack.c.h.b16 %v698
        %v2085 = vunpack.c.l.b16 %v699
        %v2086 = vunpack.c.h.b16 %v699
        %v2087 = vunpack.c.l.b16 %v700
        %v2088 = vunpack.c.h.b16 %v700
        %v2089 = vunpack.c.l.b16 %v701
        %v2090 = vunpack.c.h.b16 %v701
        %v2091 = vunpack.c.l.b16 %v702
        %v2092 = vunpack.c.h.b16 %v702
        %v2093 = vunpack.c.l.b16 %v703
        %v2094 = vunpack.c.h.b16 %v703
        %v2095 = vunpack.c.l.b16 %v704
        %v2096 = vunpack.c.h.b16 %v704
        %v2097 = vunpack.c.l.b16 %v705
        %v2098 = vunpack.c.h.b16 %v705
        %v2099 = vunpack.c.l.b16 %v706
        %v2100 = vunpack.c.h.b16 %v706
        %v2101 = vunpack.c.l.b16 %v707
        %v2102 = vunpack.c.h.b16 %v707
        %v2103 = vunpack.c.l.b16 %v708
        %v2104 = vunpack.c.h.b16 %v708
        %v2105 = vunpack.c.l.b16 %v709
        %v2106 = vunpack.c.h.b16 %v709
        %v2107 = vunpack.c.l.b16 %v710
        %v2108 = vunpack.c.h.b16 %v710
        %v2109 = vunpack.c.l.b16 %v711
        %v2110 = vunpack.c.h.b16 %v711
        %v2111 = vunpack.c.l.b16 %v712
        %v2112 = vunpack.c.h.b16 %v712
        %v2113 = vunpack.c.l.b16 %v713
        %v2114 = vunpack.c.h.b16 %v713
        %v2115 = vunpack.c.l.b16 %v714
        %v2116 = vunpack.c.h.b16 %v714
        %v2117 = vunpack.c.l.b16 %v715
        %v2118 = vunpack.c.h.b16 %v715
        %v2119 = vunpack.c.l.b16 %v716
        %v2120 = vunpack.c.h.b16 %v716
        %v2121 = vunpack.c.l.b16 %v717
        %v2122 = vunpack.c.h.b16 %v717
        %v2123 = vunpack.c.l.b16 %v718
        %v2124 = vunpack.c.h.b16 %v718
        %v2125 = vunpack.c.l.b16 %v719
        %v2126 = vunpack.c.h.b16 %v719
        %v2127 = vunpack.c.l.b16 %v720
        %v2128 = vunpack.c.h.b16 %v720
        %v2129 = vunpack.c.l.b16 %v721
        %v2130 = vunpack.c.h.b16 %v721
        %v2131 = vunpack.c.l.b16 %v722
        %v2132 = vunpack.c.h.b16 %v722
        %v2133 = vunpack.c.l.b16 %v723
        %v2134 = vunpack.c.h.b16 %v723
        %v2135 = vunpack.c.l.b16 %v724
        %v2136 = vunpack.c.h.b16 %v724
        %v2137 = vunpack.c.l.b16 %v725
        %v2138 = vunpack.c.h.b16 %v725
        %v2139 = vunpack.c.l.b16 %v726
        %v2140 = vunpack.c.h.b16 %v726
        %v2141 = vunpack.c.l.b16 %v727
        %v2142 = vunpack.c.h.b16 %v727
        %v2143 = vunpack.c.l.b16 %v728
        %v2144 = vunpack.c.h.b16 %v728
        %v2145 = vunpack.c.l.b16 %v729
        %v2146 = vunpack.c.h.b16 %v729
        %v2147 = vunpack.c.l.b16 %v730
        %v2148 = vunpack.c.h.b16 %v730
        %v2149 = vunpack.c.l.b16 %v731
        %v2150 = vunpack.c.h.b16 %v731
        %v2151 = vunpack.c.l.b16 %v732
        %v2152 = vunpack.c.h.b16 %v732
        %v2153 = vunpack.c.l.b16 %v733
        %v2154 = vunpack.c.h.b16 %v733
        %v2155 = vunpack.c.l.b16 %v734
        %v2156 = vunpack.c.h.b16 %v734
        %v2157 = vunpack.c.l.b16 %v735
        %v2158 = vunpack.c.h.b16 %v735
        %v2159 = vunpack.c.l.b16 %v736
        %v2160 = vunpack.c.h.b16 %v736
        %v2161 = vunpack.c.l.b16 %v737
        %v2162 = vunpack.c.h.b16 %v737
        %v2163 = vunpack.c.l.b16 %v738
        %v2164 = vunpack.c.h.b16 %v738
        %v2165 = vunpack.c.l.b16 %v739
        %v2166 = vunpack.c.h.b16 %v739
        %v2167 = vunpack.c.l.b16 %v740
        %v2168 = vunpack.c.h.b16 %v740
        %v2169 = vunpack.c.l.b16 %v741
        %v2170 = vunpack.c.h.b16 %v741
        %v2171 = vunpack.c.l.b16 %v742
        %v2172 = vunpack.c.h.b16 %v742
        %v2173 = vunpack.c.l.b16 %v743
        %v2174 = vunpack.c.h.b16 %v743
        %v2175 = vunpack.c.l.b16 %v744
        %v2176 = vunpack.c.h.b16 %v744
        %v2177 = vunpack.c.l.b16 %v745
        %v2178 = vunpack.c.h.b16 %v745
        %v2179 = vunpack.c.l.b16 %v746
        %v2180 = vunpack.c.h.b16 %v746
        %v2181 = vunpack.c.l.b16 %v747
        %v2182 = vunpack.c.h.b16 %v747
        %v2183 = vunpack.c.l.b16 %v748
        %v2184 = vunpack.c.h.b16 %v748
        %v2185 = vunpack.c.l.b16 %v749
        %v2186 = vunpack.c.h.b16 %v749
        %v2187 = vunpack.c.l.b16 %v750
        %v2188 = vunpack.c.h.b16 %v750
        %v2189 = vunpack.c.l.b16 %v751
        %v2190 = vunpack.c.h.b16 %v751
        %v2191 = vunpack.c.l.b16 %v752
        %v2192 = vunpack.c.h.b16 %v752
        %v2193 = vunpack.c.l.b16 %v753
        %v2194 = vunpack.c.h.b16 %v753
        %v2195 = vunpack.c.l.b16 %v754
        %v2196 = vunpack.c.h.b16 %v754
        %v2197 = vunpack.c.l.b16 %v755
        %v2198 = vunpack.c.h.b16 %v755
        %v2199 = vunpack.c.l.b16 %v756
        %v2200 = vunpack.c.h.b16 %v756
        %v2201 = vunpack.c.l.b16 %v757
        %v2202 = vunpack.c.h.b16 %v757
        %v2203 = vunpack.c.l.b16 %v758
        %v2204 = vunpack.c.h.b16 %v758
        %v2205 = vunpack.c.l.b16 %v759
        %v2206 = vunpack.c.h.b16 %v759
        %v2207 = vunpack.c.l.b16 %v760
        %v2208 = vunpack.c.h.b16 %v760
        %v2209 = vunpack.c.l.b16 %v761
        %v2210 = vunpack.c.h.b16 %v761
        %v2211 = vunpack.c.l.b16 %v762
        %v2212 = vunpack.c.h.b16 %v762
        %v2213 = vunpack.c.l.b16 %v763
        %v2214 = vunpack.c.h.b16 %v763
        %v2215 = vunpack.c.l.b16 %v764
        %v2216 = vunpack.c.h.b16 %v764
        %v2217 = vunpack.c.l.b16 %v765
        %v2218 = vunpack.c.h.b16 %v765
        %v2219 = vunpack.c.l.b16 %v766
        %v2220 = vunpack.c.h.b16 %v766
        %v2221 = vunpack.c.l.b16 %v767
        %v2222 = vunpack.c.h.b16 %v767
        %v2223 = vunpack.c.l.b16 %v768
        %v2224 = vunpack.c.h.b16 %v768
        %v2225 = vunpack.c.l.b16 %v769
        %v2226 = vunpack.c.h.b16 %v769
        %v2227 = vunpack.c.l.b16 %v770
        %v2228 = vunpack.c.h.b16 %v770
        %v2229 = vunpack.c.l.b16 %v771
        %v2230 = vunpack.c.h.b16 %v771
        %v2231 = vunpack.c.l.b16 %v772
        %v2232 = vunpack.c.h.b16 %v772
        %v2233 = vunpack.c.l.b16 %v773
        %v2234 = vunpack.c.h.b16 %v773
        %v2235 = vunpack.c.l.b16 %v774
        %v2236 = vunpack.c.h.b16 %v774
        %v2237 = vunpack.c.l.b16 %v775
        %v2238 = vunpack.c.h.b16 %v775
        %v2239 = vunpack.c.l.b16 %v776
        %v2240 = vunpack.c.h.b16 %v776
        %v2241 = vunpack.c.l.b16 %v777
        %v2242 = vunpack.c.h.b16 %v777
        %v2243 = vunpack.c.l.b16 %v778
        %v2244 = vunpack.c.h.b16 %v778
        %v2245 = vunpack.c.l.b16 %v779
        %v2246 = vunpack.c.h.b16 %v779
        %v2247 = vunpack.c.l.b16 %v780
        %v2248 = vunpack.c.h.b16 %v780
        %v2249 = vunpack.c.l.b16 %v781
        %v2250 = vunpack.c.h.b16 %v781
        %v2251 = vunpack.c.l.b16 %v782
        %v2252 = vunpack.c.h.b16 %v782
        %v2253 = vunpack.c.l.b16 %v783
        %v2254 = vunpack.c.h.b16 %v783
        %v2255 = vunpack.c.l.b16 %v784
        %v2256 = vunpack.c.h.b16 %v784
        %v2257 = vunpack.c.l.b16 %v785
        %v2258 = vunpack.c.h.b16 %v785
        %v2259 = vunpack.c.l.b16 %v786
        %v2260 = vunpack.c.h.b16 %v786
        %v2261 = vunpack.c.l.b16 %v787
        %v2262 = vunpack.c.h.b16 %v787
        %v2263 = vunpack.c.l.b16 %v788
        %v2264 = vunpack.c.h.b16 %v788
        %v2265 = vunpack.c.l.b16 %v789
        %v2266 = vunpack.c.h.b16 %v789
        %v2267 = vunpack.c.l.b16 %v790
        %v2268 = vunpack.c.h.b16 %v790
        %v2269 = vunpack.c.l.b16 %v791
        %v2270 = vunpack.c.h.b16 %v791
        %v2271 = vunpack.c.l.b16 %v792
        %v2272 = vunpack.c.h.b16 %v792
        %v2273 = vunpack.c.l.b16 %v793
        %v2274 = vunpack.c.h.b16 %v793
        %v2275 = vunpack.c.l.b16 %v794
        %v2276 = vunpack.c.h.b16 %v794
        %v2277 = vunpack.c.l.b16 %v795
        %v2278 = vunpack.c.h.b16 %v795
        %v2279 = vunpack.c.l.b16 %v796
        %v2280 = vunpack.c.h.b16 %v796
        %v2281 = vunpack.c.l.b16 %v797
        %v2282 = vunpack.c.h.b16 %v797
        %v2283 = vunpack.c.l.b16 %v798
        %v2284 = vunpack.c.h.b16 %v798
        %v2285 = vunpack.c.l.b16 %v799
        %v2286 = vunpack.c.h.b16 %v799
        %v2287 = vunpack.c.l.b16 %v800
        %v2288 = vunpack.c.h.b16 %v800
        %v2289 = vunpack.c.l.b16 %v801
        %v2290 = vunpack.c.h.b16 %v801
        %v2291 = vunpack.c.l.b16 %v802
        %v2292 = vunpack.c.h.b16 %v802
        %v2293 = vunpack.c.l.b16 %v803
        %v2294 = vunpack.c.h.b16 %v803
        %v2295 = vunpack.c.l.b16 %v804
        %v2296 = vunpack.c.h.b16 %v804
        %v2297 = vunpack.c.l.b16 %v805
        %v2298 = vunpack.c.h.b16 %v805
        %v2299 = vunpack.c.l.b16 %v806
        %v2300 = vunpack.c.h.b16 %v806
        %v2301 = vunpack.c.l.b16 %v807
        %v2302 = vunpack.c.h.b16 %v807
        %v2303 = vunpack.c.l.b16 %v808
        %v2304 = vunpack.c.h.b16 %v808
        %v2305 = vunpack.c.l.b16 %v809
        %v2306 = vunpack.c.h.b16 %v809
        %v2307 = vunpack.c.l.b16 %v810
        %v2308 = vunpack.c.h.b16 %v810
        %v2309 = vunpack.c.l.b16 %v811
        %v2310 = vunpack.c.h.b16 %v811
        %v2311 = vunpack.c.l.b16 %v812
        %v2312 = vunpack.c.h.b16 %v812
        %v2313 = vunpack.c.l.b16 %v813
        %v2314 = vunpack.c.h.b16 %v813
        %v2315 = vunpack.c.l.b16 %v814
        %v2316 = vunpack.c.h.b16 %v814
        %v2317 = vunpack.c.l.b16 %v815
        %v2318 = vunpack.c.h.b16 %v815
        %v2319 = vunpack.c.l.b16 %v816
        %v2320 = vunpack.c.h.b16 %v816
        %v2321 = vunpack.c.l.b16 %v817
        %v2322 = vunpack.c.h.b16 %v817
        %v2323 = vunpack.c.l.b16 %v818
        %v2324 = vunpack.c.h.b16 %v818
        %v2325 = vunpack.c.l.b16 %v819
        %v2326 = vunpack.c.h.b16 %v819
        %v2327 = vunpack.c.l.b16 %v820
        %v2328 = vunpack.c.h.b16 %v820
        %v2329 = vunpack.c.l.b16 %v821
        %v2330 = vunpack.c.h.b16 %v821
        %v2331 = vunpack.c.l.b16 %v822
        %v2332 = vunpack.c.h.b16 %v822
        %v2333 = vunpack.c.l.b16 %v823
        %v2334 = vunpack.c.h.b16 %v823
        %v2335 = vunpack.c.l.b16 %v824
        %v2336 = vunpack.c.h.b16 %v824
        %v2337 = vunpack.c.l.b16 %v825
        %v2338 = vunpack.c.h.b16 %v825
        %v2339 = vunpack.c.l.b16 %v826
        %v2340 = vunpack.c.h.b16 %v826
        %v2341 = vunpack.c.l.b16 %v827
        %v2342 = vunpack.c.h.b16 %v827
        %v2343 = vunpack.c.l.b16 %v828
        %v2344 = vunpack.c.h.b16 %v828
        %v2345 = vunpack.c.l.b16 %v829
        %v2346 = vunpack.c.h.b16 %v829
        %v2347 = vunpack.c.l.b16 %v830
        %v2348 = vunpack.c.h.b16 %v830
        %v2349 = vunpack.c.l.b16 %v831
        %v2350 = vunpack.c.h.b16 %v831
        %v2351 = vunpack.c.l.b16 %v832
        %v2352 = vunpack.c.h.b16 %v832
        %v2353 = vunpack.c.l.b16 %v833
        %v2354 = vunpack.c.h.b16 %v833
        %v2355 = vunpack.c.l.b16 %v834
        %v2356 = vunpack.c.h.b16 %v834
        %v2357 = vunpack.c.l.b16 %v835
        %v2358 = vunpack.c.h.b16 %v835
        %v2359 = vunpack.c.l.b16 %v836
        %v2360 = vunpack.c.h.b16 %v836
        %v2361 = vunpack.c.l.b16 %v837
        %v2362 = vunpack.c.h.b16 %v837
        %v2363 = vunpack.c.l.b16 %v838
        %v2364 = vunpack.c.h.b16 %v838
        %v2365 = vunpack.c.l.b16 %v839
        %v2366 = vunpack.c.h.b16 %v839
        %v2367 = vunpack.c.l.b16 %v840
        %v2368 = vunpack.c.h.b16 %v840
        %v2369 = vunpack.c.l.b16 %v841
        %v2370 = vunpack.c.h.b16 %v841
        %v2371 = vunpack.c.l.b16 %v842
        %v2372 = vunpack.c.h.b16 %v842
        %v2373 = vunpack.c.l.b16 %v843
        %v2374 = vunpack.c.h.b16 %v843
        %v2375 = vunpack.c.l.b16 %v844
        %v2376 = vunpack.c.h.b16 %v844
        %v2377 = vunpack.c.l.b16 %v845
        %v2378 = vunpack.c.h.b16 %v845
        %v2379 = vunpack.c.l.b16 %v846
        %v2380 = vunpack.c.h.b16 %v846
        %v2381 = vunpack.c.l.b16 %v847
        %v2382 = vunpack.c.h.b16 %v847
        %v2383 = vunpack.c.l.b16 %v848
        %v2384 = vunpack.c.h.b16 %v848
        %v2385 = vunpack.c.l.b16 %v849
        %v2386 = vunpack.c.h.b16 %v849
        %v2387 = vunpack.c.l.b16 %v850
        %v2388 = vunpack.c.h.b16 %v850
        %v2389 = vunpack.c.l.b16 %v851
        %v2390 = vunpack.c.h.b16 %v851
        %v2391 = vunpack.c.l.b16 %v852
        %v2392 = vunpack.c.h.b16 %v852
        %v2393 = vunpack.c.l.b16 %v853
        %v2394 = vunpack.c.h.b16 %v853
        %v2395 = vunpack.c.l.b16 %v854
        %v2396 = vunpack.c.h.b16 %v854
        %v2397 = vunpack.c.l.b16 %v855
        %v2398 = vunpack.c.h.b16 %v855
        %v2399 = vunpack.c.l.b16 %v856
        %v2400 = vunpack.c.h.b16 %v856
        %v2401 = vunpack.c.l.b16 %v857
        %v2402 = vunpack.c.h.b16 %v857
        %v2403 = vunpack.c.l.b16 %v858
        %v2404 = vunpack.c.h.b16 %v858
        %v2405 = vunpack.c.l.b16 %v859
        %v2406 = vunpack.c.h.b16 %v859
        %v2407 = vunpack.c.l.b16 %v860
        %v2408 = vunpack.c.h.b16 %v860
        %v2409 = vunpack.c.l.b16 %v861
        %v2410 = vunpack.c.h.b16 %v861
        %v2411 = vunpack.c.l.b16 %v862
        %v2412 = vunpack.c.h.b16 %v862
        %v2413 = vpack.c.b16 %v1405, %v1389
        %v2414 = vpack.c.b16 %v1406, %v1390
        %v2415 = vpack.c.b16 %v1407, %v1391
        %v2416 = vpack.c.b16 %v1408, %v1392
        %v2417 = vpack.c.b16 %v1409, %v1393
        %v2418 = vpack.c.b16 %v1410, %v1394
        %v2419 = vpack.c.b16 %v1411, %v1395
        %v2420 = vpack.c.b16 %v1412, %v1396
        %v2421 = vpack.c.b16 %v1413, %v1397
        %v2422 = vpack.c.b16 %v1414, %v1398
        %v2423 = vpack.c.b16 %v1415, %v1399
        %v2424 = vpack.c.b16 %v1416, %v1400
        %v2425 = vpack.c.b16 %v1417, %v1401
        %v2426 = vpack.c.b16 %v1418, %v1402
        %v2427 = vpack.c.b16 %v1419, %v1403
        %v2428 = vpack.c.b16 %v1420, %v1404
        %v2429 = vpack.c.b16 %v1437, %v1421
        %v2430 = vpack.c.b16 %v1438, %v1422
        %v2431 = vpack.c.b16 %v1439, %v1423
        %v2432 = vpack.c.b16 %v1440, %v1424
        %v2433 = vpack.c.b16 %v1441, %v1425
        %v2434 = vpack.c.b16 %v1442, %v1426
        %v2435 = vpack.c.b16 %v1443, %v1427
        %v2436 = vpack.c.b16 %v1444, %v1428
        %v2437 = vpack.c.b16 %v1445, %v1429
        %v2438 = vpack.c.b16 %v1446, %v1430
        %v2439 = vpack.c.b16 %v1447, %v1431
        %v2440 = vpack.c.b16 %v1448, %v1432
        %v2441 = vpack.c.b16 %v1449, %v1433
        %v2442 = vpack.c.b16 %v1450, %v1434
        %v2443 = vpack.c.b16 %v1451, %v1435
        %v2444 = vpack.c.b16 %v1452, %v1436
        %v2445 = vpack.c.b16 %v1469, %v1453
        %v2446 = vpack.c.b16 %v1470, %v1454
        %v2447 = vpack.c.b16 %v1471, %v1455
        %v2448 = vpack.c.b16 %v1472, %v1456
        %v2449 = vpack.c.b16 %v1473, %v1457
        %v2450 = vpack.c.b16 %v1474, %v1458
        %v2451 = vpack.c.b16 %v1475, %v1459
        %v2452 = vpack.c.b16 %v1476, %v1460
        %v2453 = vpack.c.b16 %v1477, %v1461
        %v2454 = vpack.c.b16 %v1478, %v1462
        %v2455 = vpack.c.b16 %v1479, %v1463
        %v2456 = vpack.c.b16 %v1480, %v1464
        %v2457 = vpack.c.b16 %v1481, %v1465
        %v2458 = vpack.c.b16 %v1482, %v1466
        %v2459 = vpack.c.b16 %v1483, %v1467
        %v2460 = vpack.c.b16 %v1484, %v1468
        %v2461 = vpack.c.b16 %v1501, %v1485
        %v2462 = vpack.c.b16 %v1502, %v1486
        %v2463 = vpack.c.b16 %v1503, %v1487
        %v2464 = vpack.c.b16 %v1504, %v1488
        %v2465 = vpack.c.b16 %v1505, %v1489
        %v2466 = vpack.c.b16 %v1506, %v1490
        %v2467 = vpack.c.b16 %v1507, %v1491
        %v2468 = vpack.c.b16 %v1508, %v1492
        %v2469 = vpack.c.b16 %v1509, %v1493
        %v2470 = vpack.c.b16 %v1510, %v1494
        %v2471 = vpack.c.b16 %v1511, %v1495
        %v2472 = vpack.c.b16 %v1512, %v1496
        %v2473 = vpack.c.b16 %v1513, %v1497
        %v2474 = vpack.c.b16 %v1514, %v1498
        %v2475 = vpack.c.b16 %v1515, %v1499
        %v2476 = vpack.c.b16 %v1516, %v1500
        %v2477 = vpack.c.b16 %v1533, %v1517
        %v2478 = vpack.c.b16 %v1534, %v1518
        %v2479 = vpack.c.b16 %v1535, %v1519
        %v2480 = vpack.c.b16 %v1536, %v1520
        %v2481 = vpack.c.b16 %v1537, %v1521
        %v2482 = vpack.c.b16 %v1538, %v1522
        %v2483 = vpack.c.b16 %v1539, %v1523
        %v2484 = vpack.c.b16 %v1540, %v1524
        %v2485 = vpack.c.b16 %v1541, %v1525
        %v2486 = vpack.c.b16 %v1542, %v1526
        %v2487 = vpack.c.b16 %v1543, %v1527
        %v2488 = vpack.c.b16 %v1544, %v1528
        %v2489 = vpack.c.b16 %v1545, %v1529
        %v2490 = vpack.c.b16 %v1546, %v1530
        %v2491 = vpack.c.b16 %v1547, %v1531
        %v2492 = vpack.c.b16 %v1548, %v1532
        %v2493 = vpack.c.b16 %v1565, %v1549
        %v2494 = vpack.c.b16 %v1566, %v1550
        %v2495 = vpack.c.b16 %v1567, %v1551
        %v2496 = vpack.c.b16 %v1568, %v1552
        %v2497 = vpack.c.b16 %v1569, %v1553
        %v2498 = vpack.c.b16 %v1570, %v1554
        %v2499 = vpack.c.b16 %v1571, %v1555
        %v2500 = vpack.c.b16 %v1572, %v1556
        %v2501 = vpack.c.b16 %v1573, %v1557
        %v2502 = vpack.c.b16 %v1574, %v1558
        %v2503 = vpack.c.b16 %v1575, %v1559
        %v2504 = vpack.c.b16 %v1576, %v1560
        %v2505 = vpack.c.b16 %v1577, %v1561
        %v2506 = vpack.c.b16 %v1578, %v1562
        %v2507 = vpack.c.b16 %v1579, %v1563
        %v2508 = vpack.c.b16 %v1580, %v1564
        %v2509 = vpack.c.b16 %v1597, %v1581
        %v2510 = vpack.c.b16 %v1598, %v1582
        %v2511 = vpack.c.b16 %v1599, %v1583
        %v2512 = vpack.c.b16 %v1600, %v1584
        %v2513 = vpack.c.b16 %v1601, %v1585
        %v2514 = vpack.c.b16 %v1602, %v1586
        %v2515 = vpack.c.b16 %v1603, %v1587
        %v2516 = vpack.c.b16 %v1604, %v1588
        %v2517 = vpack.c.b16 %v1605, %v1589
        %v2518 = vpack.c.b16 %v1606, %v1590
        %v2519 = vpack.c.b16 %v1607, %v1591
        %v2520 = vpack.c.b16 %v1608, %v1592
        %v2521 = vpack.c.b16 %v1609, %v1593
        %v2522 = vpack.c.b16 %v1610, %v1594
        %v2523 = vpack.c.b16 %v1611, %v1595
        %v2524 = vpack.c.b16 %v1612, %v1596
        %v2525 = vpack.c.b16 %v1629, %v1613
        %v2526 = vpack.c.b16 %v1630, %v1614
        %v2527 = vpack.c.b16 %v1631, %v1615
        %v2528 = vpack.c.b16 %v1632, %v1616
        %v2529 = vpack.c.b16 %v1633, %v1617
        %v2530 = vpack.c.b16 %v1634, %v1618
        %v2531 = vpack.c.b16 %v1635, %v1619
        %v2532 = vpack.c.b16 %v1636, %v1620
        %v2533 = vpack.c.b16 %v1637, %v1621
        %v2534 = vpack.c.b16 %v1638, %v1622
        %v2535 = vpack.c.b16 %v1639, %v1623
        %v2536 = vpack.c.b16 %v1640, %v1624
        %v2537 = vpack.c.b16 %v1641, %v1625
        %v2538 = vpack.c.b16 %v1642, %v1626
        %v2539 = vpack.c.b16 %v1643, %v1627
        %v2540 = vpack.c.b16 %v1644, %v1628
        %v2541 = vpack.c.b16 %v1661, %v1645
        %v2542 = vpack.c.b16 %v1662, %v1646
        %v2543 = vpack.c.b16 %v1663, %v1647
        %v2544 = vpack.c.b16 %v1664, %v1648
        %v2545 = vpack.c.b16 %v1665, %v1649
        %v2546 = vpack.c.b16 %v1666, %v1650
        %v2547 = vpack.c.b16 %v1667, %v1651
        %v2548 = vpack.c.b16 %v1668, %v1652
        %v2549 = vpack.c.b16 %v1669, %v1653
        %v2550 = vpack.c.b16 %v1670, %v1654
        %v2551 = vpack.c.b16 %v1671, %v1655
        %v2552 = vpack.c.b16 %v1672, %v1656
        %v2553 = vpack.c.b16 %v1673, %v1657
        %v2554 = vpack.c.b16 %v1674, %v1658
        %v2555 = vpack.c.b16 %v1675, %v1659
        %v2556 = vpack.c.b16 %v1676, %v1660
        %v2557 = vpack.c.b16 %v1693, %v1677
        %v2558 = vpack.c.b16 %v1694, %v1678
        %v2559 = vpack.c.b16 %v1695, %v1679
        %v2560 = vpack.c.b16 %v1696, %v1680
        %v2561 = vpack.c.b16 %v1697, %v1681
        %v2562 = vpack.c.b16 %v1698, %v1682
        %v2563 = vpack.c.b16 %v1699, %v1683
        %v2564 = vpack.c.b16 %v1700, %v1684
        %v2565 = vpack.c.b16 %v1701, %v1685
        %v2566 = vpack.c.b16 %v1702, %v1686
        %v2567 = vpack.c.b16 %v1703, %v1687
        %v2568 = vpack.c.b16 %v1704, %v1688
        %v2569 = vpack.c.b16 %v1705, %v1689
        %v2570 = vpack.c.b16 %v1706, %v1690
        %v2571 = vpack.c.b16 %v1707, %v1691
        %v2572 = vpack.c.b16 %v1708, %v1692
        %v2573 = vpack.c.b16 %v1725, %v1709
        %v2574 = vpack.c.b16 %v1726, %v1710
        %v2575 = vpack.c.b16 %v1727, %v1711
        %v2576 = vpack.c.b16 %v1728, %v1712
        %v2577 = vpack.c.b16 %v1729, %v1713
        %v2578 = vpack.c.b16 %v1730, %v1714
        %v2579 = vpack.c.b16 %v1731, %v1715
        %v2580 = vpack.c.b16 %v1732, %v1716
        %v2581 = vpack.c.b16 %v1733, %v1717
        %v2582 = vpack.c.b16 %v1734, %v1718
        %v2583 = vpack.c.b16 %v1735, %v1719
        %v2584 = vpack.c.b16 %v1736, %v1720
        %v2585 = vpack.c.b16 %v1737, %v1721
        %v2586 = vpack.c.b16 %v1738, %v1722
        %v2587 = vpack.c.b16 %v1739, %v1723
        %v2588 = vpack.c.b16 %v1740, %v1724
        %v2589 = vpack.c.b16 %v1757, %v1741
        %v2590 = vpack.c.b16 %v1758, %v1742
        %v2591 = vpack.c.b16 %v1759, %v1743
        %v2592 = vpack.c.b16 %v1760, %v1744
        %v2593 = vpack.c.b16 %v1761, %v1745
        %v2594 = vpack.c.b16 %v1762, %v1746
        %v2595 = vpack.c.b16 %v1763, %v1747
        %v2596 = vpack.c.b16 %v1764, %v1748
        %v2597 = vpack.c.b16 %v1765, %v1749
        %v2598 = vpack.c.b16 %v1766, %v1750
        %v2599 = vpack.c.b16 %v1767, %v1751
        %v2600 = vpack.c.b16 %v1768, %v1752
        %v2601 = vpack.c.b16 %v1769, %v1753
        %v2602 = vpack.c.b16 %v1770, %v1754
        %v2603 = vpack.c.b16 %v1771, %v1755
        %v2604 = vpack.c.b16 %v1772, %v1756
        %v2605 = vpack.c.b16 %v1789, %v1773
        %v2606 = vpack.c.b16 %v1790, %v1774
        %v2607 = vpack.c.b16 %v1791, %v1775
        %v2608 = vpack.c.b16 %v1792, %v1776
        %v2609 = vpack.c.b16 %v1793, %v1777
        %v2610 = vpack.c.b16 %v1794, %v1778
        %v2611 = vpack.c.b16 %v1795, %v1779
        %v2612 = vpack.c.b16 %v1796, %v1780
        %v2613 = vpack.c.b16 %v1797, %v1781
        %v2614 = vpack.c.b16 %v1798, %v1782
        %v2615 = vpack.c.b16 %v1799, %v1783
        %v2616 = vpack.c.b16 %v1800, %v1784
        %v2617 = vpack.c.b16 %v1801, %v1785
        %v2618 = vpack.c.b16 %v1802, %v1786
        %v2619 = vpack.c.b16 %v1803, %v1787
        %v2620 = vpack.c.b16 %v1804, %v1788
        %v2621 = vpack.c.b16 %v1821, %v1805
        %v2622 = vpack.c.b16 %v1822, %v1806
        %v2623 = vpack.c.b16 %v1823, %v1807
        %v2624 = vpack.c.b16 %v1824, %v1808
        %v2625 = vpack.c.b16 %v1825, %v1809
        %v2626 = vpack.c.b16 %v1826, %v1810
        %v2627 = vpack.c.b16 %v1827, %v1811
        %v2628 = vpack.c.b16 %v1828, %v1812
        %v2629 = vpack.c.b16 %v1829, %v1813
        %v2630 = vpack.c.b16 %v1830, %v1814
        %v2631 = vpack.c.b16 %v1831, %v1815
        %v2632 = vpack.c.b16 %v1832, %v1816
        %v2633 = vpack.c.b16 %v1833, %v1817
        %v2634 = vpack.c.b16 %v1834, %v1818
        %v2635 = vpack.c.b16 %v1835, %v1819
        %v2636 = vpack.c.b16 %v1836, %v1820
        %v2637 = vpack.c.b16 %v1853, %v1837
        %v2638 = vpack.c.b16 %v1854, %v1838
        %v2639 = vpack.c.b16 %v1855, %v1839
        %v2640 = vpack.c.b16 %v1856, %v1840
        %v2641 = vpack.c.b16 %v1857, %v1841
        %v2642 = vpack.c.b16 %v1858, %v1842
        %v2643 = vpack.c.b16 %v1859, %v1843
        %v2644 = vpack.c.b16 %v1860, %v1844
        %v2645 = vpack.c.b16 %v1861, %v1845
        %v2646 = vpack.c.b16 %v1862, %v1846
        %v2647 = vpack.c.b16 %v1863, %v1847
        %v2648 = vpack.c.b16 %v1864, %v1848
        %v2649 = vpack.c.b16 %v1865, %v1849
        %v2650 = vpack.c.b16 %v1866, %v1850
        %v2651 = vpack.c.b16 %v1867, %v1851
        %v2652 = vpack.c.b16 %v1868, %v1852
        %v2653 = vpack.c.b16 %v1885, %v1869
        %v2654 = vpack.c.b16 %v1886, %v1870
        %v2655 = vpack.c.b16 %v1887, %v1871
        %v2656 = vpack.c.b16 %v1888, %v1872
        %v2657 = vpack.c.b16 %v1889, %v1873
        %v2658 = vpack.c.b16 %v1890, %v1874
        %v2659 = vpack.c.b16 %v1891, %v1875
        %v2660 = vpack.c.b16 %v1892, %v1876
        %v2661 = vpack.c.b16 %v1893, %v1877
        %v2662 = vpack.c.b16 %v1894, %v1878
        %v2663 = vpack.c.b16 %v1895, %v1879
        %v2664 = vpack.c.b16 %v1896, %v1880
        %v2665 = vpack.c.b16 %v1897, %v1881
        %v2666 = vpack.c.b16 %v1898, %v1882
        %v2667 = vpack.c.b16 %v1899, %v1883
        %v2668 = vpack.c.b16 %v1900, %v1884
        %v2669 = vpack.c.b16 %v1917, %v1901
        %v2670 = vpack.c.b16 %v1918, %v1902
        %v2671 = vpack.c.b16 %v1919, %v1903
        %v2672 = vpack.c.b16 %v1920, %v1904
        %v2673 = vpack.c.b16 %v1921, %v1905
        %v2674 = vpack.c.b16 %v1922, %v1906
        %v2675 = vpack.c.b16 %v1923, %v1907
        %v2676 = vpack.c.b16 %v1924, %v1908
        %v2677 = vpack.c.b16 %v1925, %v1909
        %v2678 = vpack.c.b16 %v1926, %v1910
        %v2679 = vpack.c.b16 %v1927, %v1911
        %v2680 = vpack.c.b16 %v1928, %v1912
        %v2681 = vpack.c.b16 %v1929, %v1913
        %v2682 = vpack.c.b16 %v1930, %v1914
        %v2683 = vpack.c.b16 %v1931, %v1915
        %v2684 = vpack.c.b16 %v1932, %v1916
        %v2685 = vpack.c.b16 %v1949, %v1933
        %v2686 = vpack.c.b16 %v1950, %v1934
        %v2687 = vpack.c.b16 %v1951, %v1935
        %v2688 = vpack.c.b16 %v1952, %v1936
        %v2689 = vpack.c.b16 %v1953, %v1937
        %v2690 = vpack.c.b16 %v1954, %v1938
        %v2691 = vpack.c.b16 %v1955, %v1939
        %v2692 = vpack.c.b16 %v1956, %v1940
        %v2693 = vpack.c.b16 %v1957, %v1941
        %v2694 = vpack.c.b16 %v1958, %v1942
        %v2695 = vpack.c.b16 %v1959, %v1943
        %v2696 = vpack.c.b16 %v1960, %v1944
        %v2697 = vpack.c.b16 %v1961, %v1945
        %v2698 = vpack.c.b16 %v1962, %v1946
        %v2699 = vpack.c.b16 %v1963, %v1947
        %v2700 = vpack.c.b16 %v1964, %v1948
        %v2701 = vpack.c.b16 %v1981, %v1965
        %v2702 = vpack.c.b16 %v1982, %v1966
        %v2703 = vpack.c.b16 %v1983, %v1967
        %v2704 = vpack.c.b16 %v1984, %v1968
        %v2705 = vpack.c.b16 %v1985, %v1969
        %v2706 = vpack.c.b16 %v1986, %v1970
        %v2707 = vpack.c.b16 %v1987, %v1971
        %v2708 = vpack.c.b16 %v1988, %v1972
        %v2709 = vpack.c.b16 %v1989, %v1973
        %v2710 = vpack.c.b16 %v1990, %v1974
        %v2711 = vpack.c.b16 %v1991, %v1975
        %v2712 = vpack.c.b16 %v1992, %v1976
        %v2713 = vpack.c.b16 %v1993, %v1977
        %v2714 = vpack.c.b16 %v1994, %v1978
        %v2715 = vpack.c.b16 %v1995, %v1979
        %v2716 = vpack.c.b16 %v1996, %v1980
        %v2717 = vpack.c.b16 %v2013, %v1997
        %v2718 = vpack.c.b16 %v2014, %v1998
        %v2719 = vpack.c.b16 %v2015, %v1999
        %v2720 = vpack.c.b16 %v2016, %v2000
        %v2721 = vpack.c.b16 %v2017, %v2001
        %v2722 = vpack.c.b16 %v2018, %v2002
        %v2723 = vpack.c.b16 %v2019, %v2003
        %v2724 = vpack.c.b16 %v2020, %v2004
        %v2725 = vpack.c.b16 %v2021, %v2005
        %v2726 = vpack.c.b16 %v2022, %v2006
        %v2727 = vpack.c.b16 %v2023, %v2007
        %v2728 = vpack.c.b16 %v2024, %v2008
        %v2729 = vpack.c.b16 %v2025, %v2009
        %v2730 = vpack.c.b16 %v2026, %v2010
        %v2731 = vpack.c.b16 %v2027, %v2011
        %v2732 = vpack.c.b16 %v2028, %v2012
        %v2733 = vpack.c.b16 %v2045, %v2029
        %v2734 = vpack.c.b16 %v2046, %v2030
        %v2735 = vpack.c.b16 %v2047, %v2031
        %v2736 = vpack.c.b16 %v2048, %v2032
        %v2737 = vpack.c.b16 %v2049, %v2033
        %v2738 = vpack.c.b16 %v2050, %v2034
        %v2739 = vpack.c.b16 %v2051, %v2035
        %v2740 = vpack.c.b16 %v2052, %v2036
        %v2741 = vpack.c.b16 %v2053, %v2037
        %v2742 = vpack.c.b16 %v2054, %v2038
        %v2743 = vpack.c.b16 %v2055, %v2039
        %v2744 = vpack.c.b16 %v2056, %v2040
        %v2745 = vpack.c.b16 %v2057, %v2041
        %v2746 = vpack.c.b16 %v2058, %v2042
        %v2747 = vpack.c.b16 %v2059, %v2043
        %v2748 = vpack.c.b16 %v2060, %v2044
        %v2749 = vpack.c.b16 %v2077, %v2061
        %v2750 = vpack.c.b16 %v2078, %v2062
        %v2751 = vpack.c.b16 %v2079, %v2063
        %v2752 = vpack.c.b16 %v2080, %v2064
        %v2753 = vpack.c.b16 %v2081, %v2065
        %v2754 = vpack.c.b16 %v2082, %v2066
        %v2755 = vpack.c.b16 %v2083, %v2067
        %v2756 = vpack.c.b16 %v2084, %v2068
        %v2757 = vpack.c.b16 %v2085, %v2069
        %v2758 = vpack.c.b16 %v2086, %v2070
        %v2759 = vpack.c.b16 %v2087, %v2071
        %v2760 = vpack.c.b16 %v2088, %v2072
        %v2761 = vpack.c.b16 %v2089, %v2073
        %v2762 = vpack.c.b16 %v2090, %v2074
        %v2763 = vpack.c.b16 %v2091, %v2075
        %v2764 = vpack.c.b16 %v2092, %v2076
        %v2765 = vpack.c.b16 %v2109, %v2093
        %v2766 = vpack.c.b16 %v2110, %v2094
        %v2767 = vpack.c.b16 %v2111, %v2095
        %v2768 = vpack.c.b16 %v2112, %v2096
        %v2769 = vpack.c.b16 %v2113, %v2097
        %v2770 = vpack.c.b16 %v2114, %v2098
        %v2771 = vpack.c.b16 %v2115, %v2099
        %v2772 = vpack.c.b16 %v2116, %v2100
        %v2773 = vpack.c.b16 %v2117, %v2101
        %v2774 = vpack.c.b16 %v2118, %v2102
        %v2775 = vpack.c.b16 %v2119, %v2103
        %v2776 = vpack.c.b16 %v2120, %v2104
        %v2777 = vpack.c.b16 %v2121, %v2105
        %v2778 = vpack.c.b16 %v2122, %v2106
        %v2779 = vpack.c.b16 %v2123, %v2107
        %v2780 = vpack.c.b16 %v2124, %v2108
        %v2781 = vpack.c.b16 %v2141, %v2125
        %v2782 = vpack.c.b16 %v2142, %v2126
        %v2783 = vpack.c.b16 %v2143, %v2127
        %v2784 = vpack.c.b16 %v2144, %v2128
        %v2785 = vpack.c.b16 %v2145, %v2129
        %v2786 = vpack.c.b16 %v2146, %v2130
        %v2787 = vpack.c.b16 %v2147, %v2131
        %v2788 = vpack.c.b16 %v2148, %v2132
        %v2789 = vpack.c.b16 %v2149, %v2133
        %v2790 = vpack.c.b16 %v2150, %v2134
        %v2791 = vpack.c.b16 %v2151, %v2135
        %v2792 = vpack.c.b16 %v2152, %v2136
        %v2793 = vpack.c.b16 %v2153, %v2137
        %v2794 = vpack.c.b16 %v2154, %v2138
        %v2795 = vpack.c.b16 %v2155, %v2139
        %v2796 = vpack.c.b16 %v2156, %v2140
        %v2797 = vpack.c.b16 %v2173, %v2157
        %v2798 = vpack.c.b16 %v2174, %v2158
        %v2799 = vpack.c.b16 %v2175, %v2159
        %v2800 = vpack.c.b16 %v2176, %v2160
        %v2801 = vpack.c.b16 %v2177, %v2161
        %v2802 = vpack.c.b16 %v2178, %v2162
        %v2803 = vpack.c.b16 %v2179, %v2163
        %v2804 = vpack.c.b16 %v2180, %v2164
        %v2805 = vpack.c.b16 %v2181, %v2165
        %v2806 = vpack.c.b16 %v2182, %v2166
        %v2807 = vpack.c.b16 %v2183, %v2167
        %v2808 = vpack.c.b16 %v2184, %v2168
        %v2809 = vpack.c.b16 %v2185, %v2169
        %v2810 = vpack.c.b16 %v2186, %v2170
        %v2811 = vpack.c.b16 %v2187, %v2171
        %v2812 = vpack.c.b16 %v2188, %v2172
        %v2813 = vpack.c.b16 %v2205, %v2189
        %v2814 = vpack.c.b16 %v2206, %v2190
        %v2815 = vpack.c.b16 %v2207, %v2191
        %v2816 = vpack.c.b16 %v2208, %v2192
        %v2817 = vpack.c.b16 %v2209, %v2193
        %v2818 = vpack.c.b16 %v2210, %v2194
        %v2819 = vpack.c.b16 %v2211, %v2195
        %v2820 = vpack.c.b16 %v2212, %v2196
        %v2821 = vpack.c.b16 %v2213, %v2197
        %v2822 = vpack.c.b16 %v2214, %v2198
        %v2823 = vpack.c.b16 %v2215, %v2199
        %v2824 = vpack.c.b16 %v2216, %v2200
        %v2825 = vpack.c.b16 %v2217, %v2201
        %v2826 = vpack.c.b16 %v2218, %v2202
        %v2827 = vpack.c.b16 %v2219, %v2203
        %v2828 = vpack.c.b16 %v2220, %v2204
        %v2829 = vpack.c.b16 %v2237, %v2221
        %v2830 = vpack.c.b16 %v2238, %v2222
        %v2831 = vpack.c.b16 %v2239, %v2223
        %v2832 = vpack.c.b16 %v2240, %v2224
        %v2833 = vpack.c.b16 %v2241, %v2225
        %v2834 = vpack.c.b16 %v2242, %v2226
        %v2835 = vpack.c.b16 %v2243, %v2227
        %v2836 = vpack.c.b16 %v2244, %v2228
        %v2837 = vpack.c.b16 %v2245, %v2229
        %v2838 = vpack.c.b16 %v2246, %v2230
        %v2839 = vpack.c.b16 %v2247, %v2231
        %v2840 = vpack.c.b16 %v2248, %v2232
        %v2841 = vpack.c.b16 %v2249, %v2233
        %v2842 = vpack.c.b16 %v2250, %v2234
        %v2843 = vpack.c.b16 %v2251, %v2235
        %v2844 = vpack.c.b16 %v2252, %v2236
        %v2845 = vpack.c.b16 %v2269, %v2253
        %v2846 = vpack.c.b16 %v2270, %v2254
        %v2847 = vpack.c.b16 %v2271, %v2255
        %v2848 = vpack.c.b16 %v2272, %v2256
        %v2849 = vpack.c.b16 %v2273, %v2257
        %v2850 = vpack.c.b16 %v2274, %v2258
        %v2851 = vpack.c.b16 %v2275, %v2259
        %v2852 = vpack.c.b16 %v2276, %v2260
        %v2853 = vpack.c.b16 %v2277, %v2261
        %v2854 = vpack.c.b16 %v2278, %v2262
        %v2855 = vpack.c.b16 %v2279, %v2263
        %v2856 = vpack.c.b16 %v2280, %v2264
        %v2857 = vpack.c.b16 %v2281, %v2265
        %v2858 = vpack.c.b16 %v2282, %v2266
        %v2859 = vpack.c.b16 %v2283, %v2267
        %v2860 = vpack.c.b16 %v2284, %v2268
        %v2861 = vpack.c.b16 %v2301, %v2285
        %v2862 = vpack.c.b16 %v2302, %v2286
        %v2863 = vpack.c.b16 %v2303, %v2287
        %v2864 = vpack.c.b16 %v2304, %v2288
        %v2865 = vpack.c.b16 %v2305, %v2289
        %v2866 = vpack.c.b16 %v2306, %v2290
        %v2867 = vpack.c.b16 %v2307, %v2291
        %v2868 = vpack.c.b16 %v2308, %v2292
        %v2869 = vpack.c.b16 %v2309, %v2293
        %v2870 = vpack.c.b16 %v2310, %v2294
        %v2871 = vpack.c.b16 %v2311, %v2295
        %v2872 = vpack.c.b16 %v2312, %v2296
        %v2873 = vpack.c.b16 %v2313, %v2297
        %v2874 = vpack.c.b16 %v2314, %v2298
        %v2875 = vpack.c.b16 %v2315, %v2299
        %v2876 = vpack.c.b16 %v2316, %v2300
        %v2877 = vpack.c.b16 %v2333, %v2317
        %v2878 = vpack.c.b16 %v2334, %v2318
        %v2879 = vpack.c.b16 %v2335, %v2319
        %v2880 = vpack.c.b16 %v2336, %v2320
        %v2881 = vpack.c.b16 %v2337, %v2321
        %v2882 = vpack.c.b16 %v2338, %v2322
        %v2883 = vpack.c.b16 %v2339, %v2323
        %v2884 = vpack.c.b16 %v2340, %v2324
        %v2885 = vpack.c.b16 %v2341, %v2325
        %v2886 = vpack.c.b16 %v2342, %v2326
        %v2887 = vpack.c.b16 %v2343, %v2327
        %v2888 = vpack.c.b16 %v2344, %v2328
        %v2889 = vpack.c.b16 %v2345, %v2329
        %v2890 = vpack.c.b16 %v2346, %v2330
        %v2891 = vpack.c.b16 %v2347, %v2331
        %v2892 = vpack.c.b16 %v2348, %v2332
        %v2893 = vpack.c.b16 %v2365, %v2349
        %v2894 = vpack.c.b16 %v2366, %v2350
        %v2895 = vpack.c.b16 %v2367, %v2351
        %v2896 = vpack.c.b16 %v2368, %v2352
        %v2897 = vpack.c.b16 %v2369, %v2353
        %v2898 = vpack.c.b16 %v2370, %v2354
        %v2899 = vpack.c.b16 %v2371, %v2355
        %v2900 = vpack.c.b16 %v2372, %v2356
        %v2901 = vpack.c.b16 %v2373, %v2357
        %v2902 = vpack.c.b16 %v2374, %v2358
        %v2903 = vpack.c.b16 %v2375, %v2359
        %v2904 = vpack.c.b16 %v2376, %v2360
        %v2905 = vpack.c.b16 %v2377, %v2361
        %v2906 = vpack.c.b16 %v2378, %v2362
        %v2907 = vpack.c.b16 %v2379, %v2363
        %v2908 = vpack.c.b16 %v2380, %v2364
        %v2909 = vpack.c.b16 %v2397, %v2381
        %v2910 = vpack.c.b16 %v2398, %v2382
        %v2911 = vpack.c.b16 %v2399, %v2383
        %v2912 = vpack.c.b16 %v2400, %v2384
        %v2913 = vpack.c.b16 %v2401, %v2385
        %v2914 = vpack.c.b16 %v2402, %v2386
        %v2915 = vpack.c.b16 %v2403, %v2387
        %v2916 = vpack.c.b16 %v2404, %v2388
        %v2917 = vpack.c.b16 %v2405, %v2389
        %v2918 = vpack.c.b16 %v2406, %v2390
        %v2919 = vpack.c.b16 %v2407, %v2391
        %v2920 = vpack.c.b16 %v2408, %v2392
        %v2921 = vpack.c.b16 %v2409, %v2393
        %v2922 = vpack.c.b16 %v2410, %v2394
        %v2923 = vpack.c.b16 %v2411, %v2395
        %v2924 = vpack.c.b16 %v2412, %v2396
        %3437 = vmatprep.subr.bf16.mxu0 %v2526
        %3438 = vmatpush1.bf16.msra.mxu0 %v2525
        %3439 = vmatprep.subr.bf16.mxu0 %v2510
        %3440 = vmatpush1.bf16.msra.mxu0 %v2509
        %3441 = vmatprep.subr.bf16.mxu0 %v2494
        %3442 = vmatpush1.bf16.msra.mxu0 %v2493
        %3443 = vmatprep.subr.bf16.mxu0 %v2478
        %3444 = vmatpush1.bf16.msra.mxu0 %v2477
        %3445 = vmatprep.subr.bf16.mxu0 %v2462
        %3446 = vmatpush1.bf16.msra.mxu0 %v2461
        %3447 = vmatprep.subr.bf16.mxu0 %v2446
        %3448 = vmatpush1.bf16.msra.mxu0 %v2445
        %3449 = vmatprep.subr.bf16.mxu0 %v2430
        %3450 = vmatpush1.bf16.msra.mxu0 %v2429
        %3451 = vmatprep.subr.bf16.mxu0 %v2414
        %3452 = vmatpush1.bf16.msra.mxu0 %v2413
        %3453 = vmatprep.subr.bf16.mxu0 %v2654
        %3454 = vmatpush2.bf16.msra.mxu0 %v2653
        %3455 = vmatprep.subr.bf16.mxu0 %v2638
        %3456 = vmatpush2.bf16.msra.mxu0 %v2637
        %3457 = vmatprep.subr.bf16.mxu0 %v2622
        %3458 = vmatpush2.bf16.msra.mxu0 %v2621
        %3459 = vmatprep.subr.bf16.mxu0 %v2606
        %3460 = vmatpush2.bf16.msra.mxu0 %v2605
        %3461 = vmatprep.subr.bf16.mxu0 %v2590
        %3462 = vmatpush2.bf16.msra.mxu0 %v2589
        %3463 = vmatprep.subr.bf16.mxu0 %v2574
        %3464 = vmatpush2.bf16.msra.mxu0 %v2573
        %3465 = vmatprep.subr.bf16.mxu0 %v2558
        %3466 = vmatpush2.bf16.msra.mxu0 %v2557
        %3467 = vmatprep.subr.bf16.mxu0 %v2542
        %3468 = vmatpush2.bf16.msra.mxu0 %v2541
        %3469 = vmatprep.mubr.bf16.mxu0 %v870
        %3470 = vmatmul.mubr.bf16.gmra.mxu0 %v869
        %v3471 = vpop.f32.mrf.mxu0
        %v3472 = vadd.f32 0.0, %v3471
        %v3473 = vpop.f32.mrf.mxu0
        %v3474 = vadd.f32 0.0, %v3473
        %v3475 = vpop.f32.mrf.mxu0
        %v3476 = vpop.f32.mrf.mxu0
        %3477 = vdwg.mxu0
        %3478 = vmatprep.subr.bf16.mxu0 %v2782
        %3479 = vmatpush1.bf16.msra.mxu0 %v2781
        %3480 = vmatprep.subr.bf16.mxu0 %v2766
        %3481 = vmatpush1.bf16.msra.mxu0 %v2765
        %3482 = vmatprep.subr.bf16.mxu0 %v2750
        %3483 = vmatpush1.bf16.msra.mxu0 %v2749
        %3484 = vmatprep.subr.bf16.mxu0 %v2734
        %3485 = vmatpush1.bf16.msra.mxu0 %v2733
        %3486 = vmatprep.subr.bf16.mxu0 %v2718
        %3487 = vmatpush1.bf16.msra.mxu0 %v2717
        %3488 = vmatprep.subr.bf16.mxu0 %v2702
        %3489 = vmatpush1.bf16.msra.mxu0 %v2701
        %3490 = vmatprep.subr.bf16.mxu0 %v2686
        %3491 = vmatpush1.bf16.msra.mxu0 %v2685
        %3492 = vmatprep.subr.bf16.mxu0 %v2670
        %3493 = vmatpush1.bf16.msra.mxu0 %v2669
        %3494 = vmatprep.subr.bf16.mxu0 %v2910
        %3495 = vmatpush2.bf16.msra.mxu0 %v2909
        %3496 = vmatprep.subr.bf16.mxu0 %v2894
        %3497 = vmatpush2.bf16.msra.mxu0 %v2893
        %3498 = vmatprep.subr.bf16.mxu0 %v2878
        %3499 = vmatpush2.bf16.msra.mxu0 %v2877
        %3500 = vmatprep.subr.bf16.mxu0 %v2862
        %3501 = vmatpush2.bf16.msra.mxu0 %v2861
        %3502 = vmatprep.subr.bf16.mxu0 %v2846
        %3503 = vmatpush2.bf16.msra.mxu0 %v2845
        %3504 = vmatprep.subr.bf16.mxu0 %v2830
        %3505 = vmatpush2.bf16.msra.mxu0 %v2829
        %3506 = vmatprep.subr.bf16.mxu0 %v2814
        %3507 = vmatpush2.bf16.msra.mxu0 %v2813
        %3508 = vmatprep.subr.bf16.mxu0 %v2798
        %3509 = vmatpush2.bf16.msra.mxu0 %v2797
        %3510 = vmatprep.mubr.bf16.mxu0 %v872
        %3511 = vmatmul.mubr.bf16.gmra.mxu0 %v871
        %v3512 = vpop.f32.mrf.mxu0
        %v3513 = vadd.f32 %v3472, %v3512
        %v3514 = vpop.f32.mrf.mxu0
        %v3515 = vadd.f32 %v3474, %v3514
        %v3516 = vpop.f32.mrf.mxu0
        %v3517 = vpop.f32.mrf.mxu0
        %3518 = vdwg.mxu0
        %3519 = vmatprep.subr.bf16.mxu0 %v2528
        %3520 = vmatpush1.bf16.msra.mxu0 %v2527
        %3521 = vmatprep.subr.bf16.mxu0 %v2512
        %3522 = vmatpush1.bf16.msra.mxu0 %v2511
        %3523 = vmatprep.subr.bf16.mxu0 %v2496
        %3524 = vmatpush1.bf16.msra.mxu0 %v2495
        %3525 = vmatprep.subr.bf16.mxu0 %v2480
        %3526 = vmatpush1.bf16.msra.mxu0 %v2479
        %3527 = vmatprep.subr.bf16.mxu0 %v2464
        %3528 = vmatpush1.bf16.msra.mxu0 %v2463
        %3529 = vmatprep.subr.bf16.mxu0 %v2448
        %3530 = vmatpush1.bf16.msra.mxu0 %v2447
        %3531 = vmatprep.subr.bf16.mxu0 %v2432
        %3532 = vmatpush1.bf16.msra.mxu0 %v2431
        %3533 = vmatprep.subr.bf16.mxu0 %v2416
        %3534 = vmatpush1.bf16.msra.mxu0 %v2415
        %3535 = vmatprep.subr.bf16.mxu0 %v2656
        %3536 = vmatpush2.bf16.msra.mxu0 %v2655
        %3537 = vmatprep.subr.bf16.mxu0 %v2640
        %3538 = vmatpush2.bf16.msra.mxu0 %v2639
        %3539 = vmatprep.subr.bf16.mxu0 %v2624
        %3540 = vmatpush2.bf16.msra.mxu0 %v2623
        %3541 = vmatprep.subr.bf16.mxu0 %v2608
        %3542 = vmatpush2.bf16.msra.mxu0 %v2607
        %3543 = vmatprep.subr.bf16.mxu0 %v2592
        %3544 = vmatpush2.bf16.msra.mxu0 %v2591
        %3545 = vmatprep.subr.bf16.mxu0 %v2576
        %3546 = vmatpush2.bf16.msra.mxu0 %v2575
        %3547 = vmatprep.subr.bf16.mxu0 %v2560
        %3548 = vmatpush2.bf16.msra.mxu0 %v2559
        %3549 = vmatprep.subr.bf16.mxu0 %v2544
        %3550 = vmatpush2.bf16.msra.mxu0 %v2543
        %3551 = vmatprep.mubr.bf16.mxu0 %v870
        %3552 = vmatmul.mubr.bf16.gmra.mxu0 %v869
        %v3553 = vpop.f32.mrf.mxu0
        %v3554 = vadd.f32 0.0, %v3553
        %v3555 = vpop.f32.mrf.mxu0
        %v3556 = vadd.f32 0.0, %v3555
        %v3557 = vpop.f32.mrf.mxu0
        %v3558 = vpop.f32.mrf.mxu0
        %3559 = vdwg.mxu0
        %3560 = vmatprep.subr.bf16.mxu0 %v2784
        %3561 = vmatpush1.bf16.msra.mxu0 %v2783
        %3562 = vmatprep.subr.bf16.mxu0 %v2768
        %3563 = vmatpush1.bf16.msra.mxu0 %v2767
        %3564 = vmatprep.subr.bf16.mxu0 %v2752
        %3565 = vmatpush1.bf16.msra.mxu0 %v2751
        %3566 = vmatprep.subr.bf16.mxu0 %v2736
        %3567 = vmatpush1.bf16.msra.mxu0 %v2735
        %3568 = vmatprep.subr.bf16.mxu0 %v2720
        %3569 = vmatpush1.bf16.msra.mxu0 %v2719
        %3570 = vmatprep.subr.bf16.mxu0 %v2704
        %3571 = vmatpush1.bf16.msra.mxu0 %v2703
        %3572 = vmatprep.subr.bf16.mxu0 %v2688
        %3573 = vmatpush1.bf16.msra.mxu0 %v2687
        %3574 = vmatprep.subr.bf16.mxu0 %v2672
        %3575 = vmatpush1.bf16.msra.mxu0 %v2671
        %3576 = vmatprep.subr.bf16.mxu0 %v2912
        %3577 = vmatpush2.bf16.msra.mxu0 %v2911
        %3578 = vmatprep.subr.bf16.mxu0 %v2896
        %3579 = vmatpush2.bf16.msra.mxu0 %v2895
        %3580 = vmatprep.subr.bf16.mxu0 %v2880
        %3581 = vmatpush2.bf16.msra.mxu0 %v2879
        %3582 = vmatprep.subr.bf16.mxu0 %v2864
        %3583 = vmatpush2.bf16.msra.mxu0 %v2863
        %3584 = vmatprep.subr.bf16.mxu0 %v2848
        %3585 = vmatpush2.bf16.msra.mxu0 %v2847
        %3586 = vmatprep.subr.bf16.mxu0 %v2832
        %3587 = vmatpush2.bf16.msra.mxu0 %v2831
        %3588 = vmatprep.subr.bf16.mxu0 %v2816
        %3589 = vmatpush2.bf16.msra.mxu0 %v2815
        %3590 = vmatprep.subr.bf16.mxu0 %v2800
        %3591 = vmatpush2.bf16.msra.mxu0 %v2799
        %3592 = vmatprep.mubr.bf16.mxu0 %v872
        %3593 = vmatmul.mubr.bf16.gmra.mxu0 %v871
        %v3594 = vpop.f32.mrf.mxu0
        %v3595 = vadd.f32 %v3554, %v3594
        %v3596 = vpop.f32.mrf.mxu0
        %v3597 = vadd.f32 %v3556, %v3596
        %v3598 = vpop.f32.mrf.mxu0
        %v3599 = vpop.f32.mrf.mxu0
        %3600 = vdwg.mxu0
        %3601 = vmatprep.subr.bf16.mxu0 %v2530
        %3602 = vmatpush1.bf16.msra.mxu0 %v2529
        %3603 = vmatprep.subr.bf16.mxu0 %v2514
        %3604 = vmatpush1.bf16.msra.mxu0 %v2513
        %3605 = vmatprep.subr.bf16.mxu0 %v2498
        %3606 = vmatpush1.bf16.msra.mxu0 %v2497
        %3607 = vmatprep.subr.bf16.mxu0 %v2482
        %3608 = vmatpush1.bf16.msra.mxu0 %v2481
        %3609 = vmatprep.subr.bf16.mxu0 %v2466
        %3610 = vmatpush1.bf16.msra.mxu0 %v2465
        %3611 = vmatprep.subr.bf16.mxu0 %v2450
        %3612 = vmatpush1.bf16.msra.mxu0 %v2449
        %3613 = vmatprep.subr.bf16.mxu0 %v2434
        %3614 = vmatpush1.bf16.msra.mxu0 %v2433
        %3615 = vmatprep.subr.bf16.mxu0 %v2418
        %3616 = vmatpush1.bf16.msra.mxu0 %v2417
        %3617 = vmatprep.subr.bf16.mxu0 %v2658
        %3618 = vmatpush2.bf16.msra.mxu0 %v2657
        %3619 = vmatprep.subr.bf16.mxu0 %v2642
        %3620 = vmatpush2.bf16.msra.mxu0 %v2641
        %3621 = vmatprep.subr.bf16.mxu0 %v2626
        %3622 = vmatpush2.bf16.msra.mxu0 %v2625
        %3623 = vmatprep.subr.bf16.mxu0 %v2610
        %3624 = vmatpush2.bf16.msra.mxu0 %v2609
        %3625 = vmatprep.subr.bf16.mxu0 %v2594
        %3626 = vmatpush2.bf16.msra.mxu0 %v2593
        %3627 = vmatprep.subr.bf16.mxu0 %v2578
        %3628 = vmatpush2.bf16.msra.mxu0 %v2577
        %3629 = vmatprep.subr.bf16.mxu0 %v2562
        %3630 = vmatpush2.bf16.msra.mxu0 %v2561
        %3631 = vmatprep.subr.bf16.mxu0 %v2546
        %3632 = vmatpush2.bf16.msra.mxu0 %v2545
        %3633 = vmatprep.mubr.bf16.mxu0 %v870
        %3634 = vmatmul.mubr.bf16.gmra.mxu0 %v869
        %v3635 = vpop.f32.mrf.mxu0
        %v3636 = vadd.f32 0.0, %v3635
        %v3637 = vpop.f32.mrf.mxu0
        %v3638 = vadd.f32 0.0, %v3637
        %v3639 = vpop.f32.mrf.mxu0
        %v3640 = vpop.f32.mrf.mxu0
        %3641 = vdwg.mxu0
        %3642 = vmatprep.subr.bf16.mxu0 %v2786
        %3643 = vmatpush1.bf16.msra.mxu0 %v2785
        %3644 = vmatprep.subr.bf16.mxu0 %v2770
        %3645 = vmatpush1.bf16.msra.mxu0 %v2769
        %3646 = vmatprep.subr.bf16.mxu0 %v2754
        %3647 = vmatpush1.bf16.msra.mxu0 %v2753
        %3648 = vmatprep.subr.bf16.mxu0 %v2738
        %3649 = vmatpush1.bf16.msra.mxu0 %v2737
        %3650 = vmatprep.subr.bf16.mxu0 %v2722
        %3651 = vmatpush1.bf16.msra.mxu0 %v2721
        %3652 = vmatprep.subr.bf16.mxu0 %v2706
        %3653 = vmatpush1.bf16.msra.mxu0 %v2705
        %3654 = vmatprep.subr.bf16.mxu0 %v2690
        %3655 = vmatpush1.bf16.msra.mxu0 %v2689
        %3656 = vmatprep.subr.bf16.mxu0 %v2674
        %3657 = vmatpush1.bf16.msra.mxu0 %v2673
        %3658 = vmatprep.subr.bf16.mxu0 %v2914
        %3659 = vmatpush2.bf16.msra.mxu0 %v2913
        %3660 = vmatprep.subr.bf16.mxu0 %v2898
        %3661 = vmatpush2.bf16.msra.mxu0 %v2897
        %3662 = vmatprep.subr.bf16.mxu0 %v2882
        %3663 = vmatpush2.bf16.msra.mxu0 %v2881
        %3664 = vmatprep.subr.bf16.mxu0 %v2866
        %3665 = vmatpush2.bf16.msra.mxu0 %v2865
        %3666 = vmatprep.subr.bf16.mxu0 %v2850
        %3667 = vmatpush2.bf16.msra.mxu0 %v2849
        %3668 = vmatprep.subr.bf16.mxu0 %v2834
        %3669 = vmatpush2.bf16.msra.mxu0 %v2833
        %3670 = vmatprep.subr.bf16.mxu0 %v2818
        %3671 = vmatpush2.bf16.msra.mxu0 %v2817
        %3672 = vmatprep.subr.bf16.mxu0 %v2802
        %3673 = vmatpush2.bf16.msra.mxu0 %v2801
        %3674 = vmatprep.mubr.bf16.mxu0 %v872
        %3675 = vmatmul.mubr.bf16.gmra.mxu0 %v871
        %v3676 = vpop.f32.mrf.mxu0
        %v3677 = vadd.f32 %v3636, %v3676
        %v3678 = vpop.f32.mrf.mxu0
        %v3679 = vadd.f32 %v3638, %v3678
        %v3680 = vpop.f32.mrf.mxu0
        %v3681 = vpop.f32.mrf.mxu0
        %3682 = vdwg.mxu0
        %3683 = vmatprep.subr.bf16.mxu0 %v2532
        %3684 = vmatpush1.bf16.msra.mxu0 %v2531
        %3685 = vmatprep.subr.bf16.mxu0 %v2516
        %3686 = vmatpush1.bf16.msra.mxu0 %v2515
        %3687 = vmatprep.subr.bf16.mxu0 %v2500
        %3688 = vmatpush1.bf16.msra.mxu0 %v2499
        %3689 = vmatprep.subr.bf16.mxu0 %v2484
        %3690 = vmatpush1.bf16.msra.mxu0 %v2483
        %3691 = vmatprep.subr.bf16.mxu0 %v2468
        %3692 = vmatpush1.bf16.msra.mxu0 %v2467
        %3693 = vmatprep.subr.bf16.mxu0 %v2452
        %3694 = vmatpush1.bf16.msra.mxu0 %v2451
        %3695 = vmatprep.subr.bf16.mxu0 %v2436
        %3696 = vmatpush1.bf16.msra.mxu0 %v2435
        %3697 = vmatprep.subr.bf16.mxu0 %v2420
        %3698 = vmatpush1.bf16.msra.mxu0 %v2419
        %3699 = vmatprep.subr.bf16.mxu0 %v2660
        %3700 = vmatpush2.bf16.msra.mxu0 %v2659
        %3701 = vmatprep.subr.bf16.mxu0 %v2644
        %3702 = vmatpush2.bf16.msra.mxu0 %v2643
        %3703 = vmatprep.subr.bf16.mxu0 %v2628
        %3704 = vmatpush2.bf16.msra.mxu0 %v2627
        %3705 = vmatprep.subr.bf16.mxu0 %v2612
        %3706 = vmatpush2.bf16.msra.mxu0 %v2611
        %3707 = vmatprep.subr.bf16.mxu0 %v2596
        %3708 = vmatpush2.bf16.msra.mxu0 %v2595
        %3709 = vmatprep.subr.bf16.mxu0 %v2580
        %3710 = vmatpush2.bf16.msra.mxu0 %v2579
        %3711 = vmatprep.subr.bf16.mxu0 %v2564
        %3712 = vmatpush2.bf16.msra.mxu0 %v2563
        %3713 = vmatprep.subr.bf16.mxu0 %v2548
        %3714 = vmatpush2.bf16.msra.mxu0 %v2547
        %3715 = vmatprep.mubr.bf16.mxu0 %v870
        %3716 = vmatmul.mubr.bf16.gmra.mxu0 %v869
        %v3717 = vpop.f32.mrf.mxu0
        %v3718 = vadd.f32 0.0, %v3717
        %v3719 = vpop.f32.mrf.mxu0
        %v3720 = vadd.f32 0.0, %v3719
        %v3721 = vpop.f32.mrf.mxu0
        %v3722 = vpop.f32.mrf.mxu0
        %3723 = vdwg.mxu0
        %3724 = vmatprep.subr.bf16.mxu0 %v2788
        %3725 = vmatpush1.bf16.msra.mxu0 %v2787
        %3726 = vmatprep.subr.bf16.mxu0 %v2772
        %3727 = vmatpush1.bf16.msra.mxu0 %v2771
        %3728 = vmatprep.subr.bf16.mxu0 %v2756
        %3729 = vmatpush1.bf16.msra.mxu0 %v2755
        %3730 = vmatprep.subr.bf16.mxu0 %v2740
        %3731 = vmatpush1.bf16.msra.mxu0 %v2739
        %3732 = vmatprep.subr.bf16.mxu0 %v2724
        %3733 = vmatpush1.bf16.msra.mxu0 %v2723
        %3734 = vmatprep.subr.bf16.mxu0 %v2708
        %3735 = vmatpush1.bf16.msra.mxu0 %v2707
        %3736 = vmatprep.subr.bf16.mxu0 %v2692
        %3737 = vmatpush1.bf16.msra.mxu0 %v2691
        %3738 = vmatprep.subr.bf16.mxu0 %v2676
        %3739 = vmatpush1.bf16.msra.mxu0 %v2675
        %3740 = vmatprep.subr.bf16.mxu0 %v2916
        %3741 = vmatpush2.bf16.msra.mxu0 %v2915
        %3742 = vmatprep.subr.bf16.mxu0 %v2900
        %3743 = vmatpush2.bf16.msra.mxu0 %v2899
        %3744 = vmatprep.subr.bf16.mxu0 %v2884
        %3745 = vmatpush2.bf16.msra.mxu0 %v2883
        %3746 = vmatprep.subr.bf16.mxu0 %v2868
        %3747 = vmatpush2.bf16.msra.mxu0 %v2867
        %3748 = vmatprep.subr.bf16.mxu0 %v2852
        %3749 = vmatpush2.bf16.msra.mxu0 %v2851
        %3750 = vmatprep.subr.bf16.mxu0 %v2836
        %3751 = vmatpush2.bf16.msra.mxu0 %v2835
        %3752 = vmatprep.subr.bf16.mxu0 %v2820
        %3753 = vmatpush2.bf16.msra.mxu0 %v2819
        %3754 = vmatprep.subr.bf16.mxu0 %v2804
        %3755 = vmatpush2.bf16.msra.mxu0 %v2803
        %3756 = vmatprep.mubr.bf16.mxu0 %v872
        %3757 = vmatmul.mubr.bf16.gmra.mxu0 %v871
        %v3758 = vpop.f32.mrf.mxu0
        %v3759 = vadd.f32 %v3718, %v3758
        %v3760 = vpop.f32.mrf.mxu0
        %v3761 = vadd.f32 %v3720, %v3760
        %v3762 = vpop.f32.mrf.mxu0
        %v3763 = vpop.f32.mrf.mxu0
        %3764 = vdwg.mxu0
        %3765 = vmatprep.subr.bf16.mxu0 %v2534
        %3766 = vmatpush1.bf16.msra.mxu0 %v2533
        %3767 = vmatprep.subr.bf16.mxu0 %v2518
        %3768 = vmatpush1.bf16.msra.mxu0 %v2517
        %3769 = vmatprep.subr.bf16.mxu0 %v2502
        %3770 = vmatpush1.bf16.msra.mxu0 %v2501
        %3771 = vmatprep.subr.bf16.mxu0 %v2486
        %3772 = vmatpush1.bf16.msra.mxu0 %v2485
        %3773 = vmatprep.subr.bf16.mxu0 %v2470
        %3774 = vmatpush1.bf16.msra.mxu0 %v2469
        %3775 = vmatprep.subr.bf16.mxu0 %v2454
        %3776 = vmatpush1.bf16.msra.mxu0 %v2453
        %3777 = vmatprep.subr.bf16.mxu0 %v2438
        %3778 = vmatpush1.bf16.msra.mxu0 %v2437
        %3779 = vmatprep.subr.bf16.mxu0 %v2422
        %3780 = vmatpush1.bf16.msra.mxu0 %v2421
        %3781 = vmatprep.subr.bf16.mxu0 %v2662
        %3782 = vmatpush2.bf16.msra.mxu0 %v2661
        %3783 = vmatprep.subr.bf16.mxu0 %v2646
        %3784 = vmatpush2.bf16.msra.mxu0 %v2645
        %3785 = vmatprep.subr.bf16.mxu0 %v2630
        %3786 = vmatpush2.bf16.msra.mxu0 %v2629
        %3787 = vmatprep.subr.bf16.mxu0 %v2614
        %3788 = vmatpush2.bf16.msra.mxu0 %v2613
        %3789 = vmatprep.subr.bf16.mxu0 %v2598
        %3790 = vmatpush2.bf16.msra.mxu0 %v2597
        %3791 = vmatprep.subr.bf16.mxu0 %v2582
        %3792 = vmatpush2.bf16.msra.mxu0 %v2581
        %3793 = vmatprep.subr.bf16.mxu0 %v2566
        %3794 = vmatpush2.bf16.msra.mxu0 %v2565
        %3795 = vmatprep.subr.bf16.mxu0 %v2550
        %3796 = vmatpush2.bf16.msra.mxu0 %v2549
        %3797 = vmatprep.mubr.bf16.mxu0 %v870
        %3798 = vmatmul.mubr.bf16.gmra.mxu0 %v869
        %v3799 = vpop.f32.mrf.mxu0
        %v3800 = vadd.f32 0.0, %v3799
        %v3801 = vpop.f32.mrf.mxu0
        %v3802 = vadd.f32 0.0, %v3801
        %v3803 = vpop.f32.mrf.mxu0
        %v3804 = vpop.f32.mrf.mxu0
        %3805 = vdwg.mxu0
        %3806 = vmatprep.subr.bf16.mxu0 %v2790
        %3807 = vmatpush1.bf16.msra.mxu0 %v2789
        %3808 = vmatprep.subr.bf16.mxu0 %v2774
        %3809 = vmatpush1.bf16.msra.mxu0 %v2773
        %3810 = vmatprep.subr.bf16.mxu0 %v2758
        %3811 = vmatpush1.bf16.msra.mxu0 %v2757
        %3812 = vmatprep.subr.bf16.mxu0 %v2742
        %3813 = vmatpush1.bf16.msra.mxu0 %v2741
        %3814 = vmatprep.subr.bf16.mxu0 %v2726
        %3815 = vmatpush1.bf16.msra.mxu0 %v2725
        %3816 = vmatprep.subr.bf16.mxu0 %v2710
        %3817 = vmatpush1.bf16.msra.mxu0 %v2709
        %3818 = vmatprep.subr.bf16.mxu0 %v2694
        %3819 = vmatpush1.bf16.msra.mxu0 %v2693
        %3820 = vmatprep.subr.bf16.mxu0 %v2678
        %3821 = vmatpush1.bf16.msra.mxu0 %v2677
        %3822 = vmatprep.subr.bf16.mxu0 %v2918
        %3823 = vmatpush2.bf16.msra.mxu0 %v2917
        %3824 = vmatprep.subr.bf16.mxu0 %v2902
        %3825 = vmatpush2.bf16.msra.mxu0 %v2901
        %3826 = vmatprep.subr.bf16.mxu0 %v2886
        %3827 = vmatpush2.bf16.msra.mxu0 %v2885
        %3828 = vmatprep.subr.bf16.mxu0 %v2870
        %3829 = vmatpush2.bf16.msra.mxu0 %v2869
        %3830 = vmatprep.subr.bf16.mxu0 %v2854
        %3831 = vmatpush2.bf16.msra.mxu0 %v2853
        %3832 = vmatprep.subr.bf16.mxu0 %v2838
        %3833 = vmatpush2.bf16.msra.mxu0 %v2837
        %3834 = vmatprep.subr.bf16.mxu0 %v2822
        %3835 = vmatpush2.bf16.msra.mxu0 %v2821
        %3836 = vmatprep.subr.bf16.mxu0 %v2806
        %3837 = vmatpush2.bf16.msra.mxu0 %v2805
        %3838 = vmatprep.mubr.bf16.mxu0 %v872
        %3839 = vmatmul.mubr.bf16.gmra.mxu0 %v871
        %v3840 = vpop.f32.mrf.mxu0
        %v3841 = vadd.f32 %v3800, %v3840
        %v3842 = vpop.f32.mrf.mxu0
        %v3843 = vadd.f32 %v3802, %v3842
        %v3844 = vpop.f32.mrf.mxu0
        %v3845 = vpop.f32.mrf.mxu0
        %3846 = vdwg.mxu0
        %3847 = vmatprep.subr.bf16.mxu0 %v2536
        %3848 = vmatpush1.bf16.msra.mxu0 %v2535
        %3849 = vmatprep.subr.bf16.mxu0 %v2520
        %3850 = vmatpush1.bf16.msra.mxu0 %v2519
        %3851 = vmatprep.subr.bf16.mxu0 %v2504
        %3852 = vmatpush1.bf16.msra.mxu0 %v2503
        %3853 = vmatprep.subr.bf16.mxu0 %v2488
        %3854 = vmatpush1.bf16.msra.mxu0 %v2487
        %3855 = vmatprep.subr.bf16.mxu0 %v2472
        %3856 = vmatpush1.bf16.msra.mxu0 %v2471
        %3857 = vmatprep.subr.bf16.mxu0 %v2456
        %3858 = vmatpush1.bf16.msra.mxu0 %v2455
        %3859 = vmatprep.subr.bf16.mxu0 %v2440
        %3860 = vmatpush1.bf16.msra.mxu0 %v2439
        %3861 = vmatprep.subr.bf16.mxu0 %v2424
        %3862 = vmatpush1.bf16.msra.mxu0 %v2423
        %3863 = vmatprep.subr.bf16.mxu0 %v2664
        %3864 = vmatpush2.bf16.msra.mxu0 %v2663
        %3865 = vmatprep.subr.bf16.mxu0 %v2648
        %3866 = vmatpush2.bf16.msra.mxu0 %v2647
        %3867 = vmatprep.subr.bf16.mxu0 %v2632
        %3868 = vmatpush2.bf16.msra.mxu0 %v2631
        %3869 = vmatprep.subr.bf16.mxu0 %v2616
        %3870 = vmatpush2.bf16.msra.mxu0 %v2615
        %3871 = vmatprep.subr.bf16.mxu0 %v2600
        %3872 = vmatpush2.bf16.msra.mxu0 %v2599
        %3873 = vmatprep.subr.bf16.mxu0 %v2584
        %3874 = vmatpush2.bf16.msra.mxu0 %v2583
        %3875 = vmatprep.subr.bf16.mxu0 %v2568
        %3876 = vmatpush2.bf16.msra.mxu0 %v2567
        %3877 = vmatprep.subr.bf16.mxu0 %v2552
        %3878 = vmatpush2.bf16.msra.mxu0 %v2551
        %3879 = vmatprep.mubr.bf16.mxu0 %v870
        %3880 = vmatmul.mubr.bf16.gmra.mxu0 %v869
        %v3881 = vpop.f32.mrf.mxu0
        %v3882 = vadd.f32 0.0, %v3881
        %v3883 = vpop.f32.mrf.mxu0
        %v3884 = vadd.f32 0.0, %v3883
        %v3885 = vpop.f32.mrf.mxu0
        %v3886 = vpop.f32.mrf.mxu0
        %3887 = vdwg.mxu0
        %3888 = vmatprep.subr.bf16.mxu0 %v2792
        %3889 = vmatpush1.bf16.msra.mxu0 %v2791
        %3890 = vmatprep.subr.bf16.mxu0 %v2776
        %3891 = vmatpush1.bf16.msra.mxu0 %v2775
        %3892 = vmatprep.subr.bf16.mxu0 %v2760
        %3893 = vmatpush1.bf16.msra.mxu0 %v2759
        %3894 = vmatprep.subr.bf16.mxu0 %v2744
        %3895 = vmatpush1.bf16.msra.mxu0 %v2743
        %3896 = vmatprep.subr.bf16.mxu0 %v2728
        %3897 = vmatpush1.bf16.msra.mxu0 %v2727
        %3898 = vmatprep.subr.bf16.mxu0 %v2712
        %3899 = vmatpush1.bf16.msra.mxu0 %v2711
        %3900 = vmatprep.subr.bf16.mxu0 %v2696
        %3901 = vmatpush1.bf16.msra.mxu0 %v2695
        %3902 = vmatprep.subr.bf16.mxu0 %v2680
        %3903 = vmatpush1.bf16.msra.mxu0 %v2679
        %3904 = vmatprep.subr.bf16.mxu0 %v2920
        %3905 = vmatpush2.bf16.msra.mxu0 %v2919
        %3906 = vmatprep.subr.bf16.mxu0 %v2904
        %3907 = vmatpush2.bf16.msra.mxu0 %v2903
        %3908 = vmatprep.subr.bf16.mxu0 %v2888
        %3909 = vmatpush2.bf16.msra.mxu0 %v2887
        %3910 = vmatprep.subr.bf16.mxu0 %v2872
        %3911 = vmatpush2.bf16.msra.mxu0 %v2871
        %3912 = vmatprep.subr.bf16.mxu0 %v2856
        %3913 = vmatpush2.bf16.msra.mxu0 %v2855
        %3914 = vmatprep.subr.bf16.mxu0 %v2840
        %3915 = vmatpush2.bf16.msra.mxu0 %v2839
        %3916 = vmatprep.subr.bf16.mxu0 %v2824
        %3917 = vmatpush2.bf16.msra.mxu0 %v2823
        %3918 = vmatprep.subr.bf16.mxu0 %v2808
        %3919 = vmatpush2.bf16.msra.mxu0 %v2807
        %3920 = vmatprep.mubr.bf16.mxu0 %v872
        %3921 = vmatmul.mubr.bf16.gmra.mxu0 %v871
        %v3922 = vpop.f32.mrf.mxu0
        %v3923 = vadd.f32 %v3882, %v3922
        %v3924 = vpop.f32.mrf.mxu0
        %v3925 = vadd.f32 %v3884, %v3924
        %v3926 = vpop.f32.mrf.mxu0
        %v3927 = vpop.f32.mrf.mxu0
        %3928 = vdwg.mxu0
        %3929 = vmatprep.subr.bf16.mxu0 %v2538
        %3930 = vmatpush1.bf16.msra.mxu0 %v2537
        %3931 = vmatprep.subr.bf16.mxu0 %v2522
        %3932 = vmatpush1.bf16.msra.mxu0 %v2521
        %3933 = vmatprep.subr.bf16.mxu0 %v2506
        %3934 = vmatpush1.bf16.msra.mxu0 %v2505
        %3935 = vmatprep.subr.bf16.mxu0 %v2490
        %3936 = vmatpush1.bf16.msra.mxu0 %v2489
        %3937 = vmatprep.subr.bf16.mxu0 %v2474
        %3938 = vmatpush1.bf16.msra.mxu0 %v2473
        %3939 = vmatprep.subr.bf16.mxu0 %v2458
        %3940 = vmatpush1.bf16.msra.mxu0 %v2457
        %3941 = vmatprep.subr.bf16.mxu0 %v2442
        %3942 = vmatpush1.bf16.msra.mxu0 %v2441
        %3943 = vmatprep.subr.bf16.mxu0 %v2426
        %3944 = vmatpush1.bf16.msra.mxu0 %v2425
        %3945 = vmatprep.subr.bf16.mxu0 %v2666
        %3946 = vmatpush2.bf16.msra.mxu0 %v2665
        %3947 = vmatprep.subr.bf16.mxu0 %v2650
        %3948 = vmatpush2.bf16.msra.mxu0 %v2649
        %3949 = vmatprep.subr.bf16.mxu0 %v2634
        %3950 = vmatpush2.bf16.msra.mxu0 %v2633
        %3951 = vmatprep.subr.bf16.mxu0 %v2618
        %3952 = vmatpush2.bf16.msra.mxu0 %v2617
        %3953 = vmatprep.subr.bf16.mxu0 %v2602
        %3954 = vmatpush2.bf16.msra.mxu0 %v2601
        %3955 = vmatprep.subr.bf16.mxu0 %v2586
        %3956 = vmatpush2.bf16.msra.mxu0 %v2585
        %3957 = vmatprep.subr.bf16.mxu0 %v2570
        %3958 = vmatpush2.bf16.msra.mxu0 %v2569
        %3959 = vmatprep.subr.bf16.mxu0 %v2554
        %3960 = vmatpush2.bf16.msra.mxu0 %v2553
        %3961 = vmatprep.mubr.bf16.mxu0 %v870
        %3962 = vmatmul.mubr.bf16.gmra.mxu0 %v869
        %v3963 = vpop.f32.mrf.mxu0
        %v3964 = vadd.f32 0.0, %v3963
        %v3965 = vpop.f32.mrf.mxu0
        %v3966 = vadd.f32 0.0, %v3965
        %v3967 = vpop.f32.mrf.mxu0
        %v3968 = vpop.f32.mrf.mxu0
        %3969 = vdwg.mxu0
        %3970 = vmatprep.subr.bf16.mxu0 %v2794
        %3971 = vmatpush1.bf16.msra.mxu0 %v2793
        %3972 = vmatprep.subr.bf16.mxu0 %v2778
        %3973 = vmatpush1.bf16.msra.mxu0 %v2777
        %3974 = vmatprep.subr.bf16.mxu0 %v2762
        %3975 = vmatpush1.bf16.msra.mxu0 %v2761
        %3976 = vmatprep.subr.bf16.mxu0 %v2746
        %3977 = vmatpush1.bf16.msra.mxu0 %v2745
        %3978 = vmatprep.subr.bf16.mxu0 %v2730
        %3979 = vmatpush1.bf16.msra.mxu0 %v2729
        %3980 = vmatprep.subr.bf16.mxu0 %v2714
        %3981 = vmatpush1.bf16.msra.mxu0 %v2713
        %3982 = vmatprep.subr.bf16.mxu0 %v2698
        %3983 = vmatpush1.bf16.msra.mxu0 %v2697
        %3984 = vmatprep.subr.bf16.mxu0 %v2682
        %3985 = vmatpush1.bf16.msra.mxu0 %v2681
        %3986 = vmatprep.subr.bf16.mxu0 %v2922
        %3987 = vmatpush2.bf16.msra.mxu0 %v2921
        %3988 = vmatprep.subr.bf16.mxu0 %v2906
        %3989 = vmatpush2.bf16.msra.mxu0 %v2905
        %3990 = vmatprep.subr.bf16.mxu0 %v2890
        %3991 = vmatpush2.bf16.msra.mxu0 %v2889
        %3992 = vmatprep.subr.bf16.mxu0 %v2874
        %3993 = vmatpush2.bf16.msra.mxu0 %v2873
        %3994 = vmatprep.subr.bf16.mxu0 %v2858
        %3995 = vmatpush2.bf16.msra.mxu0 %v2857
        %3996 = vmatprep.subr.bf16.mxu0 %v2842
        %3997 = vmatpush2.bf16.msra.mxu0 %v2841
        %3998 = vmatprep.subr.bf16.mxu0 %v2826
        %3999 = vmatpush2.bf16.msra.mxu0 %v2825
        %4000 = vmatprep.subr.bf16.mxu0 %v2810
        %4001 = vmatpush2.bf16.msra.mxu0 %v2809
        %4002 = vmatprep.mubr.bf16.mxu0 %v872
        %4003 = vmatmul.mubr.bf16.gmra.mxu0 %v871
        %v4004 = vpop.f32.mrf.mxu0
        %v4005 = vadd.f32 %v3964, %v4004
        %v4006 = vpop.f32.mrf.mxu0
        %v4007 = vadd.f32 %v3966, %v4006
        %v4008 = vpop.f32.mrf.mxu0
        %v4009 = vpop.f32.mrf.mxu0
        %4010 = vdwg.mxu0
        %4011 = vmatprep.subr.bf16.mxu0 %v2540
        %4012 = vmatpush1.bf16.msra.mxu0 %v2539
        %4013 = vmatprep.subr.bf16.mxu0 %v2524
        %4014 = vmatpush1.bf16.msra.mxu0 %v2523
        %4015 = vmatprep.subr.bf16.mxu0 %v2508
        %4016 = vmatpush1.bf16.msra.mxu0 %v2507
        %4017 = vmatprep.subr.bf16.mxu0 %v2492
        %4018 = vmatpush1.bf16.msra.mxu0 %v2491
        %4019 = vmatprep.subr.bf16.mxu0 %v2476
        %4020 = vmatpush1.bf16.msra.mxu0 %v2475
        %4021 = vmatprep.subr.bf16.mxu0 %v2460
        %4022 = vmatpush1.bf16.msra.mxu0 %v2459
        %4023 = vmatprep.subr.bf16.mxu0 %v2444
        %4024 = vmatpush1.bf16.msra.mxu0 %v2443
        %4025 = vmatprep.subr.bf16.mxu0 %v2428
        %4026 = vmatpush1.bf16.msra.mxu0 %v2427
        %4027 = vmatprep.subr.bf16.mxu0 %v2668
        %4028 = vmatpush2.bf16.msra.mxu0 %v2667
        %4029 = vmatprep.subr.bf16.mxu0 %v2652
        %4030 = vmatpush2.bf16.msra.mxu0 %v2651
        %4031 = vmatprep.subr.bf16.mxu0 %v2636
        %4032 = vmatpush2.bf16.msra.mxu0 %v2635
        %4033 = vmatprep.subr.bf16.mxu0 %v2620
        %4034 = vmatpush2.bf16.msra.mxu0 %v2619
        %4035 = vmatprep.subr.bf16.mxu0 %v2604
        %4036 = vmatpush2.bf16.msra.mxu0 %v2603
        %4037 = vmatprep.subr.bf16.mxu0 %v2588
        %4038 = vmatpush2.bf16.msra.mxu0 %v2587
        %4039 = vmatprep.subr.bf16.mxu0 %v2572
        %4040 = vmatpush2.bf16.msra.mxu0 %v2571
        %4041 = vmatprep.subr.bf16.mxu0 %v2556
        %4042 = vmatpush2.bf16.msra.mxu0 %v2555
        %4043 = vmatprep.mubr.bf16.mxu0 %v870
        %4044 = vmatmul.mubr.bf16.gmra.mxu0 %v869
        %v4045 = vpop.f32.mrf.mxu0
        %v4046 = vadd.f32 0.0, %v4045
        %v4047 = vpop.f32.mrf.mxu0
        %v4048 = vadd.f32 0.0, %v4047
        %v4049 = vpop.f32.mrf.mxu0
        %v4050 = vpop.f32.mrf.mxu0
        %4051 = vdwg.mxu0
        %4052 = vmatprep.subr.bf16.mxu0 %v2796
        %4053 = vmatpush1.bf16.msra.mxu0 %v2795
        %4054 = vmatprep.subr.bf16.mxu0 %v2780
        %4055 = vmatpush1.bf16.msra.mxu0 %v2779
        %4056 = vmatprep.subr.bf16.mxu0 %v2764
        %4057 = vmatpush1.bf16.msra.mxu0 %v2763
        %4058 = vmatprep.subr.bf16.mxu0 %v2748
        %4059 = vmatpush1.bf16.msra.mxu0 %v2747
        %4060 = vmatprep.subr.bf16.mxu0 %v2732
        %4061 = vmatpush1.bf16.msra.mxu0 %v2731
        %4062 = vmatprep.subr.bf16.mxu0 %v2716
        %4063 = vmatpush1.bf16.msra.mxu0 %v2715
        %4064 = vmatprep.subr.bf16.mxu0 %v2700
        %4065 = vmatpush1.bf16.msra.mxu0 %v2699
        %4066 = vmatprep.subr.bf16.mxu0 %v2684
        %4067 = vmatpush1.bf16.msra.mxu0 %v2683
        %4068 = vmatprep.subr.bf16.mxu0 %v2924
        %4069 = vmatpush2.bf16.msra.mxu0 %v2923
        %4070 = vmatprep.subr.bf16.mxu0 %v2908
        %4071 = vmatpush2.bf16.msra.mxu0 %v2907
        %4072 = vmatprep.subr.bf16.mxu0 %v2892
        %4073 = vmatpush2.bf16.msra.mxu0 %v2891
        %4074 = vmatprep.subr.bf16.mxu0 %v2876
        %4075 = vmatpush2.bf16.msra.mxu0 %v2875
        %4076 = vmatprep.subr.bf16.mxu0 %v2860
        %4077 = vmatpush2.bf16.msra.mxu0 %v2859
        %4078 = vmatprep.subr.bf16.mxu0 %v2844
        %4079 = vmatpush2.bf16.msra.mxu0 %v2843
        %4080 = vmatprep.subr.bf16.mxu0 %v2828
        %4081 = vmatpush2.bf16.msra.mxu0 %v2827
        %4082 = vmatprep.subr.bf16.mxu0 %v2812
        %4083 = vmatpush2.bf16.msra.mxu0 %v2811
        %4084 = vmatprep.mubr.bf16.mxu0 %v872
        %4085 = vmatmul.mubr.bf16.gmra.mxu0 %v871
        %v4086 = vpop.f32.mrf.mxu0
        %v4087 = vadd.f32 %v4046, %v4086
        %v4088 = vpop.f32.mrf.mxu0
        %v4089 = vadd.f32 %v4048, %v4088
        %v4090 = vpop.f32.mrf.mxu0
        %v4091 = vpop.f32.mrf.mxu0
        %4092 = vdwg.mxu0
        %v4093 = vadd.f32 %v333, %v3513
        %v4094 = vadd.f32 %v334, %v3515
        %v4095 = vadd.f32 %v335, %v3595
        %v4096 = vadd.f32 %v336, %v3597
        %v4097 = vadd.f32 %v337, %v3677
        %v4098 = vadd.f32 %v338, %v3679
        %v4099 = vadd.f32 %v339, %v3759
        %v4100 = vadd.f32 %v340, %v3761
        %v4101 = vadd.f32 %v341, %v3841
        %v4102 = vadd.f32 %v342, %v3843
        %v4103 = vadd.f32 %v343, %v3923
        %v4104 = vadd.f32 %v344, %v3925
        %v4105 = vadd.f32 %v345, %v4005
        %v4106 = vadd.f32 %v346, %v4007
        %v4107 = vadd.f32 %v347, %v4087
        %v4108 = vadd.f32 %v348, %v4089
        %4109 = vst [vmem:[#allocation2] sm:$0xff] %v4093
        %4110 = vst [vmem:[#allocation2 + $0x8] sm:$0xff] %v4094
        %4111 = vst [vmem:[#allocation2 + $0x10] sm:$0xff] %v4095
        %4112 = vst [vmem:[#allocation2 + $0x18] sm:$0xff] %v4096
        %4113 = vst [vmem:[#allocation2 + $0x20] sm:$0xff] %v4097
        %4114 = vst [vmem:[#allocation2 + $0x28] sm:$0xff] %v4098
        %4115 = vst [vmem:[#allocation2 + $0x30] sm:$0xff] %v4099
        %4116 = vst [vmem:[#allocation2 + $0x38] sm:$0xff] %v4100
        %4117 = vst [vmem:[#allocation2 + $0x40] sm:$0xff] %v4101
        %4118 = vst [vmem:[#allocation2 + $0x48] sm:$0xff] %v4102
        %4119 = vst [vmem:[#allocation2 + $0x50] sm:$0xff] %v4103
        %4120 = vst [vmem:[#allocation2 + $0x58] sm:$0xff] %v4104
        %4121 = vst [vmem:[#allocation2 + $0x60] sm:$0xff] %v4105
        %4122 = vst [vmem:[#allocation2 + $0x68] sm:$0xff] %v4106
        %4123 = vst [vmem:[#allocation2 + $0x70] sm:$0xff] %v4107
        %4124 = vst [vmem:[#allocation2 + $0x78] sm:$0xff] %v4108
        %p4125 = scmp.eq.s32.totalorder %s25, 1
        // Predicated region
        $region65: #{tpu_custom_call.1} parent=39 // pred_check
          %p4126 = pneg %p4125
        $region66: #{tpu_custom_call.1} parent=39 // pred_check_branch
          %4128 = sbr.rel (%p4126) target = $region68
        $region67: #{tpu_custom_call.1} parent=39 // pred_region
          %v4129 = vld [vmem:[#allocation2] sm:$0xff]
          %v4130 = vld [vmem:[#allocation2 + $0x8] sm:$0xff]
          %v4131 = vld [vmem:[#allocation2 + $0x10] sm:$0xff]
          %v4132 = vld [vmem:[#allocation2 + $0x18] sm:$0xff]
          %v4133 = vld [vmem:[#allocation2 + $0x20] sm:$0xff]
          %v4134 = vld [vmem:[#allocation2 + $0x28] sm:$0xff]
          %v4135 = vld [vmem:[#allocation2 + $0x30] sm:$0xff]
          %v4136 = vld [vmem:[#allocation2 + $0x38] sm:$0xff]
          %v4137 = vld [vmem:[#allocation2 + $0x40] sm:$0xff]
          %v4138 = vld [vmem:[#allocation2 + $0x48] sm:$0xff]
          %v4139 = vld [vmem:[#allocation2 + $0x50] sm:$0xff]
          %v4140 = vld [vmem:[#allocation2 + $0x58] sm:$0xff]
          %v4141 = vld [vmem:[#allocation2 + $0x60] sm:$0xff]
          %v4142 = vld [vmem:[#allocation2 + $0x68] sm:$0xff]
          %v4143 = vld [vmem:[#allocation2 + $0x70] sm:$0xff]
          %v4144 = vld [vmem:[#allocation2 + $0x78] sm:$0xff]
          %v4145 = vld [vmem:[#allocation9] sm:$0xff]
          %v4146 = vld [vmem:[#allocation9 + $0x8] sm:$0xff]
          %v4147 = vld [vmem:[#allocation9 + $0x10] sm:$0xff]
          %v4148 = vld [vmem:[#allocation9 + $0x18] sm:$0xff]
          %v4149 = vld [vmem:[#allocation9 + $0x20] sm:$0xff]
          %v4150 = vld [vmem:[#allocation9 + $0x28] sm:$0xff]
          %v4151 = vld [vmem:[#allocation9 + $0x30] sm:$0xff]
          %v4152 = vld [vmem:[#allocation9 + $0x38] sm:$0xff]
          %v4153 = vld [vmem:[#allocation9 + $0x40] sm:$0xff]
          %v4154 = vld [vmem:[#allocation9 + $0x48] sm:$0xff]
          %v4155 = vld [vmem:[#allocation9 + $0x50] sm:$0xff]
          %v4156 = vld [vmem:[#allocation9 + $0x58] sm:$0xff]
          %v4157 = vld [vmem:[#allocation9 + $0x60] sm:$0xff]
          %v4158 = vld [vmem:[#allocation9 + $0x68] sm:$0xff]
          %v4159 = vld [vmem:[#allocation9 + $0x70] sm:$0xff]
          %v4160 = vld [vmem:[#allocation9 + $0x78] sm:$0xff]
          %v4161 = vld [vmem:[#allocation9 + $0x80] sm:$0xff]
          %v4162 = vld [vmem:[#allocation9 + $0x88] sm:$0xff]
          %v4163 = vld [vmem:[#allocation9 + $0x90] sm:$0xff]
          %v4164 = vld [vmem:[#allocation9 + $0x98] sm:$0xff]
          %v4165 = vld [vmem:[#allocation9 + $0xa0] sm:$0xff]
          %v4166 = vld [vmem:[#allocation9 + $0xa8] sm:$0xff]
          %v4167 = vld [vmem:[#allocation9 + $0xb0] sm:$0xff]
          %v4168 = vld [vmem:[#allocation9 + $0xb8] sm:$0xff]
          %v4169 = vld [vmem:[#allocation9 + $0xc0] sm:$0xff]
          %v4170 = vld [vmem:[#allocation9 + $0xc8] sm:$0xff]
          %v4171 = vld [vmem:[#allocation9 + $0xd0] sm:$0xff]
          %v4172 = vld [vmem:[#allocation9 + $0xd8] sm:$0xff]
          %v4173 = vld [vmem:[#allocation9 + $0xe0] sm:$0xff]
          %v4174 = vld [vmem:[#allocation9 + $0xe8] sm:$0xff]
          %v4175 = vld [vmem:[#allocation9 + $0xf0] sm:$0xff]
          %v4176 = vld [vmem:[#allocation9 + $0xf8] sm:$0xff]
          %v4177 = vld [vmem:[#allocation9 + $0x100] sm:$0xff]
          %v4178 = vld [vmem:[#allocation9 + $0x108] sm:$0xff]
          %v4179 = vld [vmem:[#allocation9 + $0x110] sm:$0xff]
          %v4180 = vld [vmem:[#allocation9 + $0x118] sm:$0xff]
          %v4181 = vld [vmem:[#allocation9 + $0x120] sm:$0xff]
          %v4182 = vld [vmem:[#allocation9 + $0x128] sm:$0xff]
          %v4183 = vld [vmem:[#allocation9 + $0x130] sm:$0xff]
          %v4184 = vld [vmem:[#allocation9 + $0x138] sm:$0xff]
          %v4185 = vld [vmem:[#allocation9 + $0x140] sm:$0xff]
          %v4186 = vld [vmem:[#allocation9 + $0x148] sm:$0xff]
          %v4187 = vld [vmem:[#allocation9 + $0x150] sm:$0xff]
          %v4188 = vld [vmem:[#allocation9 + $0x158] sm:$0xff]
          %v4189 = vld [vmem:[#allocation9 + $0x160] sm:$0xff]
          %v4190 = vld [vmem:[#allocation9 + $0x168] sm:$0xff]
          %v4191 = vld [vmem:[#allocation9 + $0x170] sm:$0xff]
          %v4192 = vld [vmem:[#allocation9 + $0x178] sm:$0xff]
          %v4193 = vld [vmem:[#allocation9 + $0x180] sm:$0xff]
          %v4194 = vld [vmem:[#allocation9 + $0x188] sm:$0xff]
          %v4195 = vld [vmem:[#allocation9 + $0x190] sm:$0xff]
          %v4196 = vld [vmem:[#allocation9 + $0x198] sm:$0xff]
          %v4197 = vld [vmem:[#allocation9 + $0x1a0] sm:$0xff]
          %v4198 = vld [vmem:[#allocation9 + $0x1a8] sm:$0xff]
          %v4199 = vld [vmem:[#allocation9 + $0x1b0] sm:$0xff]
          %v4200 = vld [vmem:[#allocation9 + $0x1b8] sm:$0xff]
          %v4201 = vld [vmem:[#allocation9 + $0x1c0] sm:$0xff]
          %v4202 = vld [vmem:[#allocation9 + $0x1c8] sm:$0xff]
          %v4203 = vld [vmem:[#allocation9 + $0x1d0] sm:$0xff]
          %v4204 = vld [vmem:[#allocation9 + $0x1d8] sm:$0xff]
          %v4205 = vld [vmem:[#allocation9 + $0x1e0] sm:$0xff]
          %v4206 = vld [vmem:[#allocation9 + $0x1e8] sm:$0xff]
          %v4207 = vld [vmem:[#allocation9 + $0x1f0] sm:$0xff]
          %v4208 = vld [vmem:[#allocation9 + $0x1f8] sm:$0xff]
          %v4209 = vld [vmem:[#allocation9 + $0x200] sm:$0xff]
          %v4210 = vld [vmem:[#allocation9 + $0x208] sm:$0xff]
          %v4211 = vld [vmem:[#allocation9 + $0x210] sm:$0xff]
          %v4212 = vld [vmem:[#allocation9 + $0x218] sm:$0xff]
          %v4213 = vld [vmem:[#allocation9 + $0x220] sm:$0xff]
          %v4214 = vld [vmem:[#allocation9 + $0x228] sm:$0xff]
          %v4215 = vld [vmem:[#allocation9 + $0x230] sm:$0xff]
          %v4216 = vld [vmem:[#allocation9 + $0x238] sm:$0xff]
          %v4217 = vld [vmem:[#allocation9 + $0x240] sm:$0xff]
          %v4218 = vld [vmem:[#allocation9 + $0x248] sm:$0xff]
          %v4219 = vld [vmem:[#allocation9 + $0x250] sm:$0xff]
          %v4220 = vld [vmem:[#allocation9 + $0x258] sm:$0xff]
          %v4221 = vld [vmem:[#allocation9 + $0x260] sm:$0xff]
          %v4222 = vld [vmem:[#allocation9 + $0x268] sm:$0xff]
          %v4223 = vld [vmem:[#allocation9 + $0x270] sm:$0xff]
          %v4224 = vld [vmem:[#allocation9 + $0x278] sm:$0xff]
          %v4225 = vld [vmem:[#allocation9 + $0x280] sm:$0xff]
          %v4226 = vld [vmem:[#allocation9 + $0x288] sm:$0xff]
          %v4227 = vld [vmem:[#allocation9 + $0x290] sm:$0xff]
          %v4228 = vld [vmem:[#allocation9 + $0x298] sm:$0xff]
          %v4229 = vld [vmem:[#allocation9 + $0x2a0] sm:$0xff]
          %v4230 = vld [vmem:[#allocation9 + $0x2a8] sm:$0xff]
          %v4231 = vld [vmem:[#allocation9 + $0x2b0] sm:$0xff]
          %v4232 = vld [vmem:[#allocation9 + $0x2b8] sm:$0xff]
          %v4233 = vld [vmem:[#allocation9 + $0x2c0] sm:$0xff]
          %v4234 = vld [vmem:[#allocation9 + $0x2c8] sm:$0xff]
          %v4235 = vld [vmem:[#allocation9 + $0x2d0] sm:$0xff]
          %v4236 = vld [vmem:[#allocation9 + $0x2d8] sm:$0xff]
          %v4237 = vld [vmem:[#allocation9 + $0x2e0] sm:$0xff]
          %v4238 = vld [vmem:[#allocation9 + $0x2e8] sm:$0xff]
          %v4239 = vld [vmem:[#allocation9 + $0x2f0] sm:$0xff]
          %v4240 = vld [vmem:[#allocation9 + $0x2f8] sm:$0xff]
          %v4241 = vld [vmem:[#allocation9 + $0x300] sm:$0xff]
          %v4242 = vld [vmem:[#allocation9 + $0x308] sm:$0xff]
          %v4243 = vld [vmem:[#allocation9 + $0x310] sm:$0xff]
          %v4244 = vld [vmem:[#allocation9 + $0x318] sm:$0xff]
          %v4245 = vld [vmem:[#allocation9 + $0x320] sm:$0xff]
          %v4246 = vld [vmem:[#allocation9 + $0x328] sm:$0xff]
          %v4247 = vld [vmem:[#allocation9 + $0x330] sm:$0xff]
          %v4248 = vld [vmem:[#allocation9 + $0x338] sm:$0xff]
          %v4249 = vld [vmem:[#allocation9 + $0x340] sm:$0xff]
          %v4250 = vld [vmem:[#allocation9 + $0x348] sm:$0xff]
          %v4251 = vld [vmem:[#allocation9 + $0x350] sm:$0xff]
          %v4252 = vld [vmem:[#allocation9 + $0x358] sm:$0xff]
          %v4253 = vld [vmem:[#allocation9 + $0x360] sm:$0xff]
          %v4254 = vld [vmem:[#allocation9 + $0x368] sm:$0xff]
          %v4255 = vld [vmem:[#allocation9 + $0x370] sm:$0xff]
          %v4256 = vld [vmem:[#allocation9 + $0x378] sm:$0xff]
          %v4257 = vld [vmem:[#allocation9 + $0x380] sm:$0xff]
          %v4258 = vld [vmem:[#allocation9 + $0x388] sm:$0xff]
          %v4259 = vld [vmem:[#allocation9 + $0x390] sm:$0xff]
          %v4260 = vld [vmem:[#allocation9 + $0x398] sm:$0xff]
          %v4261 = vld [vmem:[#allocation9 + $0x3a0] sm:$0xff]
          %v4262 = vld [vmem:[#allocation9 + $0x3a8] sm:$0xff]
          %v4263 = vld [vmem:[#allocation9 + $0x3b0] sm:$0xff]
          %v4264 = vld [vmem:[#allocation9 + $0x3b8] sm:$0xff]
          %v4265 = vld [vmem:[#allocation9 + $0x3c0] sm:$0xff]
          %v4266 = vld [vmem:[#allocation9 + $0x3c8] sm:$0xff]
          %v4267 = vld [vmem:[#allocation9 + $0x3d0] sm:$0xff]
          %v4268 = vld [vmem:[#allocation9 + $0x3d8] sm:$0xff]
          %v4269 = vld [vmem:[#allocation9 + $0x3e0] sm:$0xff]
          %v4270 = vld [vmem:[#allocation9 + $0x3e8] sm:$0xff]
          %v4271 = vld [vmem:[#allocation9 + $0x3f0] sm:$0xff]
          %v4272 = vld [vmem:[#allocation9 + $0x3f8] sm:$0xff]
          %v4273 = vld [vmem:[#allocation9 + $0x400] sm:$0xff]
          %v4274 = vld [vmem:[#allocation9 + $0x408] sm:$0xff]
          %v4275 = vld [vmem:[#allocation9 + $0x410] sm:$0xff]
          %v4276 = vld [vmem:[#allocation9 + $0x418] sm:$0xff]
          %v4277 = vld [vmem:[#allocation9 + $0x420] sm:$0xff]
          %v4278 = vld [vmem:[#allocation9 + $0x428] sm:$0xff]
          %v4279 = vld [vmem:[#allocation9 + $0x430] sm:$0xff]
          %v4280 = vld [vmem:[#allocation9 + $0x438] sm:$0xff]
          %v4281 = vld [vmem:[#allocation9 + $0x440] sm:$0xff]
          %v4282 = vld [vmem:[#allocation9 + $0x448] sm:$0xff]
          %v4283 = vld [vmem:[#allocation9 + $0x450] sm:$0xff]
          %v4284 = vld [vmem:[#allocation9 + $0x458] sm:$0xff]
          %v4285 = vld [vmem:[#allocation9 + $0x460] sm:$0xff]
          %v4286 = vld [vmem:[#allocation9 + $0x468] sm:$0xff]
          %v4287 = vld [vmem:[#allocation9 + $0x470] sm:$0xff]
          %v4288 = vld [vmem:[#allocation9 + $0x478] sm:$0xff]
          %v4289 = vld [vmem:[#allocation9 + $0x480] sm:$0xff]
          %v4290 = vld [vmem:[#allocation9 + $0x488] sm:$0xff]
          %v4291 = vld [vmem:[#allocation9 + $0x490] sm:$0xff]
          %v4292 = vld [vmem:[#allocation9 + $0x498] sm:$0xff]
          %v4293 = vld [vmem:[#allocation9 + $0x4a0] sm:$0xff]
          %v4294 = vld [vmem:[#allocation9 + $0x4a8] sm:$0xff]
          %v4295 = vld [vmem:[#allocation9 + $0x4b0] sm:$0xff]
          %v4296 = vld [vmem:[#allocation9 + $0x4b8] sm:$0xff]
          %v4297 = vld [vmem:[#allocation9 + $0x4c0] sm:$0xff]
          %v4298 = vld [vmem:[#allocation9 + $0x4c8] sm:$0xff]
          %v4299 = vld [vmem:[#allocation9 + $0x4d0] sm:$0xff]
          %v4300 = vld [vmem:[#allocation9 + $0x4d8] sm:$0xff]
          %v4301 = vld [vmem:[#allocation9 + $0x4e0] sm:$0xff]
          %v4302 = vld [vmem:[#allocation9 + $0x4e8] sm:$0xff]
          %v4303 = vld [vmem:[#allocation9 + $0x4f0] sm:$0xff]
          %v4304 = vld [vmem:[#allocation9 + $0x4f8] sm:$0xff]
          %v4305 = vld [vmem:[#allocation9 + $0x500] sm:$0xff]
          %v4306 = vld [vmem:[#allocation9 + $0x508] sm:$0xff]
          %v4307 = vld [vmem:[#allocation9 + $0x510] sm:$0xff]
          %v4308 = vld [vmem:[#allocation9 + $0x518] sm:$0xff]
          %v4309 = vld [vmem:[#allocation9 + $0x520] sm:$0xff]
          %v4310 = vld [vmem:[#allocation9 + $0x528] sm:$0xff]
          %v4311 = vld [vmem:[#allocation9 + $0x530] sm:$0xff]
          %v4312 = vld [vmem:[#allocation9 + $0x538] sm:$0xff]
          %v4313 = vld [vmem:[#allocation9 + $0x540] sm:$0xff]
          %v4314 = vld [vmem:[#allocation9 + $0x548] sm:$0xff]
          %v4315 = vld [vmem:[#allocation9 + $0x550] sm:$0xff]
          %v4316 = vld [vmem:[#allocation9 + $0x558] sm:$0xff]
          %v4317 = vld [vmem:[#allocation9 + $0x560] sm:$0xff]
          %v4318 = vld [vmem:[#allocation9 + $0x568] sm:$0xff]
          %v4319 = vld [vmem:[#allocation9 + $0x570] sm:$0xff]
          %v4320 = vld [vmem:[#allocation9 + $0x578] sm:$0xff]
          %v4321 = vld [vmem:[#allocation9 + $0x580] sm:$0xff]
          %v4322 = vld [vmem:[#allocation9 + $0x588] sm:$0xff]
          %v4323 = vld [vmem:[#allocation9 + $0x590] sm:$0xff]
          %v4324 = vld [vmem:[#allocation9 + $0x598] sm:$0xff]
          %v4325 = vld [vmem:[#allocation9 + $0x5a0] sm:$0xff]
          %v4326 = vld [vmem:[#allocation9 + $0x5a8] sm:$0xff]
          %v4327 = vld [vmem:[#allocation9 + $0x5b0] sm:$0xff]
          %v4328 = vld [vmem:[#allocation9 + $0x5b8] sm:$0xff]
          %v4329 = vld [vmem:[#allocation9 + $0x5c0] sm:$0xff]
          %v4330 = vld [vmem:[#allocation9 + $0x5c8] sm:$0xff]
          %v4331 = vld [vmem:[#allocation9 + $0x5d0] sm:$0xff]
          %v4332 = vld [vmem:[#allocation9 + $0x5d8] sm:$0xff]
          %v4333 = vld [vmem:[#allocation9 + $0x5e0] sm:$0xff]
          %v4334 = vld [vmem:[#allocation9 + $0x5e8] sm:$0xff]
          %v4335 = vld [vmem:[#allocation9 + $0x5f0] sm:$0xff]
          %v4336 = vld [vmem:[#allocation9 + $0x5f8] sm:$0xff]
          %v4337 = vld [vmem:[#allocation9 + $0x600] sm:$0xff]
          %v4338 = vld [vmem:[#allocation9 + $0x608] sm:$0xff]
          %v4339 = vld [vmem:[#allocation9 + $0x610] sm:$0xff]
          %v4340 = vld [vmem:[#allocation9 + $0x618] sm:$0xff]
          %v4341 = vld [vmem:[#allocation9 + $0x620] sm:$0xff]
          %v4342 = vld [vmem:[#allocation9 + $0x628] sm:$0xff]
          %v4343 = vld [vmem:[#allocation9 + $0x630] sm:$0xff]
          %v4344 = vld [vmem:[#allocation9 + $0x638] sm:$0xff]
          %v4345 = vld [vmem:[#allocation9 + $0x640] sm:$0xff]
          %v4346 = vld [vmem:[#allocation9 + $0x648] sm:$0xff]
          %v4347 = vld [vmem:[#allocation9 + $0x650] sm:$0xff]
          %v4348 = vld [vmem:[#allocation9 + $0x658] sm:$0xff]
          %v4349 = vld [vmem:[#allocation9 + $0x660] sm:$0xff]
          %v4350 = vld [vmem:[#allocation9 + $0x668] sm:$0xff]
          %v4351 = vld [vmem:[#allocation9 + $0x670] sm:$0xff]
          %v4352 = vld [vmem:[#allocation9 + $0x678] sm:$0xff]
          %v4353 = vld [vmem:[#allocation9 + $0x680] sm:$0xff]
          %v4354 = vld [vmem:[#allocation9 + $0x688] sm:$0xff]
          %v4355 = vld [vmem:[#allocation9 + $0x690] sm:$0xff]
          %v4356 = vld [vmem:[#allocation9 + $0x698] sm:$0xff]
          %v4357 = vld [vmem:[#allocation9 + $0x6a0] sm:$0xff]
          %v4358 = vld [vmem:[#allocation9 + $0x6a8] sm:$0xff]
          %v4359 = vld [vmem:[#allocation9 + $0x6b0] sm:$0xff]
          %v4360 = vld [vmem:[#allocation9 + $0x6b8] sm:$0xff]
          %v4361 = vld [vmem:[#allocation9 + $0x6c0] sm:$0xff]
          %v4362 = vld [vmem:[#allocation9 + $0x6c8] sm:$0xff]
          %v4363 = vld [vmem:[#allocation9 + $0x6d0] sm:$0xff]
          %v4364 = vld [vmem:[#allocation9 + $0x6d8] sm:$0xff]
          %v4365 = vld [vmem:[#allocation9 + $0x6e0] sm:$0xff]
          %v4366 = vld [vmem:[#allocation9 + $0x6e8] sm:$0xff]
          %v4367 = vld [vmem:[#allocation9 + $0x6f0] sm:$0xff]
          %v4368 = vld [vmem:[#allocation9 + $0x6f8] sm:$0xff]
          %v4369 = vld [vmem:[#allocation9 + $0x700] sm:$0xff]
          %v4370 = vld [vmem:[#allocation9 + $0x708] sm:$0xff]
          %v4371 = vld [vmem:[#allocation9 + $0x710] sm:$0xff]
          %v4372 = vld [vmem:[#allocation9 + $0x718] sm:$0xff]
          %v4373 = vld [vmem:[#allocation9 + $0x720] sm:$0xff]
          %v4374 = vld [vmem:[#allocation9 + $0x728] sm:$0xff]
          %v4375 = vld [vmem:[#allocation9 + $0x730] sm:$0xff]
          %v4376 = vld [vmem:[#allocation9 + $0x738] sm:$0xff]
          %v4377 = vld [vmem:[#allocation9 + $0x740] sm:$0xff]
          %v4378 = vld [vmem:[#allocation9 + $0x748] sm:$0xff]
          %v4379 = vld [vmem:[#allocation9 + $0x750] sm:$0xff]
          %v4380 = vld [vmem:[#allocation9 + $0x758] sm:$0xff]
          %v4381 = vld [vmem:[#allocation9 + $0x760] sm:$0xff]
          %v4382 = vld [vmem:[#allocation9 + $0x768] sm:$0xff]
          %v4383 = vld [vmem:[#allocation9 + $0x770] sm:$0xff]
          %v4384 = vld [vmem:[#allocation9 + $0x778] sm:$0xff]
          %v4385 = vld [vmem:[#allocation9 + $0x780] sm:$0xff]
          %v4386 = vld [vmem:[#allocation9 + $0x788] sm:$0xff]
          %v4387 = vld [vmem:[#allocation9 + $0x790] sm:$0xff]
          %v4388 = vld [vmem:[#allocation9 + $0x798] sm:$0xff]
          %v4389 = vld [vmem:[#allocation9 + $0x7a0] sm:$0xff]
          %v4390 = vld [vmem:[#allocation9 + $0x7a8] sm:$0xff]
          %v4391 = vld [vmem:[#allocation9 + $0x7b0] sm:$0xff]
          %v4392 = vld [vmem:[#allocation9 + $0x7b8] sm:$0xff]
          %v4393 = vld [vmem:[#allocation9 + $0x7c0] sm:$0xff]
          %v4394 = vld [vmem:[#allocation9 + $0x7c8] sm:$0xff]
          %v4395 = vld [vmem:[#allocation9 + $0x7d0] sm:$0xff]
          %v4396 = vld [vmem:[#allocation9 + $0x7d8] sm:$0xff]
          %v4397 = vld [vmem:[#allocation9 + $0x7e0] sm:$0xff]
          %v4398 = vld [vmem:[#allocation9 + $0x7e8] sm:$0xff]
          %v4399 = vld [vmem:[#allocation9 + $0x7f0] sm:$0xff]
          %v4400 = vld [vmem:[#allocation9 + $0x7f8] sm:$0xff]
          %4401 = vmatprep.subr.mxu0 0.0
          %4402 = vmatpush1.msra.mxu0 %v4160
          %4403 = vmatprep.subr.mxu0 0.0
          %4404 = vmatpush1.msra.mxu0 %v4159
          %4405 = vmatprep.subr.mxu0 0.0
          %4406 = vmatpush1.msra.mxu0 %v4158
          %4407 = vmatprep.subr.mxu0 0.0
          %4408 = vmatpush1.msra.mxu0 %v4157
          %4409 = vmatprep.subr.mxu0 0.0
          %4410 = vmatpush1.msra.mxu0 %v4156
          %4411 = vmatprep.subr.mxu0 0.0
          %4412 = vmatpush1.msra.mxu0 %v4155
          %4413 = vmatprep.subr.mxu0 0.0
          %4414 = vmatpush1.msra.mxu0 %v4154
          %4415 = vmatprep.subr.mxu0 0.0
          %4416 = vmatpush1.msra.mxu0 %v4153
          %4417 = vmatprep.subr.mxu0 0.0
          %4418 = vmatpush1.msra.mxu0 %v4152
          %4419 = vmatprep.subr.mxu0 0.0
          %4420 = vmatpush1.msra.mxu0 %v4151
          %4421 = vmatprep.subr.mxu0 0.0
          %4422 = vmatpush1.msra.mxu0 %v4150
          %4423 = vmatprep.subr.mxu0 0.0
          %4424 = vmatpush1.msra.mxu0 %v4149
          %4425 = vmatprep.subr.mxu0 0.0
          %4426 = vmatpush1.msra.mxu0 %v4148
          %4427 = vmatprep.subr.mxu0 0.0
          %4428 = vmatpush1.msra.mxu0 %v4147
          %4429 = vmatprep.subr.mxu0 0.0
          %4430 = vmatpush1.msra.mxu0 %v4146
          %4431 = vmatprep.subr.mxu0 0.0
          %4432 = vmatpush1.msra.mxu0 %v4145
          %4433 = vmatprep.subr.mxu0 0.0
          %4434 = vmatpush2.msra.mxu0 %v4176
          %4435 = vmatprep.subr.mxu0 0.0
          %4436 = vmatpush2.msra.mxu0 %v4175
          %4437 = vmatprep.subr.mxu0 0.0
          %4438 = vmatpush2.msra.mxu0 %v4174
          %4439 = vmatprep.subr.mxu0 0.0
          %4440 = vmatpush2.msra.mxu0 %v4173
          %4441 = vmatprep.subr.mxu0 0.0
          %4442 = vmatpush2.msra.mxu0 %v4172
          %4443 = vmatprep.subr.mxu0 0.0
          %4444 = vmatpush2.msra.mxu0 %v4171
          %4445 = vmatprep.subr.mxu0 0.0
          %4446 = vmatpush2.msra.mxu0 %v4170
          %4447 = vmatprep.subr.mxu0 0.0
          %4448 = vmatpush2.msra.mxu0 %v4169
          %4449 = vmatprep.subr.mxu0 0.0
          %4450 = vmatpush2.msra.mxu0 %v4168
          %4451 = vmatprep.subr.mxu0 0.0
          %4452 = vmatpush2.msra.mxu0 %v4167
          %4453 = vmatprep.subr.mxu0 0.0
          %4454 = vmatpush2.msra.mxu0 %v4166
          %4455 = vmatprep.subr.mxu0 0.0
          %4456 = vmatpush2.msra.mxu0 %v4165
          %4457 = vmatprep.subr.mxu0 0.0
          %4458 = vmatpush2.msra.mxu0 %v4164
          %4459 = vmatprep.subr.mxu0 0.0
          %4460 = vmatpush2.msra.mxu0 %v4163
          %4461 = vmatprep.subr.mxu0 0.0
          %4462 = vmatpush2.msra.mxu0 %v4162
          %4463 = vmatprep.subr.mxu0 0.0
          %4464 = vmatpush2.msra.mxu0 %v4161
          %4465 = vmatprep.mubr.f32.mxu0 %v4130
          %4466 = vmatmul.mubr.f32.gmra.mxu0 %v4129
          %v4467 = vpop.f32.mrf.mxu0
          %v4468 = vadd.f32 0.0, %v4467
          %v4469 = vpop.f32.mrf.mxu0
          %4470 = vdwg.mxu0
          %4471 = vmatprep.subr.mxu0 0.0
          %4472 = vmatpush1.msra.mxu0 %v4192
          %4473 = vmatprep.subr.mxu0 0.0
          %4474 = vmatpush1.msra.mxu0 %v4191
          %4475 = vmatprep.subr.mxu0 0.0
          %4476 = vmatpush1.msra.mxu0 %v4190
          %4477 = vmatprep.subr.mxu0 0.0
          %4478 = vmatpush1.msra.mxu0 %v4189
          %4479 = vmatprep.subr.mxu0 0.0
          %4480 = vmatpush1.msra.mxu0 %v4188
          %4481 = vmatprep.subr.mxu0 0.0
          %4482 = vmatpush1.msra.mxu0 %v4187
          %4483 = vmatprep.subr.mxu0 0.0
          %4484 = vmatpush1.msra.mxu0 %v4186
          %4485 = vmatprep.subr.mxu0 0.0
          %4486 = vmatpush1.msra.mxu0 %v4185
          %4487 = vmatprep.subr.mxu0 0.0
          %4488 = vmatpush1.msra.mxu0 %v4184
          %4489 = vmatprep.subr.mxu0 0.0
          %4490 = vmatpush1.msra.mxu0 %v4183
          %4491 = vmatprep.subr.mxu0 0.0
          %4492 = vmatpush1.msra.mxu0 %v4182
          %4493 = vmatprep.subr.mxu0 0.0
          %4494 = vmatpush1.msra.mxu0 %v4181
          %4495 = vmatprep.subr.mxu0 0.0
          %4496 = vmatpush1.msra.mxu0 %v4180
          %4497 = vmatprep.subr.mxu0 0.0
          %4498 = vmatpush1.msra.mxu0 %v4179
          %4499 = vmatprep.subr.mxu0 0.0
          %4500 = vmatpush1.msra.mxu0 %v4178
          %4501 = vmatprep.subr.mxu0 0.0
          %4502 = vmatpush1.msra.mxu0 %v4177
          %4503 = vmatprep.subr.mxu0 0.0
          %4504 = vmatpush2.msra.mxu0 %v4208
          %4505 = vmatprep.subr.mxu0 0.0
          %4506 = vmatpush2.msra.mxu0 %v4207
          %4507 = vmatprep.subr.mxu0 0.0
          %4508 = vmatpush2.msra.mxu0 %v4206
          %4509 = vmatprep.subr.mxu0 0.0
          %4510 = vmatpush2.msra.mxu0 %v4205
          %4511 = vmatprep.subr.mxu0 0.0
          %4512 = vmatpush2.msra.mxu0 %v4204
          %4513 = vmatprep.subr.mxu0 0.0
          %4514 = vmatpush2.msra.mxu0 %v4203
          %4515 = vmatprep.subr.mxu0 0.0
          %4516 = vmatpush2.msra.mxu0 %v4202
          %4517 = vmatprep.subr.mxu0 0.0
          %4518 = vmatpush2.msra.mxu0 %v4201
          %4519 = vmatprep.subr.mxu0 0.0
          %4520 = vmatpush2.msra.mxu0 %v4200
          %4521 = vmatprep.subr.mxu0 0.0
          %4522 = vmatpush2.msra.mxu0 %v4199
          %4523 = vmatprep.subr.mxu0 0.0
          %4524 = vmatpush2.msra.mxu0 %v4198
          %4525 = vmatprep.subr.mxu0 0.0
          %4526 = vmatpush2.msra.mxu0 %v4197
          %4527 = vmatprep.subr.mxu0 0.0
          %4528 = vmatpush2.msra.mxu0 %v4196
          %4529 = vmatprep.subr.mxu0 0.0
          %4530 = vmatpush2.msra.mxu0 %v4195
          %4531 = vmatprep.subr.mxu0 0.0
          %4532 = vmatpush2.msra.mxu0 %v4194
          %4533 = vmatprep.subr.mxu0 0.0
          %4534 = vmatpush2.msra.mxu0 %v4193
          %4535 = vmatprep.mubr.f32.mxu0 %v4132
          %4536 = vmatmul.mubr.f32.gmra.mxu0 %v4131
          %v4537 = vpop.f32.mrf.mxu0
          %v4538 = vadd.f32 %v4468, %v4537
          %v4539 = vpop.f32.mrf.mxu0
          %4540 = vdwg.mxu0
          %4541 = vmatprep.subr.mxu0 0.0
          %4542 = vmatpush1.msra.mxu0 %v4224
          %4543 = vmatprep.subr.mxu0 0.0
          %4544 = vmatpush1.msra.mxu0 %v4223
          %4545 = vmatprep.subr.mxu0 0.0
          %4546 = vmatpush1.msra.mxu0 %v4222
          %4547 = vmatprep.subr.mxu0 0.0
          %4548 = vmatpush1.msra.mxu0 %v4221
          %4549 = vmatprep.subr.mxu0 0.0
          %4550 = vmatpush1.msra.mxu0 %v4220
          %4551 = vmatprep.subr.mxu0 0.0
          %4552 = vmatpush1.msra.mxu0 %v4219
          %4553 = vmatprep.subr.mxu0 0.0
          %4554 = vmatpush1.msra.mxu0 %v4218
          %4555 = vmatprep.subr.mxu0 0.0
          %4556 = vmatpush1.msra.mxu0 %v4217
          %4557 = vmatprep.subr.mxu0 0.0
          %4558 = vmatpush1.msra.mxu0 %v4216
          %4559 = vmatprep.subr.mxu0 0.0
          %4560 = vmatpush1.msra.mxu0 %v4215
          %4561 = vmatprep.subr.mxu0 0.0
          %4562 = vmatpush1.msra.mxu0 %v4214
          %4563 = vmatprep.subr.mxu0 0.0
          %4564 = vmatpush1.msra.mxu0 %v4213
          %4565 = vmatprep.subr.mxu0 0.0
          %4566 = vmatpush1.msra.mxu0 %v4212
          %4567 = vmatprep.subr.mxu0 0.0
          %4568 = vmatpush1.msra.mxu0 %v4211
          %4569 = vmatprep.subr.mxu0 0.0
          %4570 = vmatpush1.msra.mxu0 %v4210
          %4571 = vmatprep.subr.mxu0 0.0
          %4572 = vmatpush1.msra.mxu0 %v4209
          %4573 = vmatprep.subr.mxu0 0.0
          %4574 = vmatpush2.msra.mxu0 %v4240
          %4575 = vmatprep.subr.mxu0 0.0
          %4576 = vmatpush2.msra.mxu0 %v4239
          %4577 = vmatprep.subr.mxu0 0.0
          %4578 = vmatpush2.msra.mxu0 %v4238
          %4579 = vmatprep.subr.mxu0 0.0
          %4580 = vmatpush2.msra.mxu0 %v4237
          %4581 = vmatprep.subr.mxu0 0.0
          %4582 = vmatpush2.msra.mxu0 %v4236
          %4583 = vmatprep.subr.mxu0 0.0
          %4584 = vmatpush2.msra.mxu0 %v4235
          %4585 = vmatprep.subr.mxu0 0.0
          %4586 = vmatpush2.msra.mxu0 %v4234
          %4587 = vmatprep.subr.mxu0 0.0
          %4588 = vmatpush2.msra.mxu0 %v4233
          %4589 = vmatprep.subr.mxu0 0.0
          %4590 = vmatpush2.msra.mxu0 %v4232
          %4591 = vmatprep.subr.mxu0 0.0
          %4592 = vmatpush2.msra.mxu0 %v4231
          %4593 = vmatprep.subr.mxu0 0.0
          %4594 = vmatpush2.msra.mxu0 %v4230
          %4595 = vmatprep.subr.mxu0 0.0
          %4596 = vmatpush2.msra.mxu0 %v4229
          %4597 = vmatprep.subr.mxu0 0.0
          %4598 = vmatpush2.msra.mxu0 %v4228
          %4599 = vmatprep.subr.mxu0 0.0
          %4600 = vmatpush2.msra.mxu0 %v4227
          %4601 = vmatprep.subr.mxu0 0.0
          %4602 = vmatpush2.msra.mxu0 %v4226
          %4603 = vmatprep.subr.mxu0 0.0
          %4604 = vmatpush2.msra.mxu0 %v4225
          %4605 = vmatprep.mubr.f32.mxu0 %v4134
          %4606 = vmatmul.mubr.f32.gmra.mxu0 %v4133
          %v4607 = vpop.f32.mrf.mxu0
          %v4608 = vadd.f32 %v4538, %v4607
          %v4609 = vpop.f32.mrf.mxu0
          %4610 = vdwg.mxu0
          %4611 = vmatprep.subr.mxu0 0.0
          %4612 = vmatpush1.msra.mxu0 %v4256
          %4613 = vmatprep.subr.mxu0 0.0
          %4614 = vmatpush1.msra.mxu0 %v4255
          %4615 = vmatprep.subr.mxu0 0.0
          %4616 = vmatpush1.msra.mxu0 %v4254
          %4617 = vmatprep.subr.mxu0 0.0
          %4618 = vmatpush1.msra.mxu0 %v4253
          %4619 = vmatprep.subr.mxu0 0.0
          %4620 = vmatpush1.msra.mxu0 %v4252
          %4621 = vmatprep.subr.mxu0 0.0
          %4622 = vmatpush1.msra.mxu0 %v4251
          %4623 = vmatprep.subr.mxu0 0.0
          %4624 = vmatpush1.msra.mxu0 %v4250
          %4625 = vmatprep.subr.mxu0 0.0
          %4626 = vmatpush1.msra.mxu0 %v4249
          %4627 = vmatprep.subr.mxu0 0.0
          %4628 = vmatpush1.msra.mxu0 %v4248
          %4629 = vmatprep.subr.mxu0 0.0
          %4630 = vmatpush1.msra.mxu0 %v4247
          %4631 = vmatprep.subr.mxu0 0.0
          %4632 = vmatpush1.msra.mxu0 %v4246
          %4633 = vmatprep.subr.mxu0 0.0
          %4634 = vmatpush1.msra.mxu0 %v4245
          %4635 = vmatprep.subr.mxu0 0.0
          %4636 = vmatpush1.msra.mxu0 %v4244
          %4637 = vmatprep.subr.mxu0 0.0
          %4638 = vmatpush1.msra.mxu0 %v4243
          %4639 = vmatprep.subr.mxu0 0.0
          %4640 = vmatpush1.msra.mxu0 %v4242
          %4641 = vmatprep.subr.mxu0 0.0
          %4642 = vmatpush1.msra.mxu0 %v4241
          %4643 = vmatprep.subr.mxu0 0.0
          %4644 = vmatpush2.msra.mxu0 %v4272
          %4645 = vmatprep.subr.mxu0 0.0
          %4646 = vmatpush2.msra.mxu0 %v4271
          %4647 = vmatprep.subr.mxu0 0.0
          %4648 = vmatpush2.msra.mxu0 %v4270
          %4649 = vmatprep.subr.mxu0 0.0
          %4650 = vmatpush2.msra.mxu0 %v4269
          %4651 = vmatprep.subr.mxu0 0.0
          %4652 = vmatpush2.msra.mxu0 %v4268
          %4653 = vmatprep.subr.mxu0 0.0
          %4654 = vmatpush2.msra.mxu0 %v4267
          %4655 = vmatprep.subr.mxu0 0.0
          %4656 = vmatpush2.msra.mxu0 %v4266
          %4657 = vmatprep.subr.mxu0 0.0
          %4658 = vmatpush2.msra.mxu0 %v4265
          %4659 = vmatprep.subr.mxu0 0.0
          %4660 = vmatpush2.msra.mxu0 %v4264
          %4661 = vmatprep.subr.mxu0 0.0
          %4662 = vmatpush2.msra.mxu0 %v4263
          %4663 = vmatprep.subr.mxu0 0.0
          %4664 = vmatpush2.msra.mxu0 %v4262
          %4665 = vmatprep.subr.mxu0 0.0
          %4666 = vmatpush2.msra.mxu0 %v4261
          %4667 = vmatprep.subr.mxu0 0.0
          %4668 = vmatpush2.msra.mxu0 %v4260
          %4669 = vmatprep.subr.mxu0 0.0
          %4670 = vmatpush2.msra.mxu0 %v4259
          %4671 = vmatprep.subr.mxu0 0.0
          %4672 = vmatpush2.msra.mxu0 %v4258
          %4673 = vmatprep.subr.mxu0 0.0
          %4674 = vmatpush2.msra.mxu0 %v4257
          %4675 = vmatprep.mubr.f32.mxu0 %v4136
          %4676 = vmatmul.mubr.f32.gmra.mxu0 %v4135
          %v4677 = vpop.f32.mrf.mxu0
          %v4678 = vadd.f32 %v4608, %v4677
          %v4679 = vpop.f32.mrf.mxu0
          %4680 = vdwg.mxu0
          %4681 = vmatprep.subr.mxu0 0.0
          %4682 = vmatpush1.msra.mxu0 %v4288
          %4683 = vmatprep.subr.mxu0 0.0
          %4684 = vmatpush1.msra.mxu0 %v4287
          %4685 = vmatprep.subr.mxu0 0.0
          %4686 = vmatpush1.msra.mxu0 %v4286
          %4687 = vmatprep.subr.mxu0 0.0
          %4688 = vmatpush1.msra.mxu0 %v4285
          %4689 = vmatprep.subr.mxu0 0.0
          %4690 = vmatpush1.msra.mxu0 %v4284
          %4691 = vmatprep.subr.mxu0 0.0
          %4692 = vmatpush1.msra.mxu0 %v4283
          %4693 = vmatprep.subr.mxu0 0.0
          %4694 = vmatpush1.msra.mxu0 %v4282
          %4695 = vmatprep.subr.mxu0 0.0
          %4696 = vmatpush1.msra.mxu0 %v4281
          %4697 = vmatprep.subr.mxu0 0.0
          %4698 = vmatpush1.msra.mxu0 %v4280
          %4699 = vmatprep.subr.mxu0 0.0
          %4700 = vmatpush1.msra.mxu0 %v4279
          %4701 = vmatprep.subr.mxu0 0.0
          %4702 = vmatpush1.msra.mxu0 %v4278
          %4703 = vmatprep.subr.mxu0 0.0
          %4704 = vmatpush1.msra.mxu0 %v4277
          %4705 = vmatprep.subr.mxu0 0.0
          %4706 = vmatpush1.msra.mxu0 %v4276
          %4707 = vmatprep.subr.mxu0 0.0
          %4708 = vmatpush1.msra.mxu0 %v4275
          %4709 = vmatprep.subr.mxu0 0.0
          %4710 = vmatpush1.msra.mxu0 %v4274
          %4711 = vmatprep.subr.mxu0 0.0
          %4712 = vmatpush1.msra.mxu0 %v4273
          %4713 = vmatprep.subr.mxu0 0.0
          %4714 = vmatpush2.msra.mxu0 %v4304
          %4715 = vmatprep.subr.mxu0 0.0
          %4716 = vmatpush2.msra.mxu0 %v4303
          %4717 = vmatprep.subr.mxu0 0.0
          %4718 = vmatpush2.msra.mxu0 %v4302
          %4719 = vmatprep.subr.mxu0 0.0
          %4720 = vmatpush2.msra.mxu0 %v4301
          %4721 = vmatprep.subr.mxu0 0.0
          %4722 = vmatpush2.msra.mxu0 %v4300
          %4723 = vmatprep.subr.mxu0 0.0
          %4724 = vmatpush2.msra.mxu0 %v4299
          %4725 = vmatprep.subr.mxu0 0.0
          %4726 = vmatpush2.msra.mxu0 %v4298
          %4727 = vmatprep.subr.mxu0 0.0
          %4728 = vmatpush2.msra.mxu0 %v4297
          %4729 = vmatprep.subr.mxu0 0.0
          %4730 = vmatpush2.msra.mxu0 %v4296
          %4731 = vmatprep.subr.mxu0 0.0
          %4732 = vmatpush2.msra.mxu0 %v4295
          %4733 = vmatprep.subr.mxu0 0.0
          %4734 = vmatpush2.msra.mxu0 %v4294
          %4735 = vmatprep.subr.mxu0 0.0
          %4736 = vmatpush2.msra.mxu0 %v4293
          %4737 = vmatprep.subr.mxu0 0.0
          %4738 = vmatpush2.msra.mxu0 %v4292
          %4739 = vmatprep.subr.mxu0 0.0
          %4740 = vmatpush2.msra.mxu0 %v4291
          %4741 = vmatprep.subr.mxu0 0.0
          %4742 = vmatpush2.msra.mxu0 %v4290
          %4743 = vmatprep.subr.mxu0 0.0
          %4744 = vmatpush2.msra.mxu0 %v4289
          %4745 = vmatprep.mubr.f32.mxu0 %v4138
          %4746 = vmatmul.mubr.f32.gmra.mxu0 %v4137
          %v4747 = vpop.f32.mrf.mxu0
          %v4748 = vadd.f32 %v4678, %v4747
          %v4749 = vpop.f32.mrf.mxu0
          %4750 = vdwg.mxu0
          %4751 = vmatprep.subr.mxu0 0.0
          %4752 = vmatpush1.msra.mxu0 %v4320
          %4753 = vmatprep.subr.mxu0 0.0
          %4754 = vmatpush1.msra.mxu0 %v4319
          %4755 = vmatprep.subr.mxu0 0.0
          %4756 = vmatpush1.msra.mxu0 %v4318
          %4757 = vmatprep.subr.mxu0 0.0
          %4758 = vmatpush1.msra.mxu0 %v4317
          %4759 = vmatprep.subr.mxu0 0.0
          %4760 = vmatpush1.msra.mxu0 %v4316
          %4761 = vmatprep.subr.mxu0 0.0
          %4762 = vmatpush1.msra.mxu0 %v4315
          %4763 = vmatprep.subr.mxu0 0.0
          %4764 = vmatpush1.msra.mxu0 %v4314
          %4765 = vmatprep.subr.mxu0 0.0
          %4766 = vmatpush1.msra.mxu0 %v4313
          %4767 = vmatprep.subr.mxu0 0.0
          %4768 = vmatpush1.msra.mxu0 %v4312
          %4769 = vmatprep.subr.mxu0 0.0
          %4770 = vmatpush1.msra.mxu0 %v4311
          %4771 = vmatprep.subr.mxu0 0.0
          %4772 = vmatpush1.msra.mxu0 %v4310
          %4773 = vmatprep.subr.mxu0 0.0
          %4774 = vmatpush1.msra.mxu0 %v4309
          %4775 = vmatprep.subr.mxu0 0.0
          %4776 = vmatpush1.msra.mxu0 %v4308
          %4777 = vmatprep.subr.mxu0 0.0
          %4778 = vmatpush1.msra.mxu0 %v4307
          %4779 = vmatprep.subr.mxu0 0.0
          %4780 = vmatpush1.msra.mxu0 %v4306
          %4781 = vmatprep.subr.mxu0 0.0
          %4782 = vmatpush1.msra.mxu0 %v4305
          %4783 = vmatprep.subr.mxu0 0.0
          %4784 = vmatpush2.msra.mxu0 %v4336
          %4785 = vmatprep.subr.mxu0 0.0
          %4786 = vmatpush2.msra.mxu0 %v4335
          %4787 = vmatprep.subr.mxu0 0.0
          %4788 = vmatpush2.msra.mxu0 %v4334
          %4789 = vmatprep.subr.mxu0 0.0
          %4790 = vmatpush2.msra.mxu0 %v4333
          %4791 = vmatprep.subr.mxu0 0.0
          %4792 = vmatpush2.msra.mxu0 %v4332
          %4793 = vmatprep.subr.mxu0 0.0
          %4794 = vmatpush2.msra.mxu0 %v4331
          %4795 = vmatprep.subr.mxu0 0.0
          %4796 = vmatpush2.msra.mxu0 %v4330
          %4797 = vmatprep.subr.mxu0 0.0
          %4798 = vmatpush2.msra.mxu0 %v4329
          %4799 = vmatprep.subr.mxu0 0.0
          %4800 = vmatpush2.msra.mxu0 %v4328
          %4801 = vmatprep.subr.mxu0 0.0
          %4802 = vmatpush2.msra.mxu0 %v4327
          %4803 = vmatprep.subr.mxu0 0.0
          %4804 = vmatpush2.msra.mxu0 %v4326
          %4805 = vmatprep.subr.mxu0 0.0
          %4806 = vmatpush2.msra.mxu0 %v4325
          %4807 = vmatprep.subr.mxu0 0.0
          %4808 = vmatpush2.msra.mxu0 %v4324
          %4809 = vmatprep.subr.mxu0 0.0
          %4810 = vmatpush2.msra.mxu0 %v4323
          %4811 = vmatprep.subr.mxu0 0.0
          %4812 = vmatpush2.msra.mxu0 %v4322
          %4813 = vmatprep.subr.mxu0 0.0
          %4814 = vmatpush2.msra.mxu0 %v4321
          %4815 = vmatprep.mubr.f32.mxu0 %v4140
          %4816 = vmatmul.mubr.f32.gmra.mxu0 %v4139
          %v4817 = vpop.f32.mrf.mxu0
          %v4818 = vadd.f32 %v4748, %v4817
          %v4819 = vpop.f32.mrf.mxu0
          %4820 = vdwg.mxu0
          %4821 = vmatprep.subr.mxu0 0.0
          %4822 = vmatpush1.msra.mxu0 %v4352
          %4823 = vmatprep.subr.mxu0 0.0
          %4824 = vmatpush1.msra.mxu0 %v4351
          %4825 = vmatprep.subr.mxu0 0.0
          %4826 = vmatpush1.msra.mxu0 %v4350
          %4827 = vmatprep.subr.mxu0 0.0
          %4828 = vmatpush1.msra.mxu0 %v4349
          %4829 = vmatprep.subr.mxu0 0.0
          %4830 = vmatpush1.msra.mxu0 %v4348
          %4831 = vmatprep.subr.mxu0 0.0
          %4832 = vmatpush1.msra.mxu0 %v4347
          %4833 = vmatprep.subr.mxu0 0.0
          %4834 = vmatpush1.msra.mxu0 %v4346
          %4835 = vmatprep.subr.mxu0 0.0
          %4836 = vmatpush1.msra.mxu0 %v4345
          %4837 = vmatprep.subr.mxu0 0.0
          %4838 = vmatpush1.msra.mxu0 %v4344
          %4839 = vmatprep.subr.mxu0 0.0
          %4840 = vmatpush1.msra.mxu0 %v4343
          %4841 = vmatprep.subr.mxu0 0.0
          %4842 = vmatpush1.msra.mxu0 %v4342
          %4843 = vmatprep.subr.mxu0 0.0
          %4844 = vmatpush1.msra.mxu0 %v4341
          %4845 = vmatprep.subr.mxu0 0.0
          %4846 = vmatpush1.msra.mxu0 %v4340
          %4847 = vmatprep.subr.mxu0 0.0
          %4848 = vmatpush1.msra.mxu0 %v4339
          %4849 = vmatprep.subr.mxu0 0.0
          %4850 = vmatpush1.msra.mxu0 %v4338
          %4851 = vmatprep.subr.mxu0 0.0
          %4852 = vmatpush1.msra.mxu0 %v4337
          %4853 = vmatprep.subr.mxu0 0.0
          %4854 = vmatpush2.msra.mxu0 %v4368
          %4855 = vmatprep.subr.mxu0 0.0
          %4856 = vmatpush2.msra.mxu0 %v4367
          %4857 = vmatprep.subr.mxu0 0.0
          %4858 = vmatpush2.msra.mxu0 %v4366
          %4859 = vmatprep.subr.mxu0 0.0
          %4860 = vmatpush2.msra.mxu0 %v4365
          %4861 = vmatprep.subr.mxu0 0.0
          %4862 = vmatpush2.msra.mxu0 %v4364
          %4863 = vmatprep.subr.mxu0 0.0
          %4864 = vmatpush2.msra.mxu0 %v4363
          %4865 = vmatprep.subr.mxu0 0.0
          %4866 = vmatpush2.msra.mxu0 %v4362
          %4867 = vmatprep.subr.mxu0 0.0
          %4868 = vmatpush2.msra.mxu0 %v4361
          %4869 = vmatprep.subr.mxu0 0.0
          %4870 = vmatpush2.msra.mxu0 %v4360
          %4871 = vmatprep.subr.mxu0 0.0
          %4872 = vmatpush2.msra.mxu0 %v4359
          %4873 = vmatprep.subr.mxu0 0.0
          %4874 = vmatpush2.msra.mxu0 %v4358
          %4875 = vmatprep.subr.mxu0 0.0
          %4876 = vmatpush2.msra.mxu0 %v4357
          %4877 = vmatprep.subr.mxu0 0.0
          %4878 = vmatpush2.msra.mxu0 %v4356
          %4879 = vmatprep.subr.mxu0 0.0
          %4880 = vmatpush2.msra.mxu0 %v4355
          %4881 = vmatprep.subr.mxu0 0.0
          %4882 = vmatpush2.msra.mxu0 %v4354
          %4883 = vmatprep.subr.mxu0 0.0
          %4884 = vmatpush2.msra.mxu0 %v4353
          %4885 = vmatprep.mubr.f32.mxu0 %v4142
          %4886 = vmatmul.mubr.f32.gmra.mxu0 %v4141
          %v4887 = vpop.f32.mrf.mxu0
          %v4888 = vadd.f32 %v4818, %v4887
          %v4889 = vpop.f32.mrf.mxu0
          %4890 = vdwg.mxu0
          %4891 = vmatprep.subr.mxu0 0.0
          %4892 = vmatpush1.msra.mxu0 %v4384
          %4893 = vmatprep.subr.mxu0 0.0
          %4894 = vmatpush1.msra.mxu0 %v4383
          %4895 = vmatprep.subr.mxu0 0.0
          %4896 = vmatpush1.msra.mxu0 %v4382
          %4897 = vmatprep.subr.mxu0 0.0
          %4898 = vmatpush1.msra.mxu0 %v4381
          %4899 = vmatprep.subr.mxu0 0.0
          %4900 = vmatpush1.msra.mxu0 %v4380
          %4901 = vmatprep.subr.mxu0 0.0
          %4902 = vmatpush1.msra.mxu0 %v4379
          %4903 = vmatprep.subr.mxu0 0.0
          %4904 = vmatpush1.msra.mxu0 %v4378
          %4905 = vmatprep.subr.mxu0 0.0
          %4906 = vmatpush1.msra.mxu0 %v4377
          %4907 = vmatprep.subr.mxu0 0.0
          %4908 = vmatpush1.msra.mxu0 %v4376
          %4909 = vmatprep.subr.mxu0 0.0
          %4910 = vmatpush1.msra.mxu0 %v4375
          %4911 = vmatprep.subr.mxu0 0.0
          %4912 = vmatpush1.msra.mxu0 %v4374
          %4913 = vmatprep.subr.mxu0 0.0
          %4914 = vmatpush1.msra.mxu0 %v4373
          %4915 = vmatprep.subr.mxu0 0.0
          %4916 = vmatpush1.msra.mxu0 %v4372
          %4917 = vmatprep.subr.mxu0 0.0
          %4918 = vmatpush1.msra.mxu0 %v4371
          %4919 = vmatprep.subr.mxu0 0.0
          %4920 = vmatpush1.msra.mxu0 %v4370
          %4921 = vmatprep.subr.mxu0 0.0
          %4922 = vmatpush1.msra.mxu0 %v4369
          %4923 = vmatprep.subr.mxu0 0.0
          %4924 = vmatpush2.msra.mxu0 %v4400
          %4925 = vmatprep.subr.mxu0 0.0
          %4926 = vmatpush2.msra.mxu0 %v4399
          %4927 = vmatprep.subr.mxu0 0.0
          %4928 = vmatpush2.msra.mxu0 %v4398
          %4929 = vmatprep.subr.mxu0 0.0
          %4930 = vmatpush2.msra.mxu0 %v4397
          %4931 = vmatprep.subr.mxu0 0.0
          %4932 = vmatpush2.msra.mxu0 %v4396
          %4933 = vmatprep.subr.mxu0 0.0
          %4934 = vmatpush2.msra.mxu0 %v4395
          %4935 = vmatprep.subr.mxu0 0.0
          %4936 = vmatpush2.msra.mxu0 %v4394
          %4937 = vmatprep.subr.mxu0 0.0
          %4938 = vmatpush2.msra.mxu0 %v4393
          %4939 = vmatprep.subr.mxu0 0.0
          %4940 = vmatpush2.msra.mxu0 %v4392
          %4941 = vmatprep.subr.mxu0 0.0
          %4942 = vmatpush2.msra.mxu0 %v4391
          %4943 = vmatprep.subr.mxu0 0.0
          %4944 = vmatpush2.msra.mxu0 %v4390
          %4945 = vmatprep.subr.mxu0 0.0
          %4946 = vmatpush2.msra.mxu0 %v4389
          %4947 = vmatprep.subr.mxu0 0.0
          %4948 = vmatpush2.msra.mxu0 %v4388
          %4949 = vmatprep.subr.mxu0 0.0
          %4950 = vmatpush2.msra.mxu0 %v4387
          %4951 = vmatprep.subr.mxu0 0.0
          %4952 = vmatpush2.msra.mxu0 %v4386
          %4953 = vmatprep.subr.mxu0 0.0
          %4954 = vmatpush2.msra.mxu0 %v4385
          %4955 = vmatprep.mubr.f32.mxu0 %v4144
          %4956 = vmatmul.mubr.f32.gmra.mxu0 %v4143
          %v4957 = vpop.f32.mrf.mxu0
          %v4958 = vadd.f32 %v4888, %v4957
          %v4959 = vpop.f32.mrf.mxu0
          %4960 = vdwg.mxu0
          %v4961 = vmax.f32 %v4958, 0.0
          %v4962 = vld [vmem:[#allocation10] sm:$0xff]
          %v4963 = vld [vmem:[#allocation10 + $0x8] sm:$0xff]
          %v4964 = vld [vmem:[#allocation10 + $0x10] sm:$0xff]
          %v4965 = vld [vmem:[#allocation10 + $0x18] sm:$0xff]
          %v4966 = vld [vmem:[#allocation10 + $0x20] sm:$0xff]
          %v4967 = vld [vmem:[#allocation10 + $0x28] sm:$0xff]
          %v4968 = vld [vmem:[#allocation10 + $0x30] sm:$0xff]
          %v4969 = vld [vmem:[#allocation10 + $0x38] sm:$0xff]
          %v4970 = vld [vmem:[#allocation10 + $0x40] sm:$0xff]
          %v4971 = vld [vmem:[#allocation10 + $0x48] sm:$0xff]
          %v4972 = vld [vmem:[#allocation10 + $0x50] sm:$0xff]
          %v4973 = vld [vmem:[#allocation10 + $0x58] sm:$0xff]
          %v4974 = vld [vmem:[#allocation10 + $0x60] sm:$0xff]
          %v4975 = vld [vmem:[#allocation10 + $0x68] sm:$0xff]
          %v4976 = vld [vmem:[#allocation10 + $0x70] sm:$0xff]
          %v4977 = vld [vmem:[#allocation10 + $0x78] sm:$0xff]
          %v4978 = vld [vmem:[#allocation10 + $0x80] sm:$0xff]
          %v4979 = vld [vmem:[#allocation10 + $0x88] sm:$0xff]
          %v4980 = vld [vmem:[#allocation10 + $0x90] sm:$0xff]
          %v4981 = vld [vmem:[#allocation10 + $0x98] sm:$0xff]
          %v4982 = vld [vmem:[#allocation10 + $0xa0] sm:$0xff]
          %v4983 = vld [vmem:[#allocation10 + $0xa8] sm:$0xff]
          %v4984 = vld [vmem:[#allocation10 + $0xb0] sm:$0xff]
          %v4985 = vld [vmem:[#allocation10 + $0xb8] sm:$0xff]
          %v4986 = vld [vmem:[#allocation10 + $0xc0] sm:$0xff]
          %v4987 = vld [vmem:[#allocation10 + $0xc8] sm:$0xff]
          %v4988 = vld [vmem:[#allocation10 + $0xd0] sm:$0xff]
          %v4989 = vld [vmem:[#allocation10 + $0xd8] sm:$0xff]
          %v4990 = vld [vmem:[#allocation10 + $0xe0] sm:$0xff]
          %v4991 = vld [vmem:[#allocation10 + $0xe8] sm:$0xff]
          %v4992 = vld [vmem:[#allocation10 + $0xf0] sm:$0xff]
          %v4993 = vld [vmem:[#allocation10 + $0xf8] sm:$0xff]
          %v4994 = vld [vmem:[#allocation10 + $0x100] sm:$0xff]
          %v4995 = vld [vmem:[#allocation10 + $0x108] sm:$0xff]
          %v4996 = vld [vmem:[#allocation10 + $0x110] sm:$0xff]
          %v4997 = vld [vmem:[#allocation10 + $0x118] sm:$0xff]
          %v4998 = vld [vmem:[#allocation10 + $0x120] sm:$0xff]
          %v4999 = vld [vmem:[#allocation10 + $0x128] sm:$0xff]
          %v5000 = vld [vmem:[#allocation10 + $0x130] sm:$0xff]
          %v5001 = vld [vmem:[#allocation10 + $0x138] sm:$0xff]
          %v5002 = vld [vmem:[#allocation10 + $0x140] sm:$0xff]
          %v5003 = vld [vmem:[#allocation10 + $0x148] sm:$0xff]
          %v5004 = vld [vmem:[#allocation10 + $0x150] sm:$0xff]
          %v5005 = vld [vmem:[#allocation10 + $0x158] sm:$0xff]
          %v5006 = vld [vmem:[#allocation10 + $0x160] sm:$0xff]
          %v5007 = vld [vmem:[#allocation10 + $0x168] sm:$0xff]
          %v5008 = vld [vmem:[#allocation10 + $0x170] sm:$0xff]
          %v5009 = vld [vmem:[#allocation10 + $0x178] sm:$0xff]
          %v5010 = vld [vmem:[#allocation10 + $0x180] sm:$0xff]
          %v5011 = vld [vmem:[#allocation10 + $0x188] sm:$0xff]
          %v5012 = vld [vmem:[#allocation10 + $0x190] sm:$0xff]
          %v5013 = vld [vmem:[#allocation10 + $0x198] sm:$0xff]
          %v5014 = vld [vmem:[#allocation10 + $0x1a0] sm:$0xff]
          %v5015 = vld [vmem:[#allocation10 + $0x1a8] sm:$0xff]
          %v5016 = vld [vmem:[#allocation10 + $0x1b0] sm:$0xff]
          %v5017 = vld [vmem:[#allocation10 + $0x1b8] sm:$0xff]
          %v5018 = vld [vmem:[#allocation10 + $0x1c0] sm:$0xff]
          %v5019 = vld [vmem:[#allocation10 + $0x1c8] sm:$0xff]
          %v5020 = vld [vmem:[#allocation10 + $0x1d0] sm:$0xff]
          %v5021 = vld [vmem:[#allocation10 + $0x1d8] sm:$0xff]
          %v5022 = vld [vmem:[#allocation10 + $0x1e0] sm:$0xff]
          %v5023 = vld [vmem:[#allocation10 + $0x1e8] sm:$0xff]
          %v5024 = vld [vmem:[#allocation10 + $0x1f0] sm:$0xff]
          %v5025 = vld [vmem:[#allocation10 + $0x1f8] sm:$0xff]
          %v5026 = vld [vmem:[#allocation10 + $0x200] sm:$0xff]
          %v5027 = vld [vmem:[#allocation10 + $0x208] sm:$0xff]
          %v5028 = vld [vmem:[#allocation10 + $0x210] sm:$0xff]
          %v5029 = vld [vmem:[#allocation10 + $0x218] sm:$0xff]
          %v5030 = vld [vmem:[#allocation10 + $0x220] sm:$0xff]
          %v5031 = vld [vmem:[#allocation10 + $0x228] sm:$0xff]
          %v5032 = vld [vmem:[#allocation10 + $0x230] sm:$0xff]
          %v5033 = vld [vmem:[#allocation10 + $0x238] sm:$0xff]
          %v5034 = vld [vmem:[#allocation10 + $0x240] sm:$0xff]
          %v5035 = vld [vmem:[#allocation10 + $0x248] sm:$0xff]
          %v5036 = vld [vmem:[#allocation10 + $0x250] sm:$0xff]
          %v5037 = vld [vmem:[#allocation10 + $0x258] sm:$0xff]
          %v5038 = vld [vmem:[#allocation10 + $0x260] sm:$0xff]
          %v5039 = vld [vmem:[#allocation10 + $0x268] sm:$0xff]
          %v5040 = vld [vmem:[#allocation10 + $0x270] sm:$0xff]
          %v5041 = vld [vmem:[#allocation10 + $0x278] sm:$0xff]
          %v5042 = vld [vmem:[#allocation10 + $0x280] sm:$0xff]
          %v5043 = vld [vmem:[#allocation10 + $0x288] sm:$0xff]
          %v5044 = vld [vmem:[#allocation10 + $0x290] sm:$0xff]
          %v5045 = vld [vmem:[#allocation10 + $0x298] sm:$0xff]
          %v5046 = vld [vmem:[#allocation10 + $0x2a0] sm:$0xff]
          %v5047 = vld [vmem:[#allocation10 + $0x2a8] sm:$0xff]
          %v5048 = vld [vmem:[#allocation10 + $0x2b0] sm:$0xff]
          %v5049 = vld [vmem:[#allocation10 + $0x2b8] sm:$0xff]
          %v5050 = vld [vmem:[#allocation10 + $0x2c0] sm:$0xff]
          %v5051 = vld [vmem:[#allocation10 + $0x2c8] sm:$0xff]
          %v5052 = vld [vmem:[#allocation10 + $0x2d0] sm:$0xff]
          %v5053 = vld [vmem:[#allocation10 + $0x2d8] sm:$0xff]
          %v5054 = vld [vmem:[#allocation10 + $0x2e0] sm:$0xff]
          %v5055 = vld [vmem:[#allocation10 + $0x2e8] sm:$0xff]
          %v5056 = vld [vmem:[#allocation10 + $0x2f0] sm:$0xff]
          %v5057 = vld [vmem:[#allocation10 + $0x2f8] sm:$0xff]
          %v5058 = vld [vmem:[#allocation10 + $0x300] sm:$0xff]
          %v5059 = vld [vmem:[#allocation10 + $0x308] sm:$0xff]
          %v5060 = vld [vmem:[#allocation10 + $0x310] sm:$0xff]
          %v5061 = vld [vmem:[#allocation10 + $0x318] sm:$0xff]
          %v5062 = vld [vmem:[#allocation10 + $0x320] sm:$0xff]
          %v5063 = vld [vmem:[#allocation10 + $0x328] sm:$0xff]
          %v5064 = vld [vmem:[#allocation10 + $0x330] sm:$0xff]
          %v5065 = vld [vmem:[#allocation10 + $0x338] sm:$0xff]
          %v5066 = vld [vmem:[#allocation10 + $0x340] sm:$0xff]
          %v5067 = vld [vmem:[#allocation10 + $0x348] sm:$0xff]
          %v5068 = vld [vmem:[#allocation10 + $0x350] sm:$0xff]
          %v5069 = vld [vmem:[#allocation10 + $0x358] sm:$0xff]
          %v5070 = vld [vmem:[#allocation10 + $0x360] sm:$0xff]
          %v5071 = vld [vmem:[#allocation10 + $0x368] sm:$0xff]
          %v5072 = vld [vmem:[#allocation10 + $0x370] sm:$0xff]
          %v5073 = vld [vmem:[#allocation10 + $0x378] sm:$0xff]
          %v5074 = vld [vmem:[#allocation10 + $0x380] sm:$0xff]
          %v5075 = vld [vmem:[#allocation10 + $0x388] sm:$0xff]
          %v5076 = vld [vmem:[#allocation10 + $0x390] sm:$0xff]
          %v5077 = vld [vmem:[#allocation10 + $0x398] sm:$0xff]
          %v5078 = vld [vmem:[#allocation10 + $0x3a0] sm:$0xff]
          %v5079 = vld [vmem:[#allocation10 + $0x3a8] sm:$0xff]
          %v5080 = vld [vmem:[#allocation10 + $0x3b0] sm:$0xff]
          %v5081 = vld [vmem:[#allocation10 + $0x3b8] sm:$0xff]
          %v5082 = vld [vmem:[#allocation10 + $0x3c0] sm:$0xff]
          %v5083 = vld [vmem:[#allocation10 + $0x3c8] sm:$0xff]
          %v5084 = vld [vmem:[#allocation10 + $0x3d0] sm:$0xff]
          %v5085 = vld [vmem:[#allocation10 + $0x3d8] sm:$0xff]
          %v5086 = vld [vmem:[#allocation10 + $0x3e0] sm:$0xff]
          %v5087 = vld [vmem:[#allocation10 + $0x3e8] sm:$0xff]
          %v5088 = vld [vmem:[#allocation10 + $0x3f0] sm:$0xff]
          %v5089 = vld [vmem:[#allocation10 + $0x3f8] sm:$0xff]
          %v5090 = vld [vmem:[#allocation10 + $0x400] sm:$0xff]
          %v5091 = vld [vmem:[#allocation10 + $0x408] sm:$0xff]
          %v5092 = vld [vmem:[#allocation10 + $0x410] sm:$0xff]
          %v5093 = vld [vmem:[#allocation10 + $0x418] sm:$0xff]
          %v5094 = vld [vmem:[#allocation10 + $0x420] sm:$0xff]
          %v5095 = vld [vmem:[#allocation10 + $0x428] sm:$0xff]
          %v5096 = vld [vmem:[#allocation10 + $0x430] sm:$0xff]
          %v5097 = vld [vmem:[#allocation10 + $0x438] sm:$0xff]
          %v5098 = vld [vmem:[#allocation10 + $0x440] sm:$0xff]
          %v5099 = vld [vmem:[#allocation10 + $0x448] sm:$0xff]
          %v5100 = vld [vmem:[#allocation10 + $0x450] sm:$0xff]
          %v5101 = vld [vmem:[#allocation10 + $0x458] sm:$0xff]
          %v5102 = vld [vmem:[#allocation10 + $0x460] sm:$0xff]
          %v5103 = vld [vmem:[#allocation10 + $0x468] sm:$0xff]
          %v5104 = vld [vmem:[#allocation10 + $0x470] sm:$0xff]
          %v5105 = vld [vmem:[#allocation10 + $0x478] sm:$0xff]
          %v5106 = vld [vmem:[#allocation10 + $0x480] sm:$0xff]
          %v5107 = vld [vmem:[#allocation10 + $0x488] sm:$0xff]
          %v5108 = vld [vmem:[#allocation10 + $0x490] sm:$0xff]
          %v5109 = vld [vmem:[#allocation10 + $0x498] sm:$0xff]
          %v5110 = vld [vmem:[#allocation10 + $0x4a0] sm:$0xff]
          %v5111 = vld [vmem:[#allocation10 + $0x4a8] sm:$0xff]
          %v5112 = vld [vmem:[#allocation10 + $0x4b0] sm:$0xff]
          %v5113 = vld [vmem:[#allocation10 + $0x4b8] sm:$0xff]
          %v5114 = vld [vmem:[#allocation10 + $0x4c0] sm:$0xff]
          %v5115 = vld [vmem:[#allocation10 + $0x4c8] sm:$0xff]
          %v5116 = vld [vmem:[#allocation10 + $0x4d0] sm:$0xff]
          %v5117 = vld [vmem:[#allocation10 + $0x4d8] sm:$0xff]
          %v5118 = vld [vmem:[#allocation10 + $0x4e0] sm:$0xff]
          %v5119 = vld [vmem:[#allocation10 + $0x4e8] sm:$0xff]
          %v5120 = vld [vmem:[#allocation10 + $0x4f0] sm:$0xff]
          %v5121 = vld [vmem:[#allocation10 + $0x4f8] sm:$0xff]
          %v5122 = vld [vmem:[#allocation10 + $0x500] sm:$0xff]
          %v5123 = vld [vmem:[#allocation10 + $0x508] sm:$0xff]
          %v5124 = vld [vmem:[#allocation10 + $0x510] sm:$0xff]
          %v5125 = vld [vmem:[#allocation10 + $0x518] sm:$0xff]
          %v5126 = vld [vmem:[#allocation10 + $0x520] sm:$0xff]
          %v5127 = vld [vmem:[#allocation10 + $0x528] sm:$0xff]
          %v5128 = vld [vmem:[#allocation10 + $0x530] sm:$0xff]
          %v5129 = vld [vmem:[#allocation10 + $0x538] sm:$0xff]
          %v5130 = vld [vmem:[#allocation10 + $0x540] sm:$0xff]
          %v5131 = vld [vmem:[#allocation10 + $0x548] sm:$0xff]
          %v5132 = vld [vmem:[#allocation10 + $0x550] sm:$0xff]
          %v5133 = vld [vmem:[#allocation10 + $0x558] sm:$0xff]
          %v5134 = vld [vmem:[#allocation10 + $0x560] sm:$0xff]
          %v5135 = vld [vmem:[#allocation10 + $0x568] sm:$0xff]
          %v5136 = vld [vmem:[#allocation10 + $0x570] sm:$0xff]
          %v5137 = vld [vmem:[#allocation10 + $0x578] sm:$0xff]
          %v5138 = vld [vmem:[#allocation10 + $0x580] sm:$0xff]
          %v5139 = vld [vmem:[#allocation10 + $0x588] sm:$0xff]
          %v5140 = vld [vmem:[#allocation10 + $0x590] sm:$0xff]
          %v5141 = vld [vmem:[#allocation10 + $0x598] sm:$0xff]
          %v5142 = vld [vmem:[#allocation10 + $0x5a0] sm:$0xff]
          %v5143 = vld [vmem:[#allocation10 + $0x5a8] sm:$0xff]
          %v5144 = vld [vmem:[#allocation10 + $0x5b0] sm:$0xff]
          %v5145 = vld [vmem:[#allocation10 + $0x5b8] sm:$0xff]
          %v5146 = vld [vmem:[#allocation10 + $0x5c0] sm:$0xff]
          %v5147 = vld [vmem:[#allocation10 + $0x5c8] sm:$0xff]
          %v5148 = vld [vmem:[#allocation10 + $0x5d0] sm:$0xff]
          %v5149 = vld [vmem:[#allocation10 + $0x5d8] sm:$0xff]
          %v5150 = vld [vmem:[#allocation10 + $0x5e0] sm:$0xff]
          %v5151 = vld [vmem:[#allocation10 + $0x5e8] sm:$0xff]
          %v5152 = vld [vmem:[#allocation10 + $0x5f0] sm:$0xff]
          %v5153 = vld [vmem:[#allocation10 + $0x5f8] sm:$0xff]
          %v5154 = vld [vmem:[#allocation10 + $0x600] sm:$0xff]
          %v5155 = vld [vmem:[#allocation10 + $0x608] sm:$0xff]
          %v5156 = vld [vmem:[#allocation10 + $0x610] sm:$0xff]
          %v5157 = vld [vmem:[#allocation10 + $0x618] sm:$0xff]
          %v5158 = vld [vmem:[#allocation10 + $0x620] sm:$0xff]
          %v5159 = vld [vmem:[#allocation10 + $0x628] sm:$0xff]
          %v5160 = vld [vmem:[#allocation10 + $0x630] sm:$0xff]
          %v5161 = vld [vmem:[#allocation10 + $0x638] sm:$0xff]
          %v5162 = vld [vmem:[#allocation10 + $0x640] sm:$0xff]
          %v5163 = vld [vmem:[#allocation10 + $0x648] sm:$0xff]
          %v5164 = vld [vmem:[#allocation10 + $0x650] sm:$0xff]
          %v5165 = vld [vmem:[#allocation10 + $0x658] sm:$0xff]
          %v5166 = vld [vmem:[#allocation10 + $0x660] sm:$0xff]
          %v5167 = vld [vmem:[#allocation10 + $0x668] sm:$0xff]
          %v5168 = vld [vmem:[#allocation10 + $0x670] sm:$0xff]
          %v5169 = vld [vmem:[#allocation10 + $0x678] sm:$0xff]
          %v5170 = vld [vmem:[#allocation10 + $0x680] sm:$0xff]
          %v5171 = vld [vmem:[#allocation10 + $0x688] sm:$0xff]
          %v5172 = vld [vmem:[#allocation10 + $0x690] sm:$0xff]
          %v5173 = vld [vmem:[#allocation10 + $0x698] sm:$0xff]
          %v5174 = vld [vmem:[#allocation10 + $0x6a0] sm:$0xff]
          %v5175 = vld [vmem:[#allocation10 + $0x6a8] sm:$0xff]
          %v5176 = vld [vmem:[#allocation10 + $0x6b0] sm:$0xff]
          %v5177 = vld [vmem:[#allocation10 + $0x6b8] sm:$0xff]
          %v5178 = vld [vmem:[#allocation10 + $0x6c0] sm:$0xff]
          %v5179 = vld [vmem:[#allocation10 + $0x6c8] sm:$0xff]
          %v5180 = vld [vmem:[#allocation10 + $0x6d0] sm:$0xff]
          %v5181 = vld [vmem:[#allocation10 + $0x6d8] sm:$0xff]
          %v5182 = vld [vmem:[#allocation10 + $0x6e0] sm:$0xff]
          %v5183 = vld [vmem:[#allocation10 + $0x6e8] sm:$0xff]
          %v5184 = vld [vmem:[#allocation10 + $0x6f0] sm:$0xff]
          %v5185 = vld [vmem:[#allocation10 + $0x6f8] sm:$0xff]
          %v5186 = vld [vmem:[#allocation10 + $0x700] sm:$0xff]
          %v5187 = vld [vmem:[#allocation10 + $0x708] sm:$0xff]
          %v5188 = vld [vmem:[#allocation10 + $0x710] sm:$0xff]
          %v5189 = vld [vmem:[#allocation10 + $0x718] sm:$0xff]
          %v5190 = vld [vmem:[#allocation10 + $0x720] sm:$0xff]
          %v5191 = vld [vmem:[#allocation10 + $0x728] sm:$0xff]
          %v5192 = vld [vmem:[#allocation10 + $0x730] sm:$0xff]
          %v5193 = vld [vmem:[#allocation10 + $0x738] sm:$0xff]
          %v5194 = vld [vmem:[#allocation10 + $0x740] sm:$0xff]
          %v5195 = vld [vmem:[#allocation10 + $0x748] sm:$0xff]
          %v5196 = vld [vmem:[#allocation10 + $0x750] sm:$0xff]
          %v5197 = vld [vmem:[#allocation10 + $0x758] sm:$0xff]
          %v5198 = vld [vmem:[#allocation10 + $0x760] sm:$0xff]
          %v5199 = vld [vmem:[#allocation10 + $0x768] sm:$0xff]
          %v5200 = vld [vmem:[#allocation10 + $0x770] sm:$0xff]
          %v5201 = vld [vmem:[#allocation10 + $0x778] sm:$0xff]
          %v5202 = vld [vmem:[#allocation10 + $0x780] sm:$0xff]
          %v5203 = vld [vmem:[#allocation10 + $0x788] sm:$0xff]
          %v5204 = vld [vmem:[#allocation10 + $0x790] sm:$0xff]
          %v5205 = vld [vmem:[#allocation10 + $0x798] sm:$0xff]
          %v5206 = vld [vmem:[#allocation10 + $0x7a0] sm:$0xff]
          %v5207 = vld [vmem:[#allocation10 + $0x7a8] sm:$0xff]
          %v5208 = vld [vmem:[#allocation10 + $0x7b0] sm:$0xff]
          %v5209 = vld [vmem:[#allocation10 + $0x7b8] sm:$0xff]
          %v5210 = vld [vmem:[#allocation10 + $0x7c0] sm:$0xff]
          %v5211 = vld [vmem:[#allocation10 + $0x7c8] sm:$0xff]
          %v5212 = vld [vmem:[#allocation10 + $0x7d0] sm:$0xff]
          %v5213 = vld [vmem:[#allocation10 + $0x7d8] sm:$0xff]
          %v5214 = vld [vmem:[#allocation10 + $0x7e0] sm:$0xff]
          %v5215 = vld [vmem:[#allocation10 + $0x7e8] sm:$0xff]
          %v5216 = vld [vmem:[#allocation10 + $0x7f0] sm:$0xff]
          %v5217 = vld [vmem:[#allocation10 + $0x7f8] sm:$0xff]
          %5218 = vmatprep.subr.mxu0 %v5203
          %5219 = vmatpush1.msra.mxu0 %v5202
          %5220 = vmatprep.subr.mxu0 %v5187
          %5221 = vmatpush1.msra.mxu0 %v5186
          %5222 = vmatprep.subr.mxu0 %v5171
          %5223 = vmatpush1.msra.mxu0 %v5170
          %5224 = vmatprep.subr.mxu0 %v5155
          %5225 = vmatpush1.msra.mxu0 %v5154
          %5226 = vmatprep.subr.mxu0 %v5139
          %5227 = vmatpush1.msra.mxu0 %v5138
          %5228 = vmatprep.subr.mxu0 %v5123
          %5229 = vmatpush1.msra.mxu0 %v5122
          %5230 = vmatprep.subr.mxu0 %v5107
          %5231 = vmatpush1.msra.mxu0 %v5106
          %5232 = vmatprep.subr.mxu0 %v5091
          %5233 = vmatpush1.msra.mxu0 %v5090
          %5234 = vmatprep.subr.mxu0 %v5075
          %5235 = vmatpush1.msra.mxu0 %v5074
          %5236 = vmatprep.subr.mxu0 %v5059
          %5237 = vmatpush1.msra.mxu0 %v5058
          %5238 = vmatprep.subr.mxu0 %v5043
          %5239 = vmatpush1.msra.mxu0 %v5042
          %5240 = vmatprep.subr.mxu0 %v5027
          %5241 = vmatpush1.msra.mxu0 %v5026
          %5242 = vmatprep.subr.mxu0 %v5011
          %5243 = vmatpush1.msra.mxu0 %v5010
          %5244 = vmatprep.subr.mxu0 %v4995
          %5245 = vmatpush1.msra.mxu0 %v4994
          %5246 = vmatprep.subr.mxu0 %v4979
          %5247 = vmatpush1.msra.mxu0 %v4978
          %5248 = vmatprep.subr.mxu0 %v4963
          %5249 = vmatpush1.msra.mxu0 %v4962
          %5250 = vmatprep.subr.mxu0 0.0
          %5251 = vmatpush2.msra.mxu0 0.0
          %5252 = vmatprep.subr.mxu0 0.0
          %5253 = vmatpush2.msra.mxu0 0.0
          %5254 = vmatprep.subr.mxu0 0.0
          %5255 = vmatpush2.msra.mxu0 0.0
          %5256 = vmatprep.subr.mxu0 0.0
          %5257 = vmatpush2.msra.mxu0 0.0
          %5258 = vmatprep.subr.mxu0 0.0
          %5259 = vmatpush2.msra.mxu0 0.0
          %5260 = vmatprep.subr.mxu0 0.0
          %5261 = vmatpush2.msra.mxu0 0.0
          %5262 = vmatprep.subr.mxu0 0.0
          %5263 = vmatpush2.msra.mxu0 0.0
          %5264 = vmatprep.subr.mxu0 0.0
          %5265 = vmatpush2.msra.mxu0 0.0
          %5266 = vmatprep.subr.mxu0 0.0
          %5267 = vmatpush2.msra.mxu0 0.0
          %5268 = vmatprep.subr.mxu0 0.0
          %5269 = vmatpush2.msra.mxu0 0.0
          %5270 = vmatprep.subr.mxu0 0.0
          %5271 = vmatpush2.msra.mxu0 0.0
          %5272 = vmatprep.subr.mxu0 0.0
          %5273 = vmatpush2.msra.mxu0 0.0
          %5274 = vmatprep.subr.mxu0 0.0
          %5275 = vmatpush2.msra.mxu0 0.0
          %5276 = vmatprep.subr.mxu0 0.0
          %5277 = vmatpush2.msra.mxu0 0.0
          %5278 = vmatprep.subr.mxu0 0.0
          %5279 = vmatpush2.msra.mxu0 0.0
          %5280 = vmatprep.subr.mxu0 0.0
          %5281 = vmatpush2.msra.mxu0 0.0
          %5282 = vmatprep.mubr.f32.mxu0 0.0
          %5283 = vmatmul.mubr.f32.gmra.mxu0 %v4961
          %v5284 = vpop.f32.mrf.mxu0
          %v5285 = vadd.f32 0.0, %v5284
          %v5286 = vpop.f32.mrf.mxu0
          %v5287 = vadd.f32 0.0, %v5286
          %5288 = vdwg.mxu0
          %5289 = vmatprep.subr.mxu0 %v5205
          %5290 = vmatpush1.msra.mxu0 %v5204
          %5291 = vmatprep.subr.mxu0 %v5189
          %5292 = vmatpush1.msra.mxu0 %v5188
          %5293 = vmatprep.subr.mxu0 %v5173
          %5294 = vmatpush1.msra.mxu0 %v5172
          %5295 = vmatprep.subr.mxu0 %v5157
          %5296 = vmatpush1.msra.mxu0 %v5156
          %5297 = vmatprep.subr.mxu0 %v5141
          %5298 = vmatpush1.msra.mxu0 %v5140
          %5299 = vmatprep.subr.mxu0 %v5125
          %5300 = vmatpush1.msra.mxu0 %v5124
          %5301 = vmatprep.subr.mxu0 %v5109
          %5302 = vmatpush1.msra.mxu0 %v5108
          %5303 = vmatprep.subr.mxu0 %v5093
          %5304 = vmatpush1.msra.mxu0 %v5092
          %5305 = vmatprep.subr.mxu0 %v5077
          %5306 = vmatpush1.msra.mxu0 %v5076
          %5307 = vmatprep.subr.mxu0 %v5061
          %5308 = vmatpush1.msra.mxu0 %v5060
          %5309 = vmatprep.subr.mxu0 %v5045
          %5310 = vmatpush1.msra.mxu0 %v5044
          %5311 = vmatprep.subr.mxu0 %v5029
          %5312 = vmatpush1.msra.mxu0 %v5028
          %5313 = vmatprep.subr.mxu0 %v5013
          %5314 = vmatpush1.msra.mxu0 %v5012
          %5315 = vmatprep.subr.mxu0 %v4997
          %5316 = vmatpush1.msra.mxu0 %v4996
          %5317 = vmatprep.subr.mxu0 %v4981
          %5318 = vmatpush1.msra.mxu0 %v4980
          %5319 = vmatprep.subr.mxu0 %v4965
          %5320 = vmatpush1.msra.mxu0 %v4964
          %5321 = vmatprep.subr.mxu0 0.0
          %5322 = vmatpush2.msra.mxu0 0.0
          %5323 = vmatprep.subr.mxu0 0.0
          %5324 = vmatpush2.msra.mxu0 0.0
          %5325 = vmatprep.subr.mxu0 0.0
          %5326 = vmatpush2.msra.mxu0 0.0
          %5327 = vmatprep.subr.mxu0 0.0
          %5328 = vmatpush2.msra.mxu0 0.0
          %5329 = vmatprep.subr.mxu0 0.0
          %5330 = vmatpush2.msra.mxu0 0.0
          %5331 = vmatprep.subr.mxu0 0.0
          %5332 = vmatpush2.msra.mxu0 0.0
          %5333 = vmatprep.subr.mxu0 0.0
          %5334 = vmatpush2.msra.mxu0 0.0
          %5335 = vmatprep.subr.mxu0 0.0
          %5336 = vmatpush2.msra.mxu0 0.0
          %5337 = vmatprep.subr.mxu0 0.0
          %5338 = vmatpush2.msra.mxu0 0.0
          %5339 = vmatprep.subr.mxu0 0.0
          %5340 = vmatpush2.msra.mxu0 0.0
          %5341 = vmatprep.subr.mxu0 0.0
          %5342 = vmatpush2.msra.mxu0 0.0
          %5343 = vmatprep.subr.mxu0 0.0
          %5344 = vmatpush2.msra.mxu0 0.0
          %5345 = vmatprep.subr.mxu0 0.0
          %5346 = vmatpush2.msra.mxu0 0.0
          %5347 = vmatprep.subr.mxu0 0.0
          %5348 = vmatpush2.msra.mxu0 0.0
          %5349 = vmatprep.subr.mxu0 0.0
          %5350 = vmatpush2.msra.mxu0 0.0
          %5351 = vmatprep.subr.mxu0 0.0
          %5352 = vmatpush2.msra.mxu0 0.0
          %5353 = vmatprep.mubr.f32.mxu0 0.0
          %5354 = vmatmul.mubr.f32.gmra.mxu0 %v4961
          %v5355 = vpop.f32.mrf.mxu0
          %v5356 = vadd.f32 0.0, %v5355
          %v5357 = vpop.f32.mrf.mxu0
          %v5358 = vadd.f32 0.0, %v5357
          %5359 = vdwg.mxu0
          %5360 = vmatprep.subr.mxu0 %v5207
          %5361 = vmatpush1.msra.mxu0 %v5206
          %5362 = vmatprep.subr.mxu0 %v5191
          %5363 = vmatpush1.msra.mxu0 %v5190
          %5364 = vmatprep.subr.mxu0 %v5175
          %5365 = vmatpush1.msra.mxu0 %v5174
          %5366 = vmatprep.subr.mxu0 %v5159
          %5367 = vmatpush1.msra.mxu0 %v5158
          %5368 = vmatprep.subr.mxu0 %v5143
          %5369 = vmatpush1.msra.mxu0 %v5142
          %5370 = vmatprep.subr.mxu0 %v5127
          %5371 = vmatpush1.msra.mxu0 %v5126
          %5372 = vmatprep.subr.mxu0 %v5111
          %5373 = vmatpush1.msra.mxu0 %v5110
          %5374 = vmatprep.subr.mxu0 %v5095
          %5375 = vmatpush1.msra.mxu0 %v5094
          %5376 = vmatprep.subr.mxu0 %v5079
          %5377 = vmatpush1.msra.mxu0 %v5078
          %5378 = vmatprep.subr.mxu0 %v5063
          %5379 = vmatpush1.msra.mxu0 %v5062
          %5380 = vmatprep.subr.mxu0 %v5047
          %5381 = vmatpush1.msra.mxu0 %v5046
          %5382 = vmatprep.subr.mxu0 %v5031
          %5383 = vmatpush1.msra.mxu0 %v5030
          %5384 = vmatprep.subr.mxu0 %v5015
          %5385 = vmatpush1.msra.mxu0 %v5014
          %5386 = vmatprep.subr.mxu0 %v4999
          %5387 = vmatpush1.msra.mxu0 %v4998
          %5388 = vmatprep.subr.mxu0 %v4983
          %5389 = vmatpush1.msra.mxu0 %v4982
          %5390 = vmatprep.subr.mxu0 %v4967
          %5391 = vmatpush1.msra.mxu0 %v4966
          %5392 = vmatprep.subr.mxu0 0.0
          %5393 = vmatpush2.msra.mxu0 0.0
          %5394 = vmatprep.subr.mxu0 0.0
          %5395 = vmatpush2.msra.mxu0 0.0
          %5396 = vmatprep.subr.mxu0 0.0
          %5397 = vmatpush2.msra.mxu0 0.0
          %5398 = vmatprep.subr.mxu0 0.0
          %5399 = vmatpush2.msra.mxu0 0.0
          %5400 = vmatprep.subr.mxu0 0.0
          %5401 = vmatpush2.msra.mxu0 0.0
          %5402 = vmatprep.subr.mxu0 0.0
          %5403 = vmatpush2.msra.mxu0 0.0
          %5404 = vmatprep.subr.mxu0 0.0
          %5405 = vmatpush2.msra.mxu0 0.0
          %5406 = vmatprep.subr.mxu0 0.0
          %5407 = vmatpush2.msra.mxu0 0.0
          %5408 = vmatprep.subr.mxu0 0.0
          %5409 = vmatpush2.msra.mxu0 0.0
          %5410 = vmatprep.subr.mxu0 0.0
          %5411 = vmatpush2.msra.mxu0 0.0
          %5412 = vmatprep.subr.mxu0 0.0
          %5413 = vmatpush2.msra.mxu0 0.0
          %5414 = vmatprep.subr.mxu0 0.0
          %5415 = vmatpush2.msra.mxu0 0.0
          %5416 = vmatprep.subr.mxu0 0.0
          %5417 = vmatpush2.msra.mxu0 0.0
          %5418 = vmatprep.subr.mxu0 0.0
          %5419 = vmatpush2.msra.mxu0 0.0
          %5420 = vmatprep.subr.mxu0 0.0
          %5421 = vmatpush2.msra.mxu0 0.0
          %5422 = vmatprep.subr.mxu0 0.0
          %5423 = vmatpush2.msra.mxu0 0.0
          %5424 = vmatprep.mubr.f32.mxu0 0.0
          %5425 = vmatmul.mubr.f32.gmra.mxu0 %v4961
          %v5426 = vpop.f32.mrf.mxu0
          %v5427 = vadd.f32 0.0, %v5426
          %v5428 = vpop.f32.mrf.mxu0
          %v5429 = vadd.f32 0.0, %v5428
          %5430 = vdwg.mxu0
          %5431 = vmatprep.subr.mxu0 %v5209
          %5432 = vmatpush1.msra.mxu0 %v5208
          %5433 = vmatprep.subr.mxu0 %v5193
          %5434 = vmatpush1.msra.mxu0 %v5192
          %5435 = vmatprep.subr.mxu0 %v5177
          %5436 = vmatpush1.msra.mxu0 %v5176
          %5437 = vmatprep.subr.mxu0 %v5161
          %5438 = vmatpush1.msra.mxu0 %v5160
          %5439 = vmatprep.subr.mxu0 %v5145
          %5440 = vmatpush1.msra.mxu0 %v5144
          %5441 = vmatprep.subr.mxu0 %v5129
          %5442 = vmatpush1.msra.mxu0 %v5128
          %5443 = vmatprep.subr.mxu0 %v5113
          %5444 = vmatpush1.msra.mxu0 %v5112
          %5445 = vmatprep.subr.mxu0 %v5097
          %5446 = vmatpush1.msra.mxu0 %v5096
          %5447 = vmatprep.subr.mxu0 %v5081
          %5448 = vmatpush1.msra.mxu0 %v5080
          %5449 = vmatprep.subr.mxu0 %v5065
          %5450 = vmatpush1.msra.mxu0 %v5064
          %5451 = vmatprep.subr.mxu0 %v5049
          %5452 = vmatpush1.msra.mxu0 %v5048
          %5453 = vmatprep.subr.mxu0 %v5033
          %5454 = vmatpush1.msra.mxu0 %v5032
          %5455 = vmatprep.subr.mxu0 %v5017
          %5456 = vmatpush1.msra.mxu0 %v5016
          %5457 = vmatprep.subr.mxu0 %v5001
          %5458 = vmatpush1.msra.mxu0 %v5000
          %5459 = vmatprep.subr.mxu0 %v4985
          %5460 = vmatpush1.msra.mxu0 %v4984
          %5461 = vmatprep.subr.mxu0 %v4969
          %5462 = vmatpush1.msra.mxu0 %v4968
          %5463 = vmatprep.subr.mxu0 0.0
          %5464 = vmatpush2.msra.mxu0 0.0
          %5465 = vmatprep.subr.mxu0 0.0
          %5466 = vmatpush2.msra.mxu0 0.0
          %5467 = vmatprep.subr.mxu0 0.0
          %5468 = vmatpush2.msra.mxu0 0.0
          %5469 = vmatprep.subr.mxu0 0.0
          %5470 = vmatpush2.msra.mxu0 0.0
          %5471 = vmatprep.subr.mxu0 0.0
          %5472 = vmatpush2.msra.mxu0 0.0
          %5473 = vmatprep.subr.mxu0 0.0
          %5474 = vmatpush2.msra.mxu0 0.0
          %5475 = vmatprep.subr.mxu0 0.0
          %5476 = vmatpush2.msra.mxu0 0.0
          %5477 = vmatprep.subr.mxu0 0.0
          %5478 = vmatpush2.msra.mxu0 0.0
          %5479 = vmatprep.subr.mxu0 0.0
          %5480 = vmatpush2.msra.mxu0 0.0
          %5481 = vmatprep.subr.mxu0 0.0
          %5482 = vmatpush2.msra.mxu0 0.0
          %5483 = vmatprep.subr.mxu0 0.0
          %5484 = vmatpush2.msra.mxu0 0.0
          %5485 = vmatprep.subr.mxu0 0.0
          %5486 = vmatpush2.msra.mxu0 0.0
          %5487 = vmatprep.subr.mxu0 0.0
          %5488 = vmatpush2.msra.mxu0 0.0
          %5489 = vmatprep.subr.mxu0 0.0
          %5490 = vmatpush2.msra.mxu0 0.0
          %5491 = vmatprep.subr.mxu0 0.0
          %5492 = vmatpush2.msra.mxu0 0.0
          %5493 = vmatprep.subr.mxu0 0.0
          %5494 = vmatpush2.msra.mxu0 0.0
          %5495 = vmatprep.mubr.f32.mxu0 0.0
          %5496 = vmatmul.mubr.f32.gmra.mxu0 %v4961
          %v5497 = vpop.f32.mrf.mxu0
          %v5498 = vadd.f32 0.0, %v5497
          %v5499 = vpop.f32.mrf.mxu0
          %v5500 = vadd.f32 0.0, %v5499
          %5501 = vdwg.mxu0
          %5502 = vmatprep.subr.mxu0 %v5211
          %5503 = vmatpush1.msra.mxu0 %v5210
          %5504 = vmatprep.subr.mxu0 %v5195
          %5505 = vmatpush1.msra.mxu0 %v5194
          %5506 = vmatprep.subr.mxu0 %v5179
          %5507 = vmatpush1.msra.mxu0 %v5178
          %5508 = vmatprep.subr.mxu0 %v5163
          %5509 = vmatpush1.msra.mxu0 %v5162
          %5510 = vmatprep.subr.mxu0 %v5147
          %5511 = vmatpush1.msra.mxu0 %v5146
          %5512 = vmatprep.subr.mxu0 %v5131
          %5513 = vmatpush1.msra.mxu0 %v5130
          %5514 = vmatprep.subr.mxu0 %v5115
          %5515 = vmatpush1.msra.mxu0 %v5114
          %5516 = vmatprep.subr.mxu0 %v5099
          %5517 = vmatpush1.msra.mxu0 %v5098
          %5518 = vmatprep.subr.mxu0 %v5083
          %5519 = vmatpush1.msra.mxu0 %v5082
          %5520 = vmatprep.subr.mxu0 %v5067
          %5521 = vmatpush1.msra.mxu0 %v5066
          %5522 = vmatprep.subr.mxu0 %v5051
          %5523 = vmatpush1.msra.mxu0 %v5050
          %5524 = vmatprep.subr.mxu0 %v5035
          %5525 = vmatpush1.msra.mxu0 %v5034
          %5526 = vmatprep.subr.mxu0 %v5019
          %5527 = vmatpush1.msra.mxu0 %v5018
          %5528 = vmatprep.subr.mxu0 %v5003
          %5529 = vmatpush1.msra.mxu0 %v5002
          %5530 = vmatprep.subr.mxu0 %v4987
          %5531 = vmatpush1.msra.mxu0 %v4986
          %5532 = vmatprep.subr.mxu0 %v4971
          %5533 = vmatpush1.msra.mxu0 %v4970
          %5534 = vmatprep.subr.mxu0 0.0
          %5535 = vmatpush2.msra.mxu0 0.0
          %5536 = vmatprep.subr.mxu0 0.0
          %5537 = vmatpush2.msra.mxu0 0.0
          %5538 = vmatprep.subr.mxu0 0.0
          %5539 = vmatpush2.msra.mxu0 0.0
          %5540 = vmatprep.subr.mxu0 0.0
          %5541 = vmatpush2.msra.mxu0 0.0
          %5542 = vmatprep.subr.mxu0 0.0
          %5543 = vmatpush2.msra.mxu0 0.0
          %5544 = vmatprep.subr.mxu0 0.0
          %5545 = vmatpush2.msra.mxu0 0.0
          %5546 = vmatprep.subr.mxu0 0.0
          %5547 = vmatpush2.msra.mxu0 0.0
          %5548 = vmatprep.subr.mxu0 0.0
          %5549 = vmatpush2.msra.mxu0 0.0
          %5550 = vmatprep.subr.mxu0 0.0
          %5551 = vmatpush2.msra.mxu0 0.0
          %5552 = vmatprep.subr.mxu0 0.0
          %5553 = vmatpush2.msra.mxu0 0.0
          %5554 = vmatprep.subr.mxu0 0.0
          %5555 = vmatpush2.msra.mxu0 0.0
          %5556 = vmatprep.subr.mxu0 0.0
          %5557 = vmatpush2.msra.mxu0 0.0
          %5558 = vmatprep.subr.mxu0 0.0
          %5559 = vmatpush2.msra.mxu0 0.0
          %5560 = vmatprep.subr.mxu0 0.0
          %5561 = vmatpush2.msra.mxu0 0.0
          %5562 = vmatprep.subr.mxu0 0.0
          %5563 = vmatpush2.msra.mxu0 0.0
          %5564 = vmatprep.subr.mxu0 0.0
          %5565 = vmatpush2.msra.mxu0 0.0
          %5566 = vmatprep.mubr.f32.mxu0 0.0
          %5567 = vmatmul.mubr.f32.gmra.mxu0 %v4961
          %v5568 = vpop.f32.mrf.mxu0
          %v5569 = vadd.f32 0.0, %v5568
          %v5570 = vpop.f32.mrf.mxu0
          %v5571 = vadd.f32 0.0, %v5570
          %5572 = vdwg.mxu0
          %5573 = vmatprep.subr.mxu0 %v5213
          %5574 = vmatpush1.msra.mxu0 %v5212
          %5575 = vmatprep.subr.mxu0 %v5197
          %5576 = vmatpush1.msra.mxu0 %v5196
          %5577 = vmatprep.subr.mxu0 %v5181
          %5578 = vmatpush1.msra.mxu0 %v5180
          %5579 = vmatprep.subr.mxu0 %v5165
          %5580 = vmatpush1.msra.mxu0 %v5164
          %5581 = vmatprep.subr.mxu0 %v5149
          %5582 = vmatpush1.msra.mxu0 %v5148
          %5583 = vmatprep.subr.mxu0 %v5133
          %5584 = vmatpush1.msra.mxu0 %v5132
          %5585 = vmatprep.subr.mxu0 %v5117
          %5586 = vmatpush1.msra.mxu0 %v5116
          %5587 = vmatprep.subr.mxu0 %v5101
          %5588 = vmatpush1.msra.mxu0 %v5100
          %5589 = vmatprep.subr.mxu0 %v5085
          %5590 = vmatpush1.msra.mxu0 %v5084
          %5591 = vmatprep.subr.mxu0 %v5069
          %5592 = vmatpush1.msra.mxu0 %v5068
          %5593 = vmatprep.subr.mxu0 %v5053
          %5594 = vmatpush1.msra.mxu0 %v5052
          %5595 = vmatprep.subr.mxu0 %v5037
          %5596 = vmatpush1.msra.mxu0 %v5036
          %5597 = vmatprep.subr.mxu0 %v5021
          %5598 = vmatpush1.msra.mxu0 %v5020
          %5599 = vmatprep.subr.mxu0 %v5005
          %5600 = vmatpush1.msra.mxu0 %v5004
          %5601 = vmatprep.subr.mxu0 %v4989
          %5602 = vmatpush1.msra.mxu0 %v4988
          %5603 = vmatprep.subr.mxu0 %v4973
          %5604 = vmatpush1.msra.mxu0 %v4972
          %5605 = vmatprep.subr.mxu0 0.0
          %5606 = vmatpush2.msra.mxu0 0.0
          %5607 = vmatprep.subr.mxu0 0.0
          %5608 = vmatpush2.msra.mxu0 0.0
          %5609 = vmatprep.subr.mxu0 0.0
          %5610 = vmatpush2.msra.mxu0 0.0
          %5611 = vmatprep.subr.mxu0 0.0
          %5612 = vmatpush2.msra.mxu0 0.0
          %5613 = vmatprep.subr.mxu0 0.0
          %5614 = vmatpush2.msra.mxu0 0.0
          %5615 = vmatprep.subr.mxu0 0.0
          %5616 = vmatpush2.msra.mxu0 0.0
          %5617 = vmatprep.subr.mxu0 0.0
          %5618 = vmatpush2.msra.mxu0 0.0
          %5619 = vmatprep.subr.mxu0 0.0
          %5620 = vmatpush2.msra.mxu0 0.0
          %5621 = vmatprep.subr.mxu0 0.0
          %5622 = vmatpush2.msra.mxu0 0.0
          %5623 = vmatprep.subr.mxu0 0.0
          %5624 = vmatpush2.msra.mxu0 0.0
          %5625 = vmatprep.subr.mxu0 0.0
          %5626 = vmatpush2.msra.mxu0 0.0
          %5627 = vmatprep.subr.mxu0 0.0
          %5628 = vmatpush2.msra.mxu0 0.0
          %5629 = vmatprep.subr.mxu0 0.0
          %5630 = vmatpush2.msra.mxu0 0.0
          %5631 = vmatprep.subr.mxu0 0.0
          %5632 = vmatpush2.msra.mxu0 0.0
          %5633 = vmatprep.subr.mxu0 0.0
          %5634 = vmatpush2.msra.mxu0 0.0
          %5635 = vmatprep.subr.mxu0 0.0
          %5636 = vmatpush2.msra.mxu0 0.0
          %5637 = vmatprep.mubr.f32.mxu0 0.0
          %5638 = vmatmul.mubr.f32.gmra.mxu0 %v4961
          %v5639 = vpop.f32.mrf.mxu0
          %v5640 = vadd.f32 0.0, %v5639
          %v5641 = vpop.f32.mrf.mxu0
          %v5642 = vadd.f32 0.0, %v5641
          %5643 = vdwg.mxu0
          %5644 = vmatprep.subr.mxu0 %v5215
          %5645 = vmatpush1.msra.mxu0 %v5214
          %5646 = vmatprep.subr.mxu0 %v5199
          %5647 = vmatpush1.msra.mxu0 %v5198
          %5648 = vmatprep.subr.mxu0 %v5183
          %5649 = vmatpush1.msra.mxu0 %v5182
          %5650 = vmatprep.subr.mxu0 %v5167
          %5651 = vmatpush1.msra.mxu0 %v5166
          %5652 = vmatprep.subr.mxu0 %v5151
          %5653 = vmatpush1.msra.mxu0 %v5150
          %5654 = vmatprep.subr.mxu0 %v5135
          %5655 = vmatpush1.msra.mxu0 %v5134
          %5656 = vmatprep.subr.mxu0 %v5119
          %5657 = vmatpush1.msra.mxu0 %v5118
          %5658 = vmatprep.subr.mxu0 %v5103
          %5659 = vmatpush1.msra.mxu0 %v5102
          %5660 = vmatprep.subr.mxu0 %v5087
          %5661 = vmatpush1.msra.mxu0 %v5086
          %5662 = vmatprep.subr.mxu0 %v5071
          %5663 = vmatpush1.msra.mxu0 %v5070
          %5664 = vmatprep.subr.mxu0 %v5055
          %5665 = vmatpush1.msra.mxu0 %v5054
          %5666 = vmatprep.subr.mxu0 %v5039
          %5667 = vmatpush1.msra.mxu0 %v5038
          %5668 = vmatprep.subr.mxu0 %v5023
          %5669 = vmatpush1.msra.mxu0 %v5022
          %5670 = vmatprep.subr.mxu0 %v5007
          %5671 = vmatpush1.msra.mxu0 %v5006
          %5672 = vmatprep.subr.mxu0 %v4991
          %5673 = vmatpush1.msra.mxu0 %v4990
          %5674 = vmatprep.subr.mxu0 %v4975
          %5675 = vmatpush1.msra.mxu0 %v4974
          %5676 = vmatprep.subr.mxu0 0.0
          %5677 = vmatpush2.msra.mxu0 0.0
          %5678 = vmatprep.subr.mxu0 0.0
          %5679 = vmatpush2.msra.mxu0 0.0
          %5680 = vmatprep.subr.mxu0 0.0
          %5681 = vmatpush2.msra.mxu0 0.0
          %5682 = vmatprep.subr.mxu0 0.0
          %5683 = vmatpush2.msra.mxu0 0.0
          %5684 = vmatprep.subr.mxu0 0.0
          %5685 = vmatpush2.msra.mxu0 0.0
          %5686 = vmatprep.subr.mxu0 0.0
          %5687 = vmatpush2.msra.mxu0 0.0
          %5688 = vmatprep.subr.mxu0 0.0
          %5689 = vmatpush2.msra.mxu0 0.0
          %5690 = vmatprep.subr.mxu0 0.0
          %5691 = vmatpush2.msra.mxu0 0.0
          %5692 = vmatprep.subr.mxu0 0.0
          %5693 = vmatpush2.msra.mxu0 0.0
          %5694 = vmatprep.subr.mxu0 0.0
          %5695 = vmatpush2.msra.mxu0 0.0
          %5696 = vmatprep.subr.mxu0 0.0
          %5697 = vmatpush2.msra.mxu0 0.0
          %5698 = vmatprep.subr.mxu0 0.0
          %5699 = vmatpush2.msra.mxu0 0.0
          %5700 = vmatprep.subr.mxu0 0.0
          %5701 = vmatpush2.msra.mxu0 0.0
          %5702 = vmatprep.subr.mxu0 0.0
          %5703 = vmatpush2.msra.mxu0 0.0
          %5704 = vmatprep.subr.mxu0 0.0
          %5705 = vmatpush2.msra.mxu0 0.0
          %5706 = vmatprep.subr.mxu0 0.0
          %5707 = vmatpush2.msra.mxu0 0.0
          %5708 = vmatprep.mubr.f32.mxu0 0.0
          %5709 = vmatmul.mubr.f32.gmra.mxu0 %v4961
          %v5710 = vpop.f32.mrf.mxu0
          %v5711 = vadd.f32 0.0, %v5710
          %v5712 = vpop.f32.mrf.mxu0
          %v5713 = vadd.f32 0.0, %v5712
          %5714 = vdwg.mxu0
          %5715 = vmatprep.subr.mxu0 %v5217
          %5716 = vmatpush1.msra.mxu0 %v5216
          %5717 = vmatprep.subr.mxu0 %v5201
          %5718 = vmatpush1.msra.mxu0 %v5200
          %5719 = vmatprep.subr.mxu0 %v5185
          %5720 = vmatpush1.msra.mxu0 %v5184
          %5721 = vmatprep.subr.mxu0 %v5169
          %5722 = vmatpush1.msra.mxu0 %v5168
          %5723 = vmatprep.subr.mxu0 %v5153
          %5724 = vmatpush1.msra.mxu0 %v5152
          %5725 = vmatprep.subr.mxu0 %v5137
          %5726 = vmatpush1.msra.mxu0 %v5136
          %5727 = vmatprep.subr.mxu0 %v5121
          %5728 = vmatpush1.msra.mxu0 %v5120
          %5729 = vmatprep.subr.mxu0 %v5105
          %5730 = vmatpush1.msra.mxu0 %v5104
          %5731 = vmatprep.subr.mxu0 %v5089
          %5732 = vmatpush1.msra.mxu0 %v5088
          %5733 = vmatprep.subr.mxu0 %v5073
          %5734 = vmatpush1.msra.mxu0 %v5072
          %5735 = vmatprep.subr.mxu0 %v5057
          %5736 = vmatpush1.msra.mxu0 %v5056
          %5737 = vmatprep.subr.mxu0 %v5041
          %5738 = vmatpush1.msra.mxu0 %v5040
          %5739 = vmatprep.subr.mxu0 %v5025
          %5740 = vmatpush1.msra.mxu0 %v5024
          %5741 = vmatprep.subr.mxu0 %v5009
          %5742 = vmatpush1.msra.mxu0 %v5008
          %5743 = vmatprep.subr.mxu0 %v4993
          %5744 = vmatpush1.msra.mxu0 %v4992
          %5745 = vmatprep.subr.mxu0 %v4977
          %5746 = vmatpush1.msra.mxu0 %v4976
          %5747 = vmatprep.subr.mxu0 0.0
          %5748 = vmatpush2.msra.mxu0 0.0
          %5749 = vmatprep.subr.mxu0 0.0
          %5750 = vmatpush2.msra.mxu0 0.0
          %5751 = vmatprep.subr.mxu0 0.0
          %5752 = vmatpush2.msra.mxu0 0.0
          %5753 = vmatprep.subr.mxu0 0.0
          %5754 = vmatpush2.msra.mxu0 0.0
          %5755 = vmatprep.subr.mxu0 0.0
          %5756 = vmatpush2.msra.mxu0 0.0
          %5757 = vmatprep.subr.mxu0 0.0
          %5758 = vmatpush2.msra.mxu0 0.0
          %5759 = vmatprep.subr.mxu0 0.0
          %5760 = vmatpush2.msra.mxu0 0.0
          %5761 = vmatprep.subr.mxu0 0.0
          %5762 = vmatpush2.msra.mxu0 0.0
          %5763 = vmatprep.subr.mxu0 0.0
          %5764 = vmatpush2.msra.mxu0 0.0
          %5765 = vmatprep.subr.mxu0 0.0
          %5766 = vmatpush2.msra.mxu0 0.0
          %5767 = vmatprep.subr.mxu0 0.0
          %5768 = vmatpush2.msra.mxu0 0.0
          %5769 = vmatprep.subr.mxu0 0.0
          %5770 = vmatpush2.msra.mxu0 0.0
          %5771 = vmatprep.subr.mxu0 0.0
          %5772 = vmatpush2.msra.mxu0 0.0
          %5773 = vmatprep.subr.mxu0 0.0
          %5774 = vmatpush2.msra.mxu0 0.0
          %5775 = vmatprep.subr.mxu0 0.0
          %5776 = vmatpush2.msra.mxu0 0.0
          %5777 = vmatprep.subr.mxu0 0.0
          %5778 = vmatpush2.msra.mxu0 0.0
          %5779 = vmatprep.mubr.f32.mxu0 0.0
          %5780 = vmatmul.mubr.f32.gmra.mxu0 %v4961
          %v5781 = vpop.f32.mrf.mxu0
          %v5782 = vadd.f32 0.0, %v5781
          %v5783 = vpop.f32.mrf.mxu0
          %v5784 = vadd.f32 0.0, %v5783
          %5785 = vdwg.mxu0
          %v5786 = vadd.f32 %v5285, %v5285
          %v5787 = vadd.f32 %v5287, %v5287
          %v5788 = vadd.f32 %v5356, %v5356
          %v5789 = vadd.f32 %v5358, %v5358
          %v5790 = vadd.f32 %v5427, %v5427
          %v5791 = vadd.f32 %v5429, %v5429
          %v5792 = vadd.f32 %v5498, %v5498
          %v5793 = vadd.f32 %v5500, %v5500
          %v5794 = vadd.f32 %v5569, %v5569
          %v5795 = vadd.f32 %v5571, %v5571
          %v5796 = vadd.f32 %v5640, %v5640
          %v5797 = vadd.f32 %v5642, %v5642
          %v5798 = vadd.f32 %v5711, %v5711
          %v5799 = vadd.f32 %v5713, %v5713
          %v5800 = vadd.f32 %v5782, %v5782
          %v5801 = vadd.f32 %v5784, %v5784
          %v5802 = vxor.u32 %v5786, 2147483648
          %v5803 = vxor.u32 %v5787, 2147483648
          %v5804 = vxor.u32 %v5788, 2147483648
          %v5805 = vxor.u32 %v5789, 2147483648
          %v5806 = vxor.u32 %v5790, 2147483648
          %v5807 = vxor.u32 %v5791, 2147483648
          %v5808 = vxor.u32 %v5792, 2147483648
          %v5809 = vxor.u32 %v5793, 2147483648
          %v5810 = vxor.u32 %v5794, 2147483648
          %v5811 = vxor.u32 %v5795, 2147483648
          %v5812 = vxor.u32 %v5796, 2147483648
          %v5813 = vxor.u32 %v5797, 2147483648
          %v5814 = vxor.u32 %v5798, 2147483648
          %v5815 = vxor.u32 %v5799, 2147483648
          %v5816 = vxor.u32 %v5800, 2147483648
          %v5817 = vxor.u32 %v5801, 2147483648
          %v5818 = vmul.f32 %v5802, 1.442695
          %v5819 = vpow.pop %v5818
          %v5820 = vmul.f32 %v5803, 1.442695
          %v5821 = vpow.pop %v5820
          %v5822 = vmul.f32 %v5804, 1.442695
          %v5823 = vpow.pop %v5822
          %v5824 = vmul.f32 %v5805, 1.442695
          %v5825 = vpow.pop %v5824
          %v5826 = vmul.f32 %v5806, 1.442695
          %v5827 = vpow.pop %v5826
          %v5828 = vmul.f32 %v5807, 1.442695
          %v5829 = vpow.pop %v5828
          %v5830 = vmul.f32 %v5808, 1.442695
          %v5831 = vpow.pop %v5830
          %v5832 = vmul.f32 %v5809, 1.442695
          %v5833 = vpow.pop %v5832
          %v5834 = vmul.f32 %v5810, 1.442695
          %v5835 = vpow.pop %v5834
          %v5836 = vmul.f32 %v5811, 1.442695
          %v5837 = vpow.pop %v5836
          %v5838 = vmul.f32 %v5812, 1.442695
          %v5839 = vpow.pop %v5838
          %v5840 = vmul.f32 %v5813, 1.442695
          %v5841 = vpow.pop %v5840
          %v5842 = vmul.f32 %v5814, 1.442695
          %v5843 = vpow.pop %v5842
          %v5844 = vmul.f32 %v5815, 1.442695
          %v5845 = vpow.pop %v5844
          %v5846 = vmul.f32 %v5816, 1.442695
          %v5847 = vpow.pop %v5846
          %v5848 = vmul.f32 %v5817, 1.442695
          %v5849 = vpow.pop %v5848
          %v5850 = vadd.f32 %v5819, 1.0
          %v5851 = vadd.f32 %v5821, 1.0
          %v5852 = vadd.f32 %v5823, 1.0
          %v5853 = vadd.f32 %v5825, 1.0
          %v5854 = vadd.f32 %v5827, 1.0
          %v5855 = vadd.f32 %v5829, 1.0
          %v5856 = vadd.f32 %v5831, 1.0
          %v5857 = vadd.f32 %v5833, 1.0
          %v5858 = vadd.f32 %v5835, 1.0
          %v5859 = vadd.f32 %v5837, 1.0
          %v5860 = vadd.f32 %v5839, 1.0
          %v5861 = vadd.f32 %v5841, 1.0
          %v5862 = vadd.f32 %v5843, 1.0
          %v5863 = vadd.f32 %v5845, 1.0
          %v5864 = vadd.f32 %v5847, 1.0
          %v5865 = vadd.f32 %v5849, 1.0
          %v5866 = vrcp.pop %v5850
          %v5867 = vmul.f32 1.0, %v5866
          %v5868 = vrcp.pop %v5851
          %v5869 = vmul.f32 1.0, %v5868
          %v5870 = vrcp.pop %v5852
          %v5871 = vmul.f32 1.0, %v5870
          %v5872 = vrcp.pop %v5853
          %v5873 = vmul.f32 1.0, %v5872
          %v5874 = vrcp.pop %v5854
          %v5875 = vmul.f32 1.0, %v5874
          %v5876 = vrcp.pop %v5855
          %v5877 = vmul.f32 1.0, %v5876
          %v5878 = vrcp.pop %v5856
          %v5879 = vmul.f32 1.0, %v5878
          %v5880 = vrcp.pop %v5857
          %v5881 = vmul.f32 1.0, %v5880
          %v5882 = vrcp.pop %v5858
          %v5883 = vmul.f32 1.0, %v5882
          %v5884 = vrcp.pop %v5859
          %v5885 = vmul.f32 1.0, %v5884
          %v5886 = vrcp.pop %v5860
          %v5887 = vmul.f32 1.0, %v5886
          %v5888 = vrcp.pop %v5861
          %v5889 = vmul.f32 1.0, %v5888
          %v5890 = vrcp.pop %v5862
          %v5891 = vmul.f32 1.0, %v5890
          %v5892 = vrcp.pop %v5863
          %v5893 = vmul.f32 1.0, %v5892
          %v5894 = vrcp.pop %v5864
          %v5895 = vmul.f32 1.0, %v5894
          %v5896 = vrcp.pop %v5865
          %v5897 = vmul.f32 1.0, %v5896
          %v5898 = vmul.f32 %v4129, %v5867
          %v5899 = vmul.f32 %v4130, %v5869
          %v5900 = vmul.f32 %v4131, %v5871
          %v5901 = vmul.f32 %v4132, %v5873
          %v5902 = vmul.f32 %v4133, %v5875
          %v5903 = vmul.f32 %v4134, %v5877
          %v5904 = vmul.f32 %v4135, %v5879
          %v5905 = vmul.f32 %v4136, %v5881
          %v5906 = vmul.f32 %v4137, %v5883
          %v5907 = vmul.f32 %v4138, %v5885
          %v5908 = vmul.f32 %v4139, %v5887
          %v5909 = vmul.f32 %v4140, %v5889
          %v5910 = vmul.f32 %v4141, %v5891
          %v5911 = vmul.f32 %v4142, %v5893
          %v5912 = vmul.f32 %v4143, %v5895
          %v5913 = vmul.f32 %v4144, %v5897
          %v5914 = vmax.f32 %v5898, %v5902
          %v5915 = vmax.f32 %v5899, %v5903
          %v5916 = vmax.f32 %v5900, %v5904
          %v5917 = vmax.f32 %v5901, %v5905
          %v5918 = vmax.f32 %v5914, %v5906
          %v5919 = vmax.f32 %v5915, %v5907
          %v5920 = vmax.f32 %v5916, %v5908
          %v5921 = vmax.f32 %v5917, %v5909
          %v5922 = vmax.f32 %v5918, %v5910
          %v5923 = vmax.f32 %v5919, %v5911
          %v5924 = vmax.f32 %v5920, %v5912
          %v5925 = vmax.f32 %v5921, %v5913
          %v5926 = vmax.f32 %v5922, %v5923
          %v5927 = vmax.f32 %v5924, %v5925
          %v5928 = vmax.f32 %v5926, %v5927
          %5929 = vmax.xlane.f32.xlu0 %v5928
          %v5930 = vpop.xlane.xlu0 %5929
          %v5931 = vadd.f32 %v5898, %v5899
          %v5932 = vadd.f32 %v5931, %v5900
          %v5933 = vadd.f32 %v5932, %v5901
          %v5934 = vadd.f32 %v5933, %v5902
          %v5935 = vadd.f32 %v5934, %v5903
          %v5936 = vadd.f32 %v5935, %v5904
          %v5937 = vadd.f32 %v5936, %v5905
          %v5938 = vadd.f32 %v5937, %v5906
          %v5939 = vadd.f32 %v5938, %v5907
          %v5940 = vadd.f32 %v5939, %v5908
          %v5941 = vadd.f32 %v5940, %v5909
          %v5942 = vadd.f32 %v5941, %v5910
          %v5943 = vadd.f32 %v5942, %v5911
          %v5944 = vadd.f32 %v5943, %v5912
          %v5945 = vadd.f32 %v5944, %v5913
          %5946 = vadd.xlane.f32.xlu0 %v5945
          %v5947 = vpop.xlane.xlu0 %5946
          %v5948 = vrcp.pop 2048.0
          %v5949 = vmul.f32 %v5947, %v5948
          %s5950 = sld [smem:[#allocation12]]
          %v5951 = vstv %s5950
          %v5952 = vmul.f32 %v5930, %v5951
          %s5953 = sld [smem:[#allocation12 + $0x1]]
          %v5954 = vstv %s5953
          %v5955 = vmul.f32 %v5949, %v5954
          %v5956 = vadd.f32 %v5952, %v5955
          %s5957 = sld [smem:[#allocation12 + $0x2]]
          %v5958 = vstv %s5957
          %v5959 = vadd.f32 %v5956, %v5958
          %v5960 = vxor.u32 %v5959, 2147483648
          %v5961 = vmul.f32 %v5960, 1.442695
          %v5962 = vpow.pop %v5961
          %v5963 = vadd.f32 %v5962, 1.0
          %v5964 = vrcp.pop %v5963
          %v5965 = vmul.f32 1.0, %v5964
          %v5966 = vmul.f32 %v5898, %v5965
          %v5967 = vmul.f32 %v5899, %v5965
          %v5968 = vmul.f32 %v5900, %v5965
          %v5969 = vmul.f32 %v5901, %v5965
          %v5970 = vmul.f32 %v5902, %v5965
          %v5971 = vmul.f32 %v5903, %v5965
          %v5972 = vmul.f32 %v5904, %v5965
          %v5973 = vmul.f32 %v5905, %v5965
          %v5974 = vmul.f32 %v5906, %v5965
          %v5975 = vmul.f32 %v5907, %v5965
          %v5976 = vmul.f32 %v5908, %v5965
          %v5977 = vmul.f32 %v5909, %v5965
          %v5978 = vmul.f32 %v5910, %v5965
          %v5979 = vmul.f32 %v5911, %v5965
          %v5980 = vmul.f32 %v5912, %v5965
          %v5981 = vmul.f32 %v5913, %v5965
          %5982 = vst [vmem:[#allocation13] sm:$0xff] %v5966
          %5983 = vst [vmem:[#allocation13 + $0x8] sm:$0xff] %v5967
          %5984 = vst [vmem:[#allocation13 + $0x10] sm:$0xff] %v5968
          %5985 = vst [vmem:[#allocation13 + $0x18] sm:$0xff] %v5969
          %5986 = vst [vmem:[#allocation13 + $0x20] sm:$0xff] %v5970
          %5987 = vst [vmem:[#allocation13 + $0x28] sm:$0xff] %v5971
          %5988 = vst [vmem:[#allocation13 + $0x30] sm:$0xff] %v5972
          %5989 = vst [vmem:[#allocation13 + $0x38] sm:$0xff] %v5973
          %5990 = vst [vmem:[#allocation13 + $0x40] sm:$0xff] %v5974
          %5991 = vst [vmem:[#allocation13 + $0x48] sm:$0xff] %v5975
          %5992 = vst [vmem:[#allocation13 + $0x50] sm:$0xff] %v5976
          %5993 = vst [vmem:[#allocation13 + $0x58] sm:$0xff] %v5977
          %5994 = vst [vmem:[#allocation13 + $0x60] sm:$0xff] %v5978
          %5995 = vst [vmem:[#allocation13 + $0x68] sm:$0xff] %v5979
          %5996 = vst [vmem:[#allocation13 + $0x70] sm:$0xff] %v5980
          %5997 = vst [vmem:[#allocation13 + $0x78] sm:$0xff] %v5981
        $region68: #{tpu_custom_call.1} parent=39 // pred_fallthru
          _
        // Predicated region
        $region69: #{tpu_custom_call.1} parent=39 // pred_check
          %p5998 = pneg %p153
        $region70: #{tpu_custom_call.1} parent=39 // pred_check_branch
          %6000 = sbr.rel (%p5998) target = $region72
        $region71: #{tpu_custom_call.1} parent=39 // pred_region
          %s6002 = ssub.s32 2048, 2048
          %6003 = vsyncadd [#allocation5], %s6002
          %s6005 = sshll.u32 [#allocation13], 4
          %s6006 = int_to_ptr.vmem [resolvable:$true] %s6005
          %6008 = dma.vmem_to_hbm [thread:$0]  %s6006, 2048, %s5, [#allocation5]
        $region72: #{tpu_custom_call.1} parent=39 // pred_fallthru
          _
        // Predicated region
        $region73: #{tpu_custom_call.1} parent=39 // pred_check
          %p6009 = pneg %p153
        $region74: #{tpu_custom_call.1} parent=39 // pred_check_branch
          %6011 = sbr.rel (%p6009) target = $region76
        $region75: #{tpu_custom_call.1} parent=39 // pred_region
          %6012 = dma.done [#allocation5], 2048
        $region76: #{tpu_custom_call.1} parent=39 // pred_fallthru
          _
      $region40: #{tpu_custom_call.1} parent=5 // pred_fallthru
        _
      %p6013 = scmp.le.s32.totalorder 2, %s20
      // Predicated region
      $region77: #{tpu_custom_call.1} parent=5 // pred_check
        %p6014 = pneg %p6013
      $region78: #{tpu_custom_call.1} parent=5 // pred_check_branch
        %6016 = sbr.rel (%p6014) target = $region80
      $region79: #{tpu_custom_call.1} parent=5 // pred_region
        %s6017 = ssub.s32 %s20, 2
      $region80: #{tpu_custom_call.1} parent=5 // pred_fallthru
        _
    $region6: #{tpu_custom_call.1} parent=1 // loop_footer
      %s24 = sadd.s32 1, %s20
    $region7: #{tpu_custom_call.1} parent=1 // loop_footer_branch
      %19 = sbr.rel target = $region3
    $region8: #{tpu_custom_call.1} parent=1 // loop_exit
      _
    %6018 = vsyncpa [#allocation4], 1
    %s6019 = scalar_lea.sflag [#allocation4], 1
    %6020 = vsyncpa %s6019, 1
    %6021 = vsyncpa [#allocation8], 1
    %s6022 = scalar_lea.sflag [#allocation8], 1
    %6023 = vsyncpa %s6022, 1
    %6024 = vsyncpa [#allocation11], 1
    %6025 = vsyncpa [#allocation5], 1
    %s6026 = scalar_lea.sflag [#allocation5], 1
    %6027 = vsyncpa %s6026, 1
    %6028 = vsyncpa [#allocation6], 1
    %s6029 = scalar_lea.sflag [#allocation6], 1
    %6030 = vsyncpa %s6029, 1

</llo_original>
